<compile_context>
chip_gen: v6e
topology: v6e:2x2x1
jax: 0.10.0
libtpu: 0.0.40
codegen_flags: <defaults>
</compile_context>

<pallas_src>
import math
import functools

import jax
import jax.numpy as jnp
from jax.experimental import pallas as pl
from jax.experimental.pallas import tpu as pltpu

EPS = 1e-6


@functools.lru_cache(maxsize=None)
def _vmem_limit_bytes():
    """Scoped-VMEM budget: ~75% of physical (96 MiB v5e/v6e, 48 MiB v7x)."""
    try:
        cap = int(pltpu.get_tpu_info().vmem_capacity_bytes)
    except Exception:
        cap = 64 << 20  # conservative fallback (v7x physical size)
    return int(cap * 3 // 4)


# ----------------------------------------------------------------------------
# Fused sublayer 1: rmsnorm -> LSA (fused QKV / fused out-proj) -> residual
# Grid: (batch, query-row tiles).  K/V use the full resident sequence block.
# ----------------------------------------------------------------------------
def _attn_block_kernel(x_ref, wqkv_ref, wo_ref, bo_ref, scale_ref, o_ref,
                       oh_ref, *, heads, dim_head, q_tile):
    n = x_ref.shape[1]
    inner = heads * dim_head
    w_dtype = wqkv_ref.dtype

    x = x_ref[0].astype(jnp.float32)                        # (N, D)
    # FastSimpleRMSNorm (no learnable scale).
    ms = jnp.mean(x * x, axis=-1, keepdims=True)            # (N, 1)
    y = x * jax.lax.rsqrt(ms + EPS)                         # (N, D), f32

    # Normed query-tile rows (residual + Q projection input).
    if q_tile == n:
        q_start = 0
        y_q = y
    else:
        q_start = pl.multiple_of(pl.program_id(1) * q_tile, q_tile)
        x_q = x_ref[0, pl.ds(q_start, q_tile), :].astype(jnp.float32)
        y_q = x_q * jax.lax.rsqrt(
            jnp.mean(x_q * x_q, axis=-1, keepdims=True) + EPS)

    # Q projection for the query tile only; fused K/V projection for all rows.
    # All MXU operands in the (bf16) weight dtype, f32 accumulation.
    q = jnp.dot(y_q.astype(w_dtype), wqkv_ref[:, :inner],
                preferred_element_type=jnp.float32)          # (TQ, inner)
    kv = jnp.dot(y.astype(w_dtype), wqkv_ref[:, inner:],
                 preferred_element_type=jnp.float32)         # (N, 2*inner)

    scale = scale_ref[0]                                     # SMEM scalar
    q = q * scale                                            # scale q, not (TQ,N) scores
    k_all = kv[:, :inner]
    v_all = kv[:, inner:]

    # Self-token (diagonal) mask, offset by the query tile start.
    row = jax.lax.broadcasted_iota(jnp.int32, (q_tile, n), 0) + q_start
    col = jax.lax.broadcasted_iota(jnp.int32, (q_tile, n), 1)
    diag = row == col
    neg = -jnp.finfo(jnp.float32).max

    # Per-head score / softmax / weighted-sum; outputs written into a VMEM
    # scratch slab (no lane concatenate).
    # TODO(synk): for heads >= 8 switch to lax.fori_loop(..., unroll=2) with
    # pl.ds head slices to bound vreg live ranges.
    for h in range(heads):
        lo = h * dim_head
        qh = q[:, lo:lo + dim_head].astype(w_dtype)          # (TQ, Dh)
        kh = k_all[:, lo:lo + dim_head].astype(w_dtype)      # (N, Dh)
        vh = v_all[:, lo:lo + dim_head].astype(w_dtype)      # (N, Dh)
        s = jax.lax.dot_general(qh, kh, (((1,), (1,)), ((), ())),
                                preferred_element_type=jnp.float32)  # (TQ, N)
        s = jnp.where(diag, neg, s)
        s = s - jnp.max(s, axis=-1, keepdims=True)
        p = jnp.exp(s)
        denom = jnp.sum(p, axis=-1, keepdims=True)
        attn = p * pl.reciprocal(denom, approx=True)         # EUP reciprocal
        oh_ref[:, lo:lo + dim_head] = jnp.dot(
            attn.astype(w_dtype), vh, preferred_element_type=jnp.float32)

    # Fused lane-dense out-projection (K = inner) + bias + residual (normed x).
    out = jnp.dot(oh_ref[...].astype(w_dtype), wo_ref[...],
                  preferred_element_type=jnp.float32)        # (TQ, D)
    out = out + bo_ref[...].astype(jnp.float32) + y_q
    o_ref[0] = out.astype(o_ref.dtype)


def _pick_q_tile(n, max_tile=128):
    if n <= max_tile:
        return n
    t = (max_tile // 8) * 8
    while t >= 8:
        if n % t == 0:
            return t
        t -= 8
    return n  # fallback: one query tile per batch element (same as untiled)


def attn_block(x, params, *, heads, dim_head, q_tile=None):
    w_qkv, w_out, b_out, scale = params
    B, N, D = x.shape
    inner = heads * dim_head
    tq = _pick_q_tile(N) if q_tile is None else q_tile
    n_q = N // tq
    kernel = functools.partial(_attn_block_kernel, heads=heads,
                               dim_head=dim_head, q_tile=tq)
    return pl.pallas_call(
        kernel,
        out_shape=jax.ShapeDtypeStruct((B, N, D), x.dtype),
        grid=(B, n_q),
        in_specs=[
            pl.BlockSpec((1, N, D), lambda b, q: (b, 0, 0)),    # full seq (K/V)
            pl.BlockSpec((D, 3 * inner), lambda b, q: (0, 0)),  # fused QKV weight
            pl.BlockSpec((inner, D), lambda b, q: (0, 0)),      # out-proj weight
            pl.BlockSpec((1, D), lambda b, q: (0, 0)),          # out-proj bias
            pl.BlockSpec(memory_space=pltpu.MemorySpace.SMEM),  # scalar temperature
        ],
        out_specs=pl.BlockSpec((1, tq, D), lambda b, q: (b, q, 0)),
        scratch_shapes=[pltpu.VMEM((tq, inner), jnp.float32)],
        compiler_params=pltpu.CompilerParams(
            dimension_semantics=("parallel", "parallel"),
            vmem_limit_bytes=_vmem_limit_bytes()),
    )(x, w_qkv, w_out, b_out, scale)


# ----------------------------------------------------------------------------
# Fused sublayer 2: rmsnorm -> SGLU (fused gate matmul) -> residual
# Tiled over flattened B*N rows; ragged last block handled by Pallas.
# ----------------------------------------------------------------------------
def _ffn_block_kernel(x_ref, wuv_ref, wo_ref, o_ref):
    x = x_ref[...].astype(jnp.float32)                      # (R, D)
    ms = jnp.mean(x * x, axis=-1, keepdims=True)
    y = x * jax.lax.rsqrt(ms + EPS)                         # (R, D)

    w_dtype = wuv_ref.dtype
    uv = jnp.dot(y.astype(w_dtype), wuv_ref[...],
                 preferred_element_type=jnp.float32)        # (R, 2*M)
    m = wuv_ref.shape[1] // 2
    g = (uv[:, :m] * uv[:, m:]).astype(w_dtype)             # SGLU gate
    out = jnp.dot(g, wo_ref[...],
                  preferred_element_type=jnp.float32) + y   # residual (normed x)
    o_ref[...] = out.astype(o_ref.dtype)


def _round_up(v, m):
    return -(-v // m) * m


def _pick_row_tile(rows, max_tile):
    if rows <= 8:
        return rows
    # At least two grid steps (pipeline overlap + even split across v7x's
    # two TensorCores), sublane-multiple tile, capped at max_tile.
    half = _round_up(-(-rows // 2), 8)
    return min(max_tile, half)


def ffn_block(x, params, *, max_row_tile=1024):
    w_uv, w_out = params
    B, N, D = x.shape
    rows = B * N
    M2 = w_uv.shape[1]
    M = M2 // 2
    xr = x.reshape(rows, D)
    tr = _pick_row_tile(rows, max_row_tile)
    # TODO(synk): at very large D/mlp_dim (v7x 64 MiB VMEM), add a grid axis
    # tiling mlp_dim so the gate / down-proj weight blocks stream.
    out = pl.pallas_call(
        _ffn_block_kernel,
        out_shape=jax.ShapeDtypeStruct((rows, D), x.dtype),
        grid=(pl.cdiv(rows, tr),),
        in_specs=[
            pl.BlockSpec((tr, D), lambda i: (i, 0)),
            pl.BlockSpec((D, M2), lambda i: (0, 0)),
            pl.BlockSpec((M, D), lambda i: (0, 0)),
        ],
        out_specs=pl.BlockSpec((tr, D), lambda i: (i, 0)),
        compiler_params=pltpu.CompilerParams(
            dimension_semantics=("parallel",),
            vmem_limit_bytes=_vmem_limit_bytes()),
    )(xr, w_uv, w_out)
    return out.reshape(B, N, D)


# ----------------------------------------------------------------------------
# Parameter initialization (deterministic, PyTorch-Linear-like uniform bounds)
# Weights are stored in bf16 (MXU dtype); the temperature scalar stays f32.
# ----------------------------------------------------------------------------
def _uniform(key, shape, fan_in):
    bound = 1.0 / math.sqrt(fan_in)
    return jax.random.uniform(key, shape, jnp.float32, -bound, bound)


def init_lsa_params(key, dim, heads, dim_head, dtype=jnp.bfloat16):
    k = jax.random.split(key, 3)
    inner = heads * dim_head
    w_qkv = _uniform(k[0], (dim, 3 * inner), dim).astype(dtype)   # [Wq | Wk | Wv]
    w_out = _uniform(k[1], (inner, dim), inner).astype(dtype)
    b_out = _uniform(k[2], (1, dim), inner).astype(dtype)
    temperature = math.log(dim_head ** -0.5)
    scale = jnp.full((1,), math.exp(temperature), jnp.float32)    # SMEM scalar
    return (w_qkv, w_out, b_out, scale)


def init_sglu_params(key, dim, mlp_dim, dtype=jnp.bfloat16):
    k = jax.random.split(key, 3)
    wu = _uniform(k[0], (dim, mlp_dim), dim)
    wv = _uniform(k[1], (dim, mlp_dim), dim)
    w_uv = jnp.concatenate([wu, wv], axis=1).astype(dtype)        # fused gate
    w_out = _uniform(k[2], (mlp_dim, dim), mlp_dim).astype(dtype)
    return (w_uv, w_out)


def init_transformer_params(key, dim, depth, heads, dim_head, mlp_dim,
                            dtype=jnp.bfloat16):
    keys = jax.random.split(key, 2 * depth)
    layers = []
    for d in range(depth - 1):
        layers.append((init_lsa_params(keys[2 * d], dim, heads, dim_head, dtype),
                       init_sglu_params(keys[2 * d + 1], dim, mlp_dim, dtype)))
    final_attn = init_lsa_params(keys[-2], dim, heads, dim_head, dtype)
    final_ffn = init_sglu_params(keys[-1], dim, mlp_dim, dtype)
    return (layers, final_attn, final_ffn)


# ----------------------------------------------------------------------------
# Transformer forward: each sublayer is ONE fused pallas_call.
# Matches the reference exactly:
#   x = norm(x); x = final_attn(x) + x
#   for (attn, ff) in layers: for _ in range(2):   # each layer applied twice,
#       x = norm(x); x = attn(x) + x               # as written in the module
#       x = norm(x); x = ff(x)   + x
#   x = norm(x); x = final_ffn(x) + x
# (the residual is the *normed* activation, because the reference reassigns
#  x = self.norm(x) before each sublayer)
# ----------------------------------------------------------------------------
def transformer_forward(x, params, *, heads, dim_head):
    layers, final_attn_p, final_ffn_p = params
    x = attn_block(x, final_attn_p, heads=heads, dim_head=dim_head)
    for attn_p, ff_p in layers:
        for _ in range(2):
            x = attn_block(x, attn_p, heads=heads, dim_head=dim_head)
            x = ffn_block(x, ff_p)
    x = ffn_block(x, final_ffn_p)
    return x


if __name__ == "__main__":
    # Small but lane-dense shapes (dim, heads*dim_head, mlp_dim multiples of 128).
    dim, depth, heads, dim_head, mlp_dim = 128, 2, 4, 32, 256
    batch, seq = 2, 16

    root = jax.random.PRNGKey(0)
    k_x, k_p = jax.random.split(root)
    x = jax.random.normal(k_x, (batch, seq, dim), jnp.float32)
    params = init_transformer_params(k_p, dim, depth, heads, dim_head, mlp_dim,
                                     dtype=jnp.bfloat16)

    fwd = jax.jit(functools.partial(transformer_forward, params=params,
                                    heads=heads, dim_head=dim_head))
    out = fwd(x)
    jax.block_until_ready(out)
    assert out.shape == (batch, seq, dim) and out.dtype == jnp.float32
    assert bool(jnp.all(jnp.isfinite(out)))
    print("KERNEL_OK")
</pallas_src>

<mosaic_0001>
module attributes {stable_mosaic.version = 11 : i64} {
  func.func @_ffn_block_kernel(%arg0: i32, %arg1: memref<16x128xf32, #tpu.memory_space<vmem>>, %arg2: memref<128x512xbf16, #tpu.memory_space<vmem>>, %arg3: memref<256x128xbf16, #tpu.memory_space<vmem>>, %arg4: memref<16x128xf32, #tpu.memory_space<vmem>>) attributes {dimension_semantics = [#tpu.dimension_semantics<parallel>], iteration_bounds = array<i64: 2>, scalar_prefetch = 0 : i64, scratch_operands = 0 : i64, tpu.core_type = #tpu.core_type<tc>, window_params = [{transform_indices = @transform_0, window_bounds = array<i64: 16, 128>}, {pipeline_mode = #tpu.pipeline_mode<synchronous>, transform_indices = @transform_1, window_bounds = array<i64: 128, 512>}, {pipeline_mode = #tpu.pipeline_mode<synchronous>, transform_indices = @transform_2, window_bounds = array<i64: 256, 128>}, {transform_indices = @transform_3, window_bounds = array<i64: 16, 128>}]} {
    %c0 = arith.constant 0 : index
    %c0_0 = arith.constant 0 : index
    %0 = vector.load %arg1[%c0, %c0_0] : memref<16x128xf32, #tpu.memory_space<vmem>>, vector<16x128xf32>
    %1 = arith.mulf %0, %0 : vector<16x128xf32>
    %cst = arith.constant dense<0.000000e+00> : vector<16xf32>
    %2 = vector.multi_reduction <add>, %1, %cst [1] : vector<16x128xf32> to vector<16xf32>
    %3 = vector.shape_cast %2 : vector<16xf32> to vector<16x1xf32>
    %cst_1 = arith.constant 1.280000e+02 : f32
    %4 = vector.broadcast %cst_1 : f32 to vector<16x1xf32>
    %5 = arith.divf %3, %4 : vector<16x1xf32>
    %cst_2 = arith.constant 9.99999997E-7 : f32
    %6 = vector.broadcast %cst_2 : f32 to vector<16x1xf32>
    %7 = arith.addf %5, %6 : vector<16x1xf32>
    %8 = math.rsqrt %7 : vector<16x1xf32>
    %9 = vector.broadcast %8 : vector<16x1xf32> to vector<16x128xf32>
    %10 = arith.mulf %0, %9 : vector<16x128xf32>
    %11 = arith.truncf %10 : vector<16x128xf32> to vector<16x128xbf16>
    %c0_3 = arith.constant 0 : index
    %c0_4 = arith.constant 0 : index
    %12 = vector.load %arg2[%c0_3, %c0_4] : memref<128x512xbf16, #tpu.memory_space<vmem>>, vector<128x512xbf16>
    %cst_5 = arith.constant dense<0.000000e+00> : vector<16x512xf32>
    %13 = tpu.matmul %11, %12, %cst_5 {dimension_numbers = #tpu.dot_dimension_numbers<[1], [0], [0], [1], [0, 0, 1, 1], [], []>} : vector<16x128xbf16>, vector<128x512xbf16>, vector<16x512xf32> -> vector<16x512xf32>
    %14 = vector.extract_strided_slice %13 {offsets = [0, 0], sizes = [16, 256], strides = [1, 1]} : vector<16x512xf32> to vector<16x256xf32>
    %15 = vector.extract_strided_slice %13 {offsets = [0, 256], sizes = [16, 256], strides = [1, 1]} : vector<16x512xf32> to vector<16x256xf32>
    %16 = arith.mulf %14, %15 : vector<16x256xf32>
    %17 = arith.truncf %16 : vector<16x256xf32> to vector<16x256xbf16>
    %c0_6 = arith.constant 0 : index
    %c0_7 = arith.constant 0 : index
    %18 = vector.load %arg3[%c0_6, %c0_7] : memref<256x128xbf16, #tpu.memory_space<vmem>>, vector<256x128xbf16>
    %cst_8 = arith.constant dense<0.000000e+00> : vector<16x128xf32>
    %19 = tpu.matmul %17, %18, %cst_8 {dimension_numbers = #tpu.dot_dimension_numbers<[1], [0], [0], [1], [0, 0, 1, 1], [], []>} : vector<16x256xbf16>, vector<256x128xbf16>, vector<16x128xf32> -> vector<16x128xf32>
    %20 = arith.addf %19, %10 : vector<16x128xf32>
    %c0_9 = arith.constant 0 : index
    %c0_10 = arith.constant 0 : index
    %21 = vector.load %arg4[%c0_9, %c0_10] : memref<16x128xf32, #tpu.memory_space<vmem>>, vector<16x128xf32>
    tpu.vector_store %arg4[%c0_9, %c0_10], %20 {strides = array<i32>} : memref<16x128xf32, #tpu.memory_space<vmem>>, vector<16x128xf32>,
    return
  }
  func.func @transform_0(%arg0: i32) -> (i32, i32) {
    %c0_i32 = arith.constant 0 : i32
    %c0_i32_0 = arith.constant 0 : i32
    return %arg0, %c0_i32 : i32, i32
  }
  func.func @transform_1(%arg0: i32) -> (i32, i32) {
    %c0_i32 = arith.constant 0 : i32
    %c0_i32_0 = arith.constant 0 : i32
    %c0_i32_1 = arith.constant 0 : i32
    return %c0_i32, %c0_i32_0 : i32, i32
  }
  func.func @transform_2(%arg0: i32) -> (i32, i32) {
    %c0_i32 = arith.constant 0 : i32
    %c0_i32_0 = arith.constant 0 : i32
    %c0_i32_1 = arith.constant 0 : i32
    return %c0_i32, %c0_i32_0 : i32, i32
  }
  func.func @transform_3(%arg0: i32) -> (i32, i32) {
    %c0_i32 = arith.constant 0 : i32
    %c0_i32_0 = arith.constant 0 : i32
    return %arg0, %c0_i32 : i32, i32
  }
}

module attributes {stable_mosaic.version = 11 : i64} {
  func.func @_attn_block_kernel(%arg0: i32, %arg1: i32, %arg2: memref<1x16x128xf32, #tpu.memory_space<vmem>>, %arg3: memref<128x384xbf16, #tpu.memory_space<vmem>>, %arg4: memref<128x128xbf16, #tpu.memory_space<vmem>>, %arg5: memref<1x128xbf16, #tpu.memory_space<vmem>>, %arg6: memref<1xf32, #tpu.memory_space<smem>>, %arg7: memref<1x16x128xf32, #tpu.memory_space<vmem>>, %arg8: memref<16x128xf32, #tpu.memory_space<vmem>>) attributes {dimension_semantics = [#tpu.dimension_semantics<parallel>, #tpu.dimension_semantics<parallel>], iteration_bounds = array<i64: 2, 1>, scalar_prefetch = 0 : i64, scratch_operands = 1 : i64, tpu.core_type = #tpu.core_type<tc>, window_params = [{transform_indices = @transform_0, window_bounds = array<i64: 1, 16, 128>}, {pipeline_mode = #tpu.pipeline_mode<synchronous>, transform_indices = @transform_1, window_bounds = array<i64: 128, 384>}, {pipeline_mode = #tpu.pipeline_mode<synchronous>, transform_indices = @transform_2, window_bounds = array<i64: 128, 128>}, {pipeline_mode = #tpu.pipeline_mode<synchronous>, transform_indices = @transform_3, window_bounds = array<i64: 1, 128>}, {transform_indices = @transform_4, window_bounds = array<i64: 1>}, {transform_indices = @transform_5, window_bounds = array<i64: 1, 16, 128>}]} {
    %c0 = arith.constant 0 : index
    %c0_0 = arith.constant 0 : index
    %c0_1 = arith.constant 0 : index
    %0 = vector.load %arg2[%c0, %c0_0, %c0_1] : memref<1x16x128xf32, #tpu.memory_space<vmem>>, vector<1x16x128xf32>
    %1 = vector.shape_cast %0 : vector<1x16x128xf32> to vector<16x128xf32>
    %2 = arith.mulf %1, %1 : vector<16x128xf32>
    %cst = arith.constant dense<0.000000e+00> : vector<16xf32>
    %3 = vector.multi_reduction <add>, %2, %cst [1] : vector<16x128xf32> to vector<16xf32>
    %4 = vector.shape_cast %3 : vector<16xf32> to vector<16x1xf32>
    %cst_2 = arith.constant 1.280000e+02 : f32
    %5 = vector.broadcast %cst_2 : f32 to vector<16x1xf32>
    %6 = arith.divf %4, %5 : vector<16x1xf32>
    %cst_3 = arith.constant 9.99999997E-7 : f32
    %7 = vector.broadcast %cst_3 : f32 to vector<16x1xf32>
    %8 = arith.addf %6, %7 : vector<16x1xf32>
    %9 = math.rsqrt %8 : vector<16x1xf32>
    %10 = vector.broadcast %9 : vector<16x1xf32> to vector<16x128xf32>
    %11 = arith.mulf %1, %10 : vector<16x128xf32>
    %12 = arith.truncf %11 : vector<16x128xf32> to vector<16x128xbf16>
    %c0_4 = arith.constant 0 : index
    %c0_5 = arith.constant 0 : index
    %13 = vector.load %arg3[%c0_4, %c0_5] : memref<128x384xbf16, #tpu.memory_space<vmem>>, vector<128x128xbf16>
    %cst_6 = arith.constant dense<0.000000e+00> : vector<16x128xf32>
    %14 = tpu.matmul %12, %13, %cst_6 {dimension_numbers = #tpu.dot_dimension_numbers<[1], [0], [0], [1], [0, 0, 1, 1], [], []>} : vector<16x128xbf16>, vector<128x128xbf16>, vector<16x128xf32> -> vector<16x128xf32>
    %15 = arith.truncf %11 : vector<16x128xf32> to vector<16x128xbf16>
    %c0_7 = arith.constant 0 : index
    %c128 = arith.constant 128 : index
    %16 = vector.load %arg3[%c0_7, %c128] : memref<128x384xbf16, #tpu.memory_space<vmem>>, vector<128x256xbf16>
    %cst_8 = arith.constant dense<0.000000e+00> : vector<16x256xf32>
    %17 = tpu.matmul %15, %16, %cst_8 {dimension_numbers = #tpu.dot_dimension_numbers<[1], [0], [0], [1], [0, 0, 1, 1], [], []>} : vector<16x128xbf16>, vector<128x256xbf16>, vector<16x256xf32> -> vector<16x256xf32>
    %c0_9 = arith.constant 0 : index
    %18 = memref.load %arg6[%c0_9] : memref<1xf32, #tpu.memory_space<smem>>
    %19 = vector.broadcast %18 : f32 to vector<16x128xf32>
    %20 = arith.mulf %14, %19 : vector<16x128xf32>
    %21 = vector.extract_strided_slice %17 {offsets = [0, 0], sizes = [16, 128], strides = [1, 1]} : vector<16x256xf32> to vector<16x128xf32>
    %22 = vector.extract_strided_slice %17 {offsets = [0, 128], sizes = [16, 128], strides = [1, 1]} : vector<16x256xf32> to vector<16x128xf32>
    %23 = tpu.iota {dimensions = array<i32: 0>} : vector<16x16xi32>
    %c0_i32 = arith.constant 0 : i32
    %24 = vector.broadcast %c0_i32 : i32 to vector<16x16xi32>
    %25 = arith.addi %23, %24 : vector<16x16xi32>
    %26 = tpu.iota {dimensions = array<i32: 1>} : vector<16x16xi32>
    %27 = arith.cmpi eq, %25, %26 : vector<16x16xi32>
    %28 = vector.extract_strided_slice %20 {offsets = [0, 0], sizes = [16, 32], strides = [1, 1]} : vector<16x128xf32> to vector<16x32xf32>
    %29 = arith.truncf %28 : vector<16x32xf32> to vector<16x32xbf16>
    %30 = vector.extract_strided_slice %21 {offsets = [0, 0], sizes = [16, 32], strides = [1, 1]} : vector<16x128xf32> to vector<16x32xf32>
    %31 = arith.truncf %30 : vector<16x32xf32> to vector<16x32xbf16>
    %32 = vector.extract_strided_slice %22 {offsets = [0, 0], sizes = [16, 32], strides = [1, 1]} : vector<16x128xf32> to vector<16x32xf32>
    %33 = arith.truncf %32 : vector<16x32xf32> to vector<16x32xbf16>
    %cst_10 = arith.constant dense<0.000000e+00> : vector<16x16xf32>
    %34 = tpu.matmul %29, %31, %cst_10 {dimension_numbers = #tpu.dot_dimension_numbers<[1], [1], [0], [0], [0, 0, 1, 0], [], []>} : vector<16x32xbf16>, vector<16x32xbf16>, vector<16x16xf32> -> vector<16x16xf32>
    %cst_11 = arith.constant -3.40282347E+38 : f32
    %35 = vector.broadcast %cst_11 : f32 to vector<16x16xf32>
    %36 = arith.select %27, %35, %34 : vector<16x16xi1>, vector<16x16xf32>
    %cst_12 = arith.constant dense<0xFF800000> : vector<16xf32>
    %37 = vector.multi_reduction <maximumf>, %36, %cst_12 [1] : vector<16x16xf32> to vector<16xf32>
    %38 = vector.shape_cast %37 : vector<16xf32> to vector<16x1xf32>
    %39 = vector.broadcast %38 : vector<16x1xf32> to vector<16x16xf32>
    %40 = arith.subf %36, %39 : vector<16x16xf32>
    %41 = math.exp %40 : vector<16x16xf32>
    %cst_13 = arith.constant dense<0.000000e+00> : vector<16xf32>
    %42 = vector.multi_reduction <add>, %41, %cst_13 [1] : vector<16x16xf32> to vector<16xf32>
    %43 = vector.shape_cast %42 : vector<16xf32> to vector<16x1xf32>
    %44 = tpu.reciprocal %43 {approx = true} : vector<16x1xf32> -> vector<16x1xf32>
    %45 = vector.broadcast %44 : vector<16x1xf32> to vector<16x16xf32>
    %46 = arith.mulf %41, %45 : vector<16x16xf32>
    %47 = arith.truncf %46 : vector<16x16xf32> to vector<16x16xbf16>
    %cst_14 = arith.constant dense<0.000000e+00> : vector<16x32xf32>
    %48 = tpu.matmul %47, %33, %cst_14 {dimension_numbers = #tpu.dot_dimension_numbers<[1], [0], [0], [1], [0, 0, 1, 1], [], []>} : vector<16x16xbf16>, vector<16x32xbf16>, vector<16x32xf32> -> vector<16x32xf32>
    %c0_15 = arith.constant 0 : index
    %c0_16 = arith.constant 0 : index
    %49 = vector.load %arg8[%c0_15, %c0_16] : memref<16x128xf32, #tpu.memory_space<vmem>>, vector<16x32xf32>
    tpu.vector_store %arg8[%c0_15, %c0_16], %48 {strides = array<i32>} : memref<16x128xf32, #tpu.memory_space<vmem>>, vector<16x32xf32>,
    %50 = vector.extract_strided_slice %20 {offsets = [0, 32], sizes = [16, 32], strides = [1, 1]} : vector<16x128xf32> to vector<16x32xf32>
    %51 = arith.truncf %50 : vector<16x32xf32> to vector<16x32xbf16>
    %52 = vector.extract_strided_slice %21 {offsets = [0, 32], sizes = [16, 32], strides = [1, 1]} : vector<16x128xf32> to vector<16x32xf32>
    %53 = arith.truncf %52 : vector<16x32xf32> to vector<16x32xbf16>
    %54 = vector.extract_strided_slice %22 {offsets = [0, 32], sizes = [16, 32], strides = [1, 1]} : vector<16x128xf32> to vector<16x32xf32>
    %55 = arith.truncf %54 : vector<16x32xf32> to vector<16x32xbf16>
    %cst_17 = arith.constant dense<0.000000e+00> : vector<16x16xf32>
    %56 = tpu.matmul %51, %53, %cst_17 {dimension_numbers = #tpu.dot_dimension_numbers<[1], [1], [0], [0], [0, 0, 1, 0], [], []>} : vector<16x32xbf16>, vector<16x32xbf16>, vector<16x16xf32> -> vector<16x16xf32>
    %cst_18 = arith.constant -3.40282347E+38 : f32
    %57 = vector.broadcast %cst_18 : f32 to vector<16x16xf32>
    %58 = arith.select %27, %57, %56 : vector<16x16xi1>, vector<16x16xf32>
    %cst_19 = arith.constant dense<0xFF800000> : vector<16xf32>
    %59 = vector.multi_reduction <maximumf>, %58, %cst_19 [1] : vector<16x16xf32> to vector<16xf32>
    %60 = vector.shape_cast %59 : vector<16xf32> to vector<16x1xf32>
    %61 = vector.broadcast %60 : vector<16x1xf32> to vector<16x16xf32>
    %62 = arith.subf %58, %61 : vector<16x16xf32>
    %63 = math.exp %62 : vector<16x16xf32>
    %cst_20 = arith.constant dense<0.000000e+00> : vector<16xf32>
    %64 = vector.multi_reduction <add>, %63, %cst_20 [1] : vector<16x16xf32> to vector<16xf32>
    %65 = vector.shape_cast %64 : vector<16xf32> to vector<16x1xf32>
    %66 = tpu.reciprocal %65 {approx = true} : vector<16x1xf32> -> vector<16x1xf32>
    %67 = vector.broadcast %66 : vector<16x1xf32> to vector<16x16xf32>
    %68 = arith.mulf %63, %67 : vector<16x16xf32>
    %69 = arith.truncf %68 : vector<16x16xf32> to vector<16x16xbf16>
    %cst_21 = arith.constant dense<0.000000e+00> : vector<16x32xf32>
    %70 = tpu.matmul %69, %55, %cst_21 {dimension_numbers = #tpu.dot_dimension_numbers<[1], [0], [0], [1], [0, 0, 1, 1], [], []>} : vector<16x16xbf16>, vector<16x32xbf16>, vector<16x32xf32> -> vector<16x32xf32>
    %c0_22 = arith.constant 0 : index
    %c32 = arith.constant 32 : index
    %71 = vector.load %arg8[%c0_22, %c32] : memref<16x128xf32, #tpu.memory_space<vmem>>, vector<16x32xf32>
    tpu.vector_store %arg8[%c0_22, %c32], %70 {strides = array<i32>} : memref<16x128xf32, #tpu.memory_space<vmem>>, vector<16x32xf32>,
    %72 = vector.extract_strided_slice %20 {offsets = [0, 64], sizes = [16, 32], strides = [1, 1]} : vector<16x128xf32> to vector<16x32xf32>
    %73 = arith.truncf %72 : vector<16x32xf32> to vector<16x32xbf16>
    %74 = vector.extract_strided_slice %21 {offsets = [0, 64], sizes = [16, 32], strides = [1, 1]} : vector<16x128xf32> to vector<16x32xf32>
    %75 = arith.truncf %74 : vector<16x32xf32> to vector<16x32xbf16>
    %76 = vector.extract_strided_slice %22 {offsets = [0, 64], sizes = [16, 32], strides = [1, 1]} : vector<16x128xf32> to vector<16x32xf32>
    %77 = arith.truncf %76 : vector<16x32xf32> to vector<16x32xbf16>
    %cst_23 = arith.constant dense<0.000000e+00> : vector<16x16xf32>
    %78 = tpu.matmul %73, %75, %cst_23 {dimension_numbers = #tpu.dot_dimension_numbers<[1], [1], [0], [0], [0, 0, 1, 0], [], []>} : vector<16x32xbf16>, vector<16x32xbf16>, vector<16x16xf32> -> vector<16x16xf32>
    %cst_24 = arith.constant -3.40282347E+38 : f32
    %79 = vector.broadcast %cst_24 : f32 to vector<16x16xf32>
    %80 = arith.select %27, %79, %78 : vector<16x16xi1>, vector<16x16xf32>
    %cst_25 = arith.constant dense<0xFF800000> : vector<16xf32>
    %81 = vector.multi_reduction <maximumf>, %80, %cst_25 [1] : vector<16x16xf32> to vector<16xf32>
    %82 = vector.shape_cast %81 : vector<16xf32> to vector<16x1xf32>
    %83 = vector.broadcast %82 : vector<16x1xf32> to vector<16x16xf32>
    %84 = arith.subf %80, %83 : vector<16x16xf32>
    %85 = math.exp %84 : vector<16x16xf32>
    %cst_26 = arith.constant dense<0.000000e+00> : vector<16xf32>
    %86 = vector.multi_reduction <add>, %85, %cst_26 [1] : vector<16x16xf32> to vector<16xf32>
    %87 = vector.shape_cast %86 : vector<16xf32> to vector<16x1xf32>
    %88 = tpu.reciprocal %87 {approx = true} : vector<16x1xf32> -> vector<16x1xf32>
    %89 = vector.broadcast %88 : vector<16x1xf32> to vector<16x16xf32>
    %90 = arith.mulf %85, %89 : vector<16x16xf32>
    %91 = arith.truncf %90 : vector<16x16xf32> to vector<16x16xbf16>
    %cst_27 = arith.constant dense<0.000000e+00> : vector<16x32xf32>
    %92 = tpu.matmul %91, %77, %cst_27 {dimension_numbers = #tpu.dot_dimension_numbers<[1], [0], [0], [1], [0, 0, 1, 1], [], []>} : vector<16x16xbf16>, vector<16x32xbf16>, vector<16x32xf32> -> vector<16x32xf32>
    %c0_28 = arith.constant 0 : index
    %c64 = arith.constant 64 : index
    %93 = vector.load %arg8[%c0_28, %c64] : memref<16x128xf32, #tpu.memory_space<vmem>>, vector<16x32xf32>
    tpu.vector_store %arg8[%c0_28, %c64], %92 {strides = array<i32>} : memref<16x128xf32, #tpu.memory_space<vmem>>, vector<16x32xf32>,
    %94 = vector.extract_strided_slice %20 {offsets = [0, 96], sizes = [16, 32], strides = [1, 1]} : vector<16x128xf32> to vector<16x32xf32>
    %95 = arith.truncf %94 : vector<16x32xf32> to vector<16x32xbf16>
    %96 = vector.extract_strided_slice %21 {offsets = [0, 96], sizes = [16, 32], strides = [1, 1]} : vector<16x128xf32> to vector<16x32xf32>
    %97 = arith.truncf %96 : vector<16x32xf32> to vector<16x32xbf16>
    %98 = vector.extract_strided_slice %22 {offsets = [0, 96], sizes = [16, 32], strides = [1, 1]} : vector<16x128xf32> to vector<16x32xf32>
    %99 = arith.truncf %98 : vector<16x32xf32> to vector<16x32xbf16>
    %cst_29 = arith.constant dense<0.000000e+00> : vector<16x16xf32>
    %100 = tpu.matmul %95, %97, %cst_29 {dimension_numbers = #tpu.dot_dimension_numbers<[1], [1], [0], [0], [0, 0, 1, 0], [], []>} : vector<16x32xbf16>, vector<16x32xbf16>, vector<16x16xf32> -> vector<16x16xf32>
    %cst_30 = arith.constant -3.40282347E+38 : f32
    %101 = vector.broadcast %cst_30 : f32 to vector<16x16xf32>
    %102 = arith.select %27, %101, %100 : vector<16x16xi1>, vector<16x16xf32>
    %cst_31 = arith.constant dense<0xFF800000> : vector<16xf32>
    %103 = vector.multi_reduction <maximumf>, %102, %cst_31 [1] : vector<16x16xf32> to vector<16xf32>
    %104 = vector.shape_cast %103 : vector<16xf32> to vector<16x1xf32>
    %105 = vector.broadcast %104 : vector<16x1xf32> to vector<16x16xf32>
    %106 = arith.subf %102, %105 : vector<16x16xf32>
    %107 = math.exp %106 : vector<16x16xf32>
    %cst_32 = arith.constant dense<0.000000e+00> : vector<16xf32>
    %108 = vector.multi_reduction <add>, %107, %cst_32 [1] : vector<16x16xf32> to vector<16xf32>
    %109 = vector.shape_cast %108 : vector<16xf32> to vector<16x1xf32>
    %110 = tpu.reciprocal %109 {approx = true} : vector<16x1xf32> -> vector<16x1xf32>
    %111 = vector.broadcast %110 : vector<16x1xf32> to vector<16x16xf32>
    %112 = arith.mulf %107, %111 : vector<16x16xf32>
    %113 = arith.truncf %112 : vector<16x16xf32> to vector<16x16xbf16>
    %cst_33 = arith.constant dense<0.000000e+00> : vector<16x32xf32>
    %114 = tpu.matmul %113, %99, %cst_33 {dimension_numbers = #tpu.dot_dimension_numbers<[1], [0], [0], [1], [0, 0, 1, 1], [], []>} : vector<16x16xbf16>, vector<16x32xbf16>, vector<16x32xf32> -> vector<16x32xf32>
    %c0_34 = arith.constant 0 : index
    %c96 = arith.constant 96 : index
    %115 = vector.load %arg8[%c0_34, %c96] : memref<16x128xf32, #tpu.memory_space<vmem>>, vector<16x32xf32>
    tpu.vector_store %arg8[%c0_34, %c96], %114 {strides = array<i32>} : memref<16x128xf32, #tpu.memory_space<vmem>>, vector<16x32xf32>,
    %c0_35 = arith.constant 0 : index
    %c0_36 = arith.constant 0 : index
    %116 = vector.load %arg8[%c0_35, %c0_36] : memref<16x128xf32, #tpu.memory_space<vmem>>, vector<16x128xf32>
    %117 = arith.truncf %116 : vector<16x128xf32> to vector<16x128xbf16>
    %c0_37 = arith.constant 0 : index
    %c0_38 = arith.constant 0 : index
    %118 = vector.load %arg4[%c0_37, %c0_38] : memref<128x128xbf16, #tpu.memory_space<vmem>>, vector<128x128xbf16>
    %cst_39 = arith.constant dense<0.000000e+00> : vector<16x128xf32>
    %119 = tpu.matmul %117, %118, %cst_39 {dimension_numbers = #tpu.dot_dimension_numbers<[1], [0], [0], [1], [0, 0, 1, 1], [], []>} : vector<16x128xbf16>, vector<128x128xbf16>, vector<16x128xf32> -> vector<16x128xf32>
    %c0_40 = arith.constant 0 : index
    %c0_41 = arith.constant 0 : index
    %120 = vector.load %arg5[%c0_40, %c0_41] : memref<1x128xbf16, #tpu.memory_space<vmem>>, vector<1x128xbf16>
    %121 = arith.extf %120 : vector<1x128xbf16> to vector<1x128xf32>
    %122 = vector.broadcast %121 : vector<1x128xf32> to vector<16x128xf32>
    %123 = arith.addf %119, %122 : vector<16x128xf32>
    %124 = arith.addf %123, %11 : vector<16x128xf32>
    %c0_42 = arith.constant 0 : index
    %c0_43 = arith.constant 0 : index
    %c0_44 = arith.constant 0 : index
    %125 = vector.load %arg7[%c0_42, %c0_43, %c0_44] : memref<1x16x128xf32, #tpu.memory_space<vmem>>, vector<1x16x128xf32>
    %126 = vector.shape_cast %125 : vector<1x16x128xf32> to vector<16x128xf32>
    %127 = vector.shape_cast %124 : vector<16x128xf32> to vector<1x16x128xf32>
    tpu.vector_store %arg7[%c0_42, %c0_43, %c0_44], %127 {strides = array<i32>} : memref<1x16x128xf32, #tpu.memory_space<vmem>>, vector<1x16x128xf32>,
    return
  }
  func.func @transform_0(%arg0: i32, %arg1: i32) -> (i32, i32, i32) {
    %c0_i32 = arith.constant 0 : i32
    %c0_i32_0 = arith.constant 0 : i32
    %c0_i32_1 = arith.constant 0 : i32
    return %arg0, %c0_i32, %c0_i32_0 : i32, i32, i32
  }
  func.func @transform_1(%arg0: i32, %arg1: i32) -> (i32, i32) {
    %c0_i32 = arith.constant 0 : i32
    %c0_i32_0 = arith.constant 0 : i32
    %c0_i32_1 = arith.constant 0 : i32
    return %c0_i32, %c0_i32_0 : i32, i32
  }
  func.func @transform_2(%arg0: i32, %arg1: i32) -> (i32, i32) {
    %c0_i32 = arith.constant 0 : i32
    %c0_i32_0 = arith.constant 0 : i32
    %c0_i32_1 = arith.constant 0 : i32
    return %c0_i32, %c0_i32_0 : i32, i32
  }
  func.func @transform_3(%arg0: i32, %arg1: i32) -> (i32, i32) {
    %c0_i32 = arith.constant 0 : i32
    %c0_i32_0 = arith.constant 0 : i32
    %c0_i32_1 = arith.constant 0 : i32
    return %c0_i32, %c0_i32_0 : i32, i32
  }
  func.func @transform_4(%arg0: i32, %arg1: i32) -> i32 {
    %c0_i32 = arith.constant 0 : i32
    %c0_i32_0 = arith.constant 0 : i32
    return %c0_i32 : i32
  }
  func.func @transform_5(%arg0: i32, %arg1: i32) -> (i32, i32, i32) {
    %c0_i32 = arith.constant 0 : i32
    %c0_i32_0 = arith.constant 0 : i32
    return %arg0, %arg1, %c0_i32 : i32, i32, i32
  }
}

module attributes {stable_mosaic.version = 11 : i64} {
  func.func @_ffn_block_kernel(%arg0: i32, %arg1: memref<16x128xf32, #tpu.memory_space<vmem>>, %arg2: memref<128x512xbf16, #tpu.memory_space<vmem>>, %arg3: memref<256x128xbf16, #tpu.memory_space<vmem>>, %arg4: memref<16x128xf32, #tpu.memory_space<vmem>>) attributes {dimension_semantics = [#tpu.dimension_semantics<parallel>], iteration_bounds = array<i64: 2>, scalar_prefetch = 0 : i64, scratch_operands = 0 : i64, tpu.core_type = #tpu.core_type<tc>, window_params = [{transform_indices = @transform_0, window_bounds = array<i64: 16, 128>}, {pipeline_mode = #tpu.pipeline_mode<synchronous>, transform_indices = @transform_1, window_bounds = array<i64: 128, 512>}, {pipeline_mode = #tpu.pipeline_mode<synchronous>, transform_indices = @transform_2, window_bounds = array<i64: 256, 128>}, {transform_indices = @transform_3, window_bounds = array<i64: 16, 128>}]} {
    %c0 = arith.constant 0 : index
    %c0_0 = arith.constant 0 : index
    %0 = vector.load %arg1[%c0, %c0_0] : memref<16x128xf32, #tpu.memory_space<vmem>>, vector<16x128xf32>
    %1 = arith.mulf %0, %0 : vector<16x128xf32>
    %cst = arith.constant dense<0.000000e+00> : vector<16xf32>
    %2 = vector.multi_reduction <add>, %1, %cst [1] : vector<16x128xf32> to vector<16xf32>
    %3 = vector.shape_cast %2 : vector<16xf32> to vector<16x1xf32>
    %cst_1 = arith.constant 1.280000e+02 : f32
    %4 = vector.broadcast %cst_1 : f32 to vector<16x1xf32>
    %5 = arith.divf %3, %4 : vector<16x1xf32>
    %cst_2 = arith.constant 9.99999997E-7 : f32
    %6 = vector.broadcast %cst_2 : f32 to vector<16x1xf32>
    %7 = arith.addf %5, %6 : vector<16x1xf32>
    %8 = math.rsqrt %7 : vector<16x1xf32>
    %9 = vector.broadcast %8 : vector<16x1xf32> to vector<16x128xf32>
    %10 = arith.mulf %0, %9 : vector<16x128xf32>
    %11 = arith.truncf %10 : vector<16x128xf32> to vector<16x128xbf16>
    %c0_3 = arith.constant 0 : index
    %c0_4 = arith.constant 0 : index
    %12 = vector.load %arg2[%c0_3, %c0_4] : memref<128x512xbf16, #tpu.memory_space<vmem>>, vector<128x512xbf16>
    %cst_5 = arith.constant dense<0.000000e+00> : vector<16x512xf32>
    %13 = tpu.matmul %11, %12, %cst_5 {dimension_numbers = #tpu.dot_dimension_numbers<[1], [0], [0], [1], [0, 0, 1, 1], [], []>} : vector<16x128xbf16>, vector<128x512xbf16>, vector<16x512xf32> -> vector<16x512xf32>
    %14 = vector.extract_strided_slice %13 {offsets = [0, 0], sizes = [16, 256], strides = [1, 1]} : vector<16x512xf32> to vector<16x256xf32>
    %15 = vector.extract_strided_slice %13 {offsets = [0, 256], sizes = [16, 256], strides = [1, 1]} : vector<16x512xf32> to vector<16x256xf32>
    %16 = arith.mulf %14, %15 : vector<16x256xf32>
    %17 = arith.truncf %16 : vector<16x256xf32> to vector<16x256xbf16>
    %c0_6 = arith.constant 0 : index
    %c0_7 = arith.constant 0 : index
    %18 = vector.load %arg3[%c0_6, %c0_7] : memref<256x128xbf16, #tpu.memory_space<vmem>>, vector<256x128xbf16>
    %cst_8 = arith.constant dense<0.000000e+00> : vector<16x128xf32>
    %19 = tpu.matmul %17, %18, %cst_8 {dimension_numbers = #tpu.dot_dimension_numbers<[1], [0], [0], [1], [0, 0, 1, 1], [], []>} : vector<16x256xbf16>, vector<256x128xbf16>, vector<16x128xf32> -> vector<16x128xf32>
    %20 = arith.addf %19, %10 : vector<16x128xf32>
    %c0_9 = arith.constant 0 : index
    %c0_10 = arith.constant 0 : index
    %21 = vector.load %arg4[%c0_9, %c0_10] : memref<16x128xf32, #tpu.memory_space<vmem>>, vector<16x128xf32>
    tpu.vector_store %arg4[%c0_9, %c0_10], %20 {strides = array<i32>} : memref<16x128xf32, #tpu.memory_space<vmem>>, vector<16x128xf32>,
    return
  }
  func.func @transform_0(%arg0: i32) -> (i32, i32) {
    %c0_i32 = arith.constant 0 : i32
    %c0_i32_0 = arith.constant 0 : i32
    return %arg0, %c0_i32 : i32, i32
  }
  func.func @transform_1(%arg0: i32) -> (i32, i32) {
    %c0_i32 = arith.constant 0 : i32
    %c0_i32_0 = arith.constant 0 : i32
    %c0_i32_1 = arith.constant 0 : i32
    return %c0_i32, %c0_i32_0 : i32, i32
  }
  func.func @transform_2(%arg0: i32) -> (i32, i32) {
    %c0_i32 = arith.constant 0 : i32
    %c0_i32_0 = arith.constant 0 : i32
    %c0_i32_1 = arith.constant 0 : i32
    return %c0_i32, %c0_i32_0 : i32, i32
  }
  func.func @transform_3(%arg0: i32) -> (i32, i32) {
    %c0_i32 = arith.constant 0 : i32
    %c0_i32_0 = arith.constant 0 : i32
    return %arg0, %c0_i32 : i32, i32
  }
}

module attributes {stable_mosaic.version = 11 : i64} {
  func.func @_attn_block_kernel(%arg0: i32, %arg1: i32, %arg2: memref<1x16x128xf32, #tpu.memory_space<vmem>>, %arg3: memref<128x384xbf16, #tpu.memory_space<vmem>>, %arg4: memref<128x128xbf16, #tpu.memory_space<vmem>>, %arg5: memref<1x128xbf16, #tpu.memory_space<vmem>>, %arg6: memref<1xf32, #tpu.memory_space<smem>>, %arg7: memref<1x16x128xf32, #tpu.memory_space<vmem>>, %arg8: memref<16x128xf32, #tpu.memory_space<vmem>>) attributes {dimension_semantics = [#tpu.dimension_semantics<parallel>, #tpu.dimension_semantics<parallel>], iteration_bounds = array<i64: 2, 1>, scalar_prefetch = 0 : i64, scratch_operands = 1 : i64, tpu.core_type = #tpu.core_type<tc>, window_params = [{transform_indices = @transform_0, window_bounds = array<i64: 1, 16, 128>}, {pipeline_mode = #tpu.pipeline_mode<synchronous>, transform_indices = @transform_1, window_bounds = array<i64: 128, 384>}, {pipeline_mode = #tpu.pipeline_mode<synchronous>, transform_indices = @transform_2, window_bounds = array<i64: 128, 128>}, {pipeline_mode = #tpu.pipeline_mode<synchronous>, transform_indices = @transform_3, window_bounds = array<i64: 1, 128>}, {transform_indices = @transform_4, window_bounds = array<i64: 1>}, {transform_indices = @transform_5, window_bounds = array<i64: 1, 16, 128>}]} {
    %c0 = arith.constant 0 : index
    %c0_0 = arith.constant 0 : index
    %c0_1 = arith.constant 0 : index
    %0 = vector.load %arg2[%c0, %c0_0, %c0_1] : memref<1x16x128xf32, #tpu.memory_space<vmem>>, vector<1x16x128xf32>
    %1 = vector.shape_cast %0 : vector<1x16x128xf32> to vector<16x128xf32>
    %2 = arith.mulf %1, %1 : vector<16x128xf32>
    %cst = arith.constant dense<0.000000e+00> : vector<16xf32>
    %3 = vector.multi_reduction <add>, %2, %cst [1] : vector<16x128xf32> to vector<16xf32>
    %4 = vector.shape_cast %3 : vector<16xf32> to vector<16x1xf32>
    %cst_2 = arith.constant 1.280000e+02 : f32
    %5 = vector.broadcast %cst_2 : f32 to vector<16x1xf32>
    %6 = arith.divf %4, %5 : vector<16x1xf32>
    %cst_3 = arith.constant 9.99999997E-7 : f32
    %7 = vector.broadcast %cst_3 : f32 to vector<16x1xf32>
    %8 = arith.addf %6, %7 : vector<16x1xf32>
    %9 = math.rsqrt %8 : vector<16x1xf32>
    %10 = vector.broadcast %9 : vector<16x1xf32> to vector<16x128xf32>
    %11 = arith.mulf %1, %10 : vector<16x128xf32>
    %12 = arith.truncf %11 : vector<16x128xf32> to vector<16x128xbf16>
    %c0_4 = arith.constant 0 : index
    %c0_5 = arith.constant 0 : index
    %13 = vector.load %arg3[%c0_4, %c0_5] : memref<128x384xbf16, #tpu.memory_space<vmem>>, vector<128x128xbf16>
    %cst_6 = arith.constant dense<0.000000e+00> : vector<16x128xf32>
    %14 = tpu.matmul %12, %13, %cst_6 {dimension_numbers = #tpu.dot_dimension_numbers<[1], [0], [0], [1], [0, 0, 1, 1], [], []>} : vector<16x128xbf16>, vector<128x128xbf16>, vector<16x128xf32> -> vector<16x128xf32>
    %15 = arith.truncf %11 : vector<16x128xf32> to vector<16x128xbf16>
    %c0_7 = arith.constant 0 : index
    %c128 = arith.constant 128 : index
    %16 = vector.load %arg3[%c0_7, %c128] : memref<128x384xbf16, #tpu.memory_space<vmem>>, vector<128x256xbf16>
    %cst_8 = arith.constant dense<0.000000e+00> : vector<16x256xf32>
    %17 = tpu.matmul %15, %16, %cst_8 {dimension_numbers = #tpu.dot_dimension_numbers<[1], [0], [0], [1], [0, 0, 1, 1], [], []>} : vector<16x128xbf16>, vector<128x256xbf16>, vector<16x256xf32> -> vector<16x256xf32>
    %c0_9 = arith.constant 0 : index
    %18 = memref.load %arg6[%c0_9] : memref<1xf32, #tpu.memory_space<smem>>
    %19 = vector.broadcast %18 : f32 to vector<16x128xf32>
    %20 = arith.mulf %14, %19 : vector<16x128xf32>
    %21 = vector.extract_strided_slice %17 {offsets = [0, 0], sizes = [16, 128], strides = [1, 1]} : vector<16x256xf32> to vector<16x128xf32>
    %22 = vector.extract_strided_slice %17 {offsets = [0, 128], sizes = [16, 128], strides = [1, 1]} : vector<16x256xf32> to vector<16x128xf32>
    %23 = tpu.iota {dimensions = array<i32: 0>} : vector<16x16xi32>
    %c0_i32 = arith.constant 0 : i32
    %24 = vector.broadcast %c0_i32 : i32 to vector<16x16xi32>
    %25 = arith.addi %23, %24 : vector<16x16xi32>
    %26 = tpu.iota {dimensions = array<i32: 1>} : vector<16x16xi32>
    %27 = arith.cmpi eq, %25, %26 : vector<16x16xi32>
    %28 = vector.extract_strided_slice %20 {offsets = [0, 0], sizes = [16, 32], strides = [1, 1]} : vector<16x128xf32> to vector<16x32xf32>
    %29 = arith.truncf %28 : vector<16x32xf32> to vector<16x32xbf16>
    %30 = vector.extract_strided_slice %21 {offsets = [0, 0], sizes = [16, 32], strides = [1, 1]} : vector<16x128xf32> to vector<16x32xf32>
    %31 = arith.truncf %30 : vector<16x32xf32> to vector<16x32xbf16>
    %32 = vector.extract_strided_slice %22 {offsets = [0, 0], sizes = [16, 32], strides = [1, 1]} : vector<16x128xf32> to vector<16x32xf32>
    %33 = arith.truncf %32 : vector<16x32xf32> to vector<16x32xbf16>
    %cst_10 = arith.constant dense<0.000000e+00> : vector<16x16xf32>
    %34 = tpu.matmul %29, %31, %cst_10 {dimension_numbers = #tpu.dot_dimension_numbers<[1], [1], [0], [0], [0, 0, 1, 0], [], []>} : vector<16x32xbf16>, vector<16x32xbf16>, vector<16x16xf32> -> vector<16x16xf32>
    %cst_11 = arith.constant -3.40282347E+38 : f32
    %35 = vector.broadcast %cst_11 : f32 to vector<16x16xf32>
    %36 = arith.select %27, %35, %34 : vector<16x16xi1>, vector<16x16xf32>
    %cst_12 = arith.constant dense<0xFF800000> : vector<16xf32>
    %37 = vector.multi_reduction <maximumf>, %36, %cst_12 [1] : vector<16x16xf32> to vector<16xf32>
    %38 = vector.shape_cast %37 : vector<16xf32> to vector<16x1xf32>
    %39 = vector.broadcast %38 : vector<16x1xf32> to vector<16x16xf32>
    %40 = arith.subf %36, %39 : vector<16x16xf32>
    %41 = math.exp %40 : vector<16x16xf32>
    %cst_13 = arith.constant dense<0.000000e+00> : vector<16xf32>
    %42 = vector.multi_reduction <add>, %41, %cst_13 [1] : vector<16x16xf32> to vector<16xf32>
    %43 = vector.shape_cast %42 : vector<16xf32> to vector<16x1xf32>
    %44 = tpu.reciprocal %43 {approx = true} : vector<16x1xf32> -> vector<16x1xf32>
    %45 = vector.broadcast %44 : vector<16x1xf32> to vector<16x16xf32>
    %46 = arith.mulf %41, %45 : vector<16x16xf32>
    %47 = arith.truncf %46 : vector<16x16xf32> to vector<16x16xbf16>
    %cst_14 = arith.constant dense<0.000000e+00> : vector<16x32xf32>
    %48 = tpu.matmul %47, %33, %cst_14 {dimension_numbers = #tpu.dot_dimension_numbers<[1], [0], [0], [1], [0, 0, 1, 1], [], []>} : vector<16x16xbf16>, vector<16x32xbf16>, vector<16x32xf32> -> vector<16x32xf32>
    %c0_15 = arith.constant 0 : index
    %c0_16 = arith.constant 0 : index
    %49 = vector.load %arg8[%c0_15, %c0_16] : memref<16x128xf32, #tpu.memory_space<vmem>>, vector<16x32xf32>
    tpu.vector_store %arg8[%c0_15, %c0_16], %48 {strides = array<i32>} : memref<16x128xf32, #tpu.memory_space<vmem>>, vector<16x32xf32>,
    %50 = vector.extract_strided_slice %20 {offsets = [0, 32], sizes = [16, 32], strides = [1, 1]} : vector<16x128xf32> to vector<16x32xf32>
    %51 = arith.truncf %50 : vector<16x32xf32> to vector<16x32xbf16>
    %52 = vector.extract_strided_slice %21 {offsets = [0, 32], sizes = [16, 32], strides = [1, 1]} : vector<16x128xf32> to vector<16x32xf32>
    %53 = arith.truncf %52 : vector<16x32xf32> to vector<16x32xbf16>
    %54 = vector.extract_strided_slice %22 {offsets = [0, 32], sizes = [16, 32], strides = [1, 1]} : vector<16x128xf32> to vector<16x32xf32>
    %55 = arith.truncf %54 : vector<16x32xf32> to vector<16x32xbf16>
    %cst_17 = arith.constant dense<0.000000e+00> : vector<16x16xf32>
    %56 = tpu.matmul %51, %53, %cst_17 {dimension_numbers = #tpu.dot_dimension_numbers<[1], [1], [0], [0], [0, 0, 1, 0], [], []>} : vector<16x32xbf16>, vector<16x32xbf16>, vector<16x16xf32> -> vector<16x16xf32>
    %cst_18 = arith.constant -3.40282347E+38 : f32
    %57 = vector.broadcast %cst_18 : f32 to vector<16x16xf32>
    %58 = arith.select %27, %57, %56 : vector<16x16xi1>, vector<16x16xf32>
    %cst_19 = arith.constant dense<0xFF800000> : vector<16xf32>
    %59 = vector.multi_reduction <maximumf>, %58, %cst_19 [1] : vector<16x16xf32> to vector<16xf32>
    %60 = vector.shape_cast %59 : vector<16xf32> to vector<16x1xf32>
    %61 = vector.broadcast %60 : vector<16x1xf32> to vector<16x16xf32>
    %62 = arith.subf %58, %61 : vector<16x16xf32>
    %63 = math.exp %62 : vector<16x16xf32>
    %cst_20 = arith.constant dense<0.000000e+00> : vector<16xf32>
    %64 = vector.multi_reduction <add>, %63, %cst_20 [1] : vector<16x16xf32> to vector<16xf32>
    %65 = vector.shape_cast %64 : vector<16xf32> to vector<16x1xf32>
    %66 = tpu.reciprocal %65 {approx = true} : vector<16x1xf32> -> vector<16x1xf32>
    %67 = vector.broadcast %66 : vector<16x1xf32> to vector<16x16xf32>
    %68 = arith.mulf %63, %67 : vector<16x16xf32>
    %69 = arith.truncf %68 : vector<16x16xf32> to vector<16x16xbf16>
    %cst_21 = arith.constant dense<0.000000e+00> : vector<16x32xf32>
    %70 = tpu.matmul %69, %55, %cst_21 {dimension_numbers = #tpu.dot_dimension_numbers<[1], [0], [0], [1], [0, 0, 1, 1], [], []>} : vector<16x16xbf16>, vector<16x32xbf16>, vector<16x32xf32> -> vector<16x32xf32>
    %c0_22 = arith.constant 0 : index
    %c32 = arith.constant 32 : index
    %71 = vector.load %arg8[%c0_22, %c32] : memref<16x128xf32, #tpu.memory_space<vmem>>, vector<16x32xf32>
    tpu.vector_store %arg8[%c0_22, %c32], %70 {strides = array<i32>} : memref<16x128xf32, #tpu.memory_space<vmem>>, vector<16x32xf32>,
    %72 = vector.extract_strided_slice %20 {offsets = [0, 64], sizes = [16, 32], strides = [1, 1]} : vector<16x128xf32> to vector<16x32xf32>
    %73 = arith.truncf %72 : vector<16x32xf32> to vector<16x32xbf16>
    %74 = vector.extract_strided_slice %21 {offsets = [0, 64], sizes = [16, 32], strides = [1, 1]} : vector<16x128xf32> to vector<16x32xf32>
    %75 = arith.truncf %74 : vector<16x32xf32> to vector<16x32xbf16>
    %76 = vector.extract_strided_slice %22 {offsets = [0, 64], sizes = [16, 32], strides = [1, 1]} : vector<16x128xf32> to vector<16x32xf32>
    %77 = arith.truncf %76 : vector<16x32xf32> to vector<16x32xbf16>
    %cst_23 = arith.constant dense<0.000000e+00> : vector<16x16xf32>
    %78 = tpu.matmul %73, %75, %cst_23 {dimension_numbers = #tpu.dot_dimension_numbers<[1], [1], [0], [0], [0, 0, 1, 0], [], []>} : vector<16x32xbf16>, vector<16x32xbf16>, vector<16x16xf32> -> vector<16x16xf32>
    %cst_24 = arith.constant -3.40282347E+38 : f32
    %79 = vector.broadcast %cst_24 : f32 to vector<16x16xf32>
    %80 = arith.select %27, %79, %78 : vector<16x16xi1>, vector<16x16xf32>
    %cst_25 = arith.constant dense<0xFF800000> : vector<16xf32>
    %81 = vector.multi_reduction <maximumf>, %80, %cst_25 [1] : vector<16x16xf32> to vector<16xf32>
    %82 = vector.shape_cast %81 : vector<16xf32> to vector<16x1xf32>
    %83 = vector.broadcast %82 : vector<16x1xf32> to vector<16x16xf32>
    %84 = arith.subf %80, %83 : vector<16x16xf32>
    %85 = math.exp %84 : vector<16x16xf32>
    %cst_26 = arith.constant dense<0.000000e+00> : vector<16xf32>
    %86 = vector.multi_reduction <add>, %85, %cst_26 [1] : vector<16x16xf32> to vector<16xf32>
    %87 = vector.shape_cast %86 : vector<16xf32> to vector<16x1xf32>
    %88 = tpu.reciprocal %87 {approx = true} : vector<16x1xf32> -> vector<16x1xf32>
    %89 = vector.broadcast %88 : vector<16x1xf32> to vector<16x16xf32>
    %90 = arith.mulf %85, %89 : vector<16x16xf32>
    %91 = arith.truncf %90 : vector<16x16xf32> to vector<16x16xbf16>
    %cst_27 = arith.constant dense<0.000000e+00> : vector<16x32xf32>
    %92 = tpu.matmul %91, %77, %cst_27 {dimension_numbers = #tpu.dot_dimension_numbers<[1], [0], [0], [1], [0, 0, 1, 1], [], []>} : vector<16x16xbf16>, vector<16x32xbf16>, vector<16x32xf32> -> vector<16x32xf32>
    %c0_28 = arith.constant 0 : index
    %c64 = arith.constant 64 : index
    %93 = vector.load %arg8[%c0_28, %c64] : memref<16x128xf32, #tpu.memory_space<vmem>>, vector<16x32xf32>
    tpu.vector_store %arg8[%c0_28, %c64], %92 {strides = array<i32>} : memref<16x128xf32, #tpu.memory_space<vmem>>, vector<16x32xf32>,
    %94 = vector.extract_strided_slice %20 {offsets = [0, 96], sizes = [16, 32], strides = [1, 1]} : vector<16x128xf32> to vector<16x32xf32>
    %95 = arith.truncf %94 : vector<16x32xf32> to vector<16x32xbf16>
    %96 = vector.extract_strided_slice %21 {offsets = [0, 96], sizes = [16, 32], strides = [1, 1]} : vector<16x128xf32> to vector<16x32xf32>
    %97 = arith.truncf %96 : vector<16x32xf32> to vector<16x32xbf16>
    %98 = vector.extract_strided_slice %22 {offsets = [0, 96], sizes = [16, 32], strides = [1, 1]} : vector<16x128xf32> to vector<16x32xf32>
    %99 = arith.truncf %98 : vector<16x32xf32> to vector<16x32xbf16>
    %cst_29 = arith.constant dense<0.000000e+00> : vector<16x16xf32>
    %100 = tpu.matmul %95, %97, %cst_29 {dimension_numbers = #tpu.dot_dimension_numbers<[1], [1], [0], [0], [0, 0, 1, 0], [], []>} : vector<16x32xbf16>, vector<16x32xbf16>, vector<16x16xf32> -> vector<16x16xf32>
    %cst_30 = arith.constant -3.40282347E+38 : f32
    %101 = vector.broadcast %cst_30 : f32 to vector<16x16xf32>
    %102 = arith.select %27, %101, %100 : vector<16x16xi1>, vector<16x16xf32>
    %cst_31 = arith.constant dense<0xFF800000> : vector<16xf32>
    %103 = vector.multi_reduction <maximumf>, %102, %cst_31 [1] : vector<16x16xf32> to vector<16xf32>
    %104 = vector.shape_cast %103 : vector<16xf32> to vector<16x1xf32>
    %105 = vector.broadcast %104 : vector<16x1xf32> to vector<16x16xf32>
    %106 = arith.subf %102, %105 : vector<16x16xf32>
    %107 = math.exp %106 : vector<16x16xf32>
    %cst_32 = arith.constant dense<0.000000e+00> : vector<16xf32>
    %108 = vector.multi_reduction <add>, %107, %cst_32 [1] : vector<16x16xf32> to vector<16xf32>
    %109 = vector.shape_cast %108 : vector<16xf32> to vector<16x1xf32>
    %110 = tpu.reciprocal %109 {approx = true} : vector<16x1xf32> -> vector<16x1xf32>
    %111 = vector.broadcast %110 : vector<16x1xf32> to vector<16x16xf32>
    %112 = arith.mulf %107, %111 : vector<16x16xf32>
    %113 = arith.truncf %112 : vector<16x16xf32> to vector<16x16xbf16>
    %cst_33 = arith.constant dense<0.000000e+00> : vector<16x32xf32>
    %114 = tpu.matmul %113, %99, %cst_33 {dimension_numbers = #tpu.dot_dimension_numbers<[1], [0], [0], [1], [0, 0, 1, 1], [], []>} : vector<16x16xbf16>, vector<16x32xbf16>, vector<16x32xf32> -> vector<16x32xf32>
    %c0_34 = arith.constant 0 : index
    %c96 = arith.constant 96 : index
    %115 = vector.load %arg8[%c0_34, %c96] : memref<16x128xf32, #tpu.memory_space<vmem>>, vector<16x32xf32>
    tpu.vector_store %arg8[%c0_34, %c96], %114 {strides = array<i32>} : memref<16x128xf32, #tpu.memory_space<vmem>>, vector<16x32xf32>,
    %c0_35 = arith.constant 0 : index
    %c0_36 = arith.constant 0 : index
    %116 = vector.load %arg8[%c0_35, %c0_36] : memref<16x128xf32, #tpu.memory_space<vmem>>, vector<16x128xf32>
    %117 = arith.truncf %116 : vector<16x128xf32> to vector<16x128xbf16>
    %c0_37 = arith.constant 0 : index
    %c0_38 = arith.constant 0 : index
    %118 = vector.load %arg4[%c0_37, %c0_38] : memref<128x128xbf16, #tpu.memory_space<vmem>>, vector<128x128xbf16>
    %cst_39 = arith.constant dense<0.000000e+00> : vector<16x128xf32>
    %119 = tpu.matmul %117, %118, %cst_39 {dimension_numbers = #tpu.dot_dimension_numbers<[1], [0], [0], [1], [0, 0, 1, 1], [], []>} : vector<16x128xbf16>, vector<128x128xbf16>, vector<16x128xf32> -> vector<16x128xf32>
    %c0_40 = arith.constant 0 : index
    %c0_41 = arith.constant 0 : index
    %120 = vector.load %arg5[%c0_40, %c0_41] : memref<1x128xbf16, #tpu.memory_space<vmem>>, vector<1x128xbf16>
    %121 = arith.extf %120 : vector<1x128xbf16> to vector<1x128xf32>
    %122 = vector.broadcast %121 : vector<1x128xf32> to vector<16x128xf32>
    %123 = arith.addf %119, %122 : vector<16x128xf32>
    %124 = arith.addf %123, %11 : vector<16x128xf32>
    %c0_42 = arith.constant 0 : index
    %c0_43 = arith.constant 0 : index
    %c0_44 = arith.constant 0 : index
    %125 = vector.load %arg7[%c0_42, %c0_43, %c0_44] : memref<1x16x128xf32, #tpu.memory_space<vmem>>, vector<1x16x128xf32>
    %126 = vector.shape_cast %125 : vector<1x16x128xf32> to vector<16x128xf32>
    %127 = vector.shape_cast %124 : vector<16x128xf32> to vector<1x16x128xf32>
    tpu.vector_store %arg7[%c0_42, %c0_43, %c0_44], %127 {strides = array<i32>} : memref<1x16x128xf32, #tpu.memory_space<vmem>>, vector<1x16x128xf32>,
    return
  }
  func.func @transform_0(%arg0: i32, %arg1: i32) -> (i32, i32, i32) {
    %c0_i32 = arith.constant 0 : i32
    %c0_i32_0 = arith.constant 0 : i32
    %c0_i32_1 = arith.constant 0 : i32
    return %arg0, %c0_i32, %c0_i32_0 : i32, i32, i32
  }
  func.func @transform_1(%arg0: i32, %arg1: i32) -> (i32, i32) {
    %c0_i32 = arith.constant 0 : i32
    %c0_i32_0 = arith.constant 0 : i32
    %c0_i32_1 = arith.constant 0 : i32
    return %c0_i32, %c0_i32_0 : i32, i32
  }
  func.func @transform_2(%arg0: i32, %arg1: i32) -> (i32, i32) {
    %c0_i32 = arith.constant 0 : i32
    %c0_i32_0 = arith.constant 0 : i32
    %c0_i32_1 = arith.constant 0 : i32
    return %c0_i32, %c0_i32_0 : i32, i32
  }
  func.func @transform_3(%arg0: i32, %arg1: i32) -> (i32, i32) {
    %c0_i32 = arith.constant 0 : i32
    %c0_i32_0 = arith.constant 0 : i32
    %c0_i32_1 = arith.constant 0 : i32
    return %c0_i32, %c0_i32_0 : i32, i32
  }
  func.func @transform_4(%arg0: i32, %arg1: i32) -> i32 {
    %c0_i32 = arith.constant 0 : i32
    %c0_i32_0 = arith.constant 0 : i32
    return %c0_i32 : i32
  }
  func.func @transform_5(%arg0: i32, %arg1: i32) -> (i32, i32, i32) {
    %c0_i32 = arith.constant 0 : i32
    %c0_i32_0 = arith.constant 0 : i32
    return %arg0, %arg1, %c0_i32 : i32, i32, i32
  }
}

</mosaic_0001>

<llo_original>
// kernel: transformer_forward.11
$region0: #{transformer_forward.11}
  #allocation0 [shape = 'u32[]', space=smem, size = 0x4, offset = 0x4, fixed_abs, tag = 'smem constant byte address 0x4 - core index']
  #allocation1 [shape = 'u32[144,128]{1,0:T(1,128)}', space=vmem, size = 0x12000, scoped, tag = 'internal scratch']
  %s0 = inlined_call_operand.vmem [shape: f32[32,128], index: 0, kind: input, shape index: {}]
  %s1 = inlined_call_operand.vmem [shape: bf16[128,512], index: 1, kind: input, shape index: {}]
  %s2 = inlined_call_operand.vmem [shape: bf16[256,128], index: 2, kind: input, shape index: {}]
  %s3 = inlined_call_operand.hbm [shape: f32[32,128], index: 3, kind: output, shape index: {}]
  %s4 = sld [smem:[#allocation0]]
  $region45: #{transformer_forward.11} parent=0
    _
  %s6 = ssub.s32 1, %s4
  %s7 = scalar_select 0, %s6, %s4
  $region1: #{transformer_forward.11} parent=0
    #allocation2 [shape = 'u8[16384]{0}', space=vmem, size = 0x4000, scoped, tag = 'output window, operand 0']
    #allocation3 [shape = 's32[2]{0}', space=sflag, size = 0x8, scoped, tag = 'scoped memory for transformer_forward.11']
    %8 = vsyncpa [#allocation3], 0
    %s9 = scalar_lea.sflag [#allocation3], 1
    %10 = vsyncpa %s9, 0
    loop: start=0, step=1, limit=4
    $region2: #{transformer_forward.11} parent=1 // loop_pre_header
      _
    $region3: #{transformer_forward.11} parent=1 // loop_header
      %s12 = sphi 0, %s16
      %p13 = scmp.ge.s32.totalorder %s12, 4
      %s22 = sphi 0, %s24
      %s25 = sphi 0, %s22
      %s26 = sphi 0, %s25
      %s42 = sphi 0, %s26
      %s46 = sphi 0, %s46
      %s48 = sphi 0, %s46
      %s49 = sphi 0, %s48
      %s63 = sphi 0, %s49
      %s67 = sphi 0, %s67
      %s69 = sphi 0, %s67
      %s70 = sphi 0, %s69
      %s84 = sphi 0, %s70
      %s90 = sphi 0, %s92
      %s93 = sphi 0, %s90
      %s94 = sphi 0, %s93
      %s110 = sphi 0, %s94
    $region4: #{transformer_forward.11} parent=1 // loop_header_branch
      %15 = sbr.rel (%p13) target = $region8
    $region5: #{transformer_forward.11} parent=1 // loop_body
      %s17 = ssub.s32 %s12, 1
      %s18 = ssub.s32 %s12, 2
      %s19 = sadd.s32 %s12, 1
      %s20 = ssub.s32 %s12, %s19
      %p21 = scmp.eq.s32.totalorder %s20, 0
      %s23 = sadd.s32 %s22, 1
      %s24 = scalar_select %p21, %s22, %s23
      %p27 = pneg %p21
      %p28 = scmp.eq.s32.totalorder %s12, 1
      %p29 = por %p27, %p28
      %p30 = scmp.ne.s32.totalorder %s22, %s25
      %p31 = scmp.eq.s32.totalorder %s12, 0
      %p32 = por %p30, %p31
      %p33 = scmp.ne.s32.totalorder %s22, %s25
      %p34 = scmp.eq.s32.totalorder %s17, 1
      %p35 = por %p33, %p34
      %p36 = scmp.ne.s32.totalorder %s25, %s26
      %p37 = scmp.eq.s32.totalorder %s17, 0
      %p38 = por %p36, %p37
      %p39 = scmp.ne.s32.totalorder %s25, %s26
      %p40 = scmp.eq.s32.totalorder %s18, 1
      %p41 = por %p39, %p40
      %p43 = scmp.ne.s32.totalorder %s26, %s42
      %p44 = scmp.eq.s32.totalorder %s18, 0
      %p45 = por %p43, %p44
      %s47 = sadd.s32 %s46, 1
      %p50 = scmp.eq.s32.totalorder %s12, 1
      %p51 = scmp.ne.s32.totalorder %s46, %s48
      %p52 = scmp.eq.s32.totalorder %s12, 0
      %p53 = por %p51, %p52
      %p54 = scmp.ne.s32.totalorder %s46, %s48
      %p55 = scmp.eq.s32.totalorder %s17, 1
      %p56 = por %p54, %p55
      %p57 = scmp.ne.s32.totalorder %s48, %s49
      %p58 = scmp.eq.s32.totalorder %s17, 0
      %p59 = por %p57, %p58
      %p60 = scmp.ne.s32.totalorder %s48, %s49
      %p61 = scmp.eq.s32.totalorder %s18, 1
      %p62 = por %p60, %p61
      %p64 = scmp.ne.s32.totalorder %s49, %s63
      %p65 = scmp.eq.s32.totalorder %s18, 0
      %p66 = por %p64, %p65
      %s68 = sadd.s32 %s67, 1
      %p71 = scmp.eq.s32.totalorder %s12, 1
      %p72 = scmp.ne.s32.totalorder %s67, %s69
      %p73 = scmp.eq.s32.totalorder %s12, 0
      %p74 = por %p72, %p73
      %p75 = scmp.ne.s32.totalorder %s67, %s69
      %p76 = scmp.eq.s32.totalorder %s17, 1
      %p77 = por %p75, %p76
      %p78 = scmp.ne.s32.totalorder %s69, %s70
      %p79 = scmp.eq.s32.totalorder %s17, 0
      %p80 = por %p78, %p79
      %p81 = scmp.ne.s32.totalorder %s69, %s70
      %p82 = scmp.eq.s32.totalorder %s18, 1
      %p83 = por %p81, %p82
      %p85 = scmp.ne.s32.totalorder %s70, %s84
      %p86 = scmp.eq.s32.totalorder %s18, 0
      %p87 = por %p85, %p86
      %s88 = ssub.s32 %s12, %s19
      %p89 = scmp.eq.s32.totalorder %s88, 0
      %s91 = sadd.s32 %s90, 1
      %s92 = scalar_select %p89, %s90, %s91
      %p95 = pneg %p89
      %p96 = scmp.eq.s32.totalorder %s12, 1
      %p97 = por %p95, %p96
      %p98 = scmp.ne.s32.totalorder %s90, %s93
      %p99 = scmp.eq.s32.totalorder %s12, 0
      %p100 = por %p98, %p99
      %p101 = scmp.ne.s32.totalorder %s90, %s93
      %p102 = scmp.eq.s32.totalorder %s17, 1
      %p103 = por %p101, %p102
      %p104 = scmp.ne.s32.totalorder %s93, %s94
      %p105 = scmp.eq.s32.totalorder %s17, 0
      %p106 = por %p104, %p105
      %p107 = scmp.ne.s32.totalorder %s93, %s94
      %p108 = scmp.eq.s32.totalorder %s18, 1
      %p109 = por %p107, %p108
      %p111 = scmp.ne.s32.totalorder %s94, %s110
      %p112 = scmp.eq.s32.totalorder %s18, 0
      %p113 = por %p111, %p112
      %p114 = scmp.le.s32.totalorder 1, %s12
      %p115 = scmp.lt.s32.totalorder %s12, 3
      %p116 = pnand %p114, %p115
      %p117 = pneg %p116
      // Predicated region
      $region9: #{transformer_forward.11} parent=5 // pred_check
        _
      $region10: #{transformer_forward.11} parent=5 // pred_check_branch
        %119 = sbr.rel (%p116) target = $region12
      $region11: #{transformer_forward.11} parent=5 // pred_region
        %s120 = ssub.s32 %s12, 1
        // Predicated region
        $region13: #{transformer_forward.11} parent=11 // pred_check
          %p121 = pneg %p59
        $region14: #{transformer_forward.11} parent=11 // pred_check_branch
          %123 = sbr.rel (%p121) target = $region16
        $region15: #{transformer_forward.11} parent=11 // pred_region
          _
        $region16: #{transformer_forward.11} parent=11 // pred_fallthru
          _
        // Predicated region
        $region17: #{transformer_forward.11} parent=11 // pred_check
          %p124 = pneg %p80
        $region18: #{transformer_forward.11} parent=11 // pred_check_branch
          %126 = sbr.rel (%p124) target = $region20
        $region19: #{transformer_forward.11} parent=11 // pred_region
          _
        $region20: #{transformer_forward.11} parent=11 // pred_fallthru
          _
      $region12: #{transformer_forward.11} parent=5 // pred_fallthru
        _
      %p127 = scmp.lt.s32.totalorder %s12, 2
      // Predicated region
      $region21: #{transformer_forward.11} parent=5 // pred_check
        %p128 = pneg %p127
      $region22: #{transformer_forward.11} parent=5 // pred_check_branch
        %130 = sbr.rel (%p128) target = $region24
      $region23: #{transformer_forward.11} parent=5 // pred_region
        // Predicated region
        $region25: #{transformer_forward.11} parent=23 // pred_check
          %p131 = pneg %p32
        $region26: #{transformer_forward.11} parent=23 // pred_check_branch
          %133 = sbr.rel (%p131) target = $region28
        $region27: #{transformer_forward.11} parent=23 // pred_region
          %s134 = smul.u32 2, %s12
          %p135 = scmp.lt.s32.totalorder %s134, 3
          %s136 = scalar_select %p135, %s134, 3
          %s137 = smul.addr %s136, 8
          %s138 = scalar_lea.vmem %s0, %s137
          %s139 = smul.u32 2, %s12
        $region28: #{transformer_forward.11} parent=23 // pred_fallthru
          _
      $region24: #{transformer_forward.11} parent=5 // pred_fallthru
        _
      %p140 = scmp.le.s32.totalorder 1, %s12
      %p141 = scmp.lt.s32.totalorder %s12, 3
      %p142 = pnand %p140, %p141
      %p143 = pneg %p142
      // Predicated region
      $region29: #{transformer_forward.11} parent=5 // pred_check
        _
      $region30: #{transformer_forward.11} parent=5 // pred_check_branch
        %145 = sbr.rel (%p142) target = $region32
      $region31: #{transformer_forward.11} parent=5 // pred_region
        %s146 = ssub.s32 %s12, 1
        %s147 = smul.u32 2, %s17
        %p148 = scmp.lt.s32.totalorder %s147, 3
        %s149 = scalar_select %p148, %s147, 3
        %s150 = smul.addr %s149, 8
        %s151 = scalar_lea.vmem %s0, %s150
        %p152 = pneg %p38
        %p153 = pneg %p35
        %p154 = pneg %p59
        %p155 = pneg %p56
        %p156 = pneg %p80
        %p157 = pneg %p77
        %p158 = pneg %p106
        %p159 = pneg %p103
        %s160 = sand.u32 %s93, 1
        %s161 = scalar_lea.sflag [#allocation3], %s160
        %s162 = sand.u32 %s93, 1
        %s163 = smul.addr %s162, 16
        %s164 = scalar_lea.vmem [#allocation2], %s163
        %s165 = smul.u32 2, %s17
        %p166 = scmp.lt.s32.totalorder %s165, 3
        %s167 = scalar_select %p166, %s165, 3
        %s168 = smul.addr %s167, 8
        %s169 = scalar_lea.vmem %s0, %s168
        %s170 = smul.u32 2, %s17
        %s171 = smul.u32 2, %s17
        %v173 = vld [vmem:[%s169] sm:$0xff]
        %v174 = vld [vmem:[%s169 + $0x8] sm:$0xff]
        %v175 = vmul.f32 %v173, %v173
        %v176 = vmul.f32 %v174, %v174
        %177 = vadd.xlane.f32.xlu0 %v175
        %v178 = vpop.xlane.xlu0 %177
        %179 = vadd.xlane.f32.xlu0 %v176
        %v180 = vpop.xlane.xlu0 %179
        %v181 = vrcp.pop 128.0
        %v182 = vmul.f32 %v178, %v181
        %v183 = vmul.f32 %v180, %v181
        %v184 = vadd.f32 %v182, 1e-06
        %v185 = vadd.f32 %v183, 1e-06
        %v186 = vrsqrt.pop %v184
        %v187 = vrsqrt.pop %v185
        %v188 = vmul.f32 %v173, %v186
        %v189 = vmul.f32 %v174, %v187
        %v190 = vpack.c.bf16 %v189, %v188
        %v191 = vld [vmem:[%s1] sm:$0xff]
        %v192 = vld [vmem:[%s1 + $0x8] sm:$0xff]
        %v193 = vld [vmem:[%s1 + $0x10] sm:$0xff]
        %v194 = vld [vmem:[%s1 + $0x18] sm:$0xff]
        %v195 = vld [vmem:[%s1 + $0x20] sm:$0xff]
        %v196 = vld [vmem:[%s1 + $0x28] sm:$0xff]
        %v197 = vld [vmem:[%s1 + $0x30] sm:$0xff]
        %v198 = vld [vmem:[%s1 + $0x38] sm:$0xff]
        %v199 = vld [vmem:[%s1 + $0x40] sm:$0xff]
        %v200 = vld [vmem:[%s1 + $0x48] sm:$0xff]
        %v201 = vld [vmem:[%s1 + $0x50] sm:$0xff]
        %v202 = vld [vmem:[%s1 + $0x58] sm:$0xff]
        %v203 = vld [vmem:[%s1 + $0x60] sm:$0xff]
        %v204 = vld [vmem:[%s1 + $0x68] sm:$0xff]
        %v205 = vld [vmem:[%s1 + $0x70] sm:$0xff]
        %v206 = vld [vmem:[%s1 + $0x78] sm:$0xff]
        %v207 = vld [vmem:[%s1 + $0x80] sm:$0xff]
        %v208 = vld [vmem:[%s1 + $0x88] sm:$0xff]
        %v209 = vld [vmem:[%s1 + $0x90] sm:$0xff]
        %v210 = vld [vmem:[%s1 + $0x98] sm:$0xff]
        %v211 = vld [vmem:[%s1 + $0xa0] sm:$0xff]
        %v212 = vld [vmem:[%s1 + $0xa8] sm:$0xff]
        %v213 = vld [vmem:[%s1 + $0xb0] sm:$0xff]
        %v214 = vld [vmem:[%s1 + $0xb8] sm:$0xff]
        %v215 = vld [vmem:[%s1 + $0xc0] sm:$0xff]
        %v216 = vld [vmem:[%s1 + $0xc8] sm:$0xff]
        %v217 = vld [vmem:[%s1 + $0xd0] sm:$0xff]
        %v218 = vld [vmem:[%s1 + $0xd8] sm:$0xff]
        %v219 = vld [vmem:[%s1 + $0xe0] sm:$0xff]
        %v220 = vld [vmem:[%s1 + $0xe8] sm:$0xff]
        %v221 = vld [vmem:[%s1 + $0xf0] sm:$0xff]
        %v222 = vld [vmem:[%s1 + $0xf8] sm:$0xff]
        %v255 = vunpack.c.l.b16 %v191
        %v256 = vunpack.c.h.b16 %v191
        %v257 = vunpack.c.l.b16 %v192
        %v258 = vunpack.c.h.b16 %v192
        %v259 = vunpack.c.l.b16 %v193
        %v260 = vunpack.c.h.b16 %v193
        %v261 = vunpack.c.l.b16 %v194
        %v262 = vunpack.c.h.b16 %v194
        %v263 = vunpack.c.l.b16 %v195
        %v264 = vunpack.c.h.b16 %v195
        %v265 = vunpack.c.l.b16 %v196
        %v266 = vunpack.c.h.b16 %v196
        %v267 = vunpack.c.l.b16 %v197
        %v268 = vunpack.c.h.b16 %v197
        %v269 = vunpack.c.l.b16 %v198
        %v270 = vunpack.c.h.b16 %v198
        %v271 = vunpack.c.l.b16 %v199
        %v272 = vunpack.c.h.b16 %v199
        %v273 = vunpack.c.l.b16 %v200
        %v274 = vunpack.c.h.b16 %v200
        %v275 = vunpack.c.l.b16 %v201
        %v276 = vunpack.c.h.b16 %v201
        %v277 = vunpack.c.l.b16 %v202
        %v278 = vunpack.c.h.b16 %v202
        %v279 = vunpack.c.l.b16 %v203
        %v280 = vunpack.c.h.b16 %v203
        %v281 = vunpack.c.l.b16 %v204
        %v282 = vunpack.c.h.b16 %v204
        %v283 = vunpack.c.l.b16 %v205
        %v284 = vunpack.c.h.b16 %v205
        %v285 = vunpack.c.l.b16 %v206
        %v286 = vunpack.c.h.b16 %v206
        %v287 = vunpack.c.l.b16 %v207
        %v288 = vunpack.c.h.b16 %v207
        %v289 = vunpack.c.l.b16 %v208
        %v290 = vunpack.c.h.b16 %v208
        %v291 = vunpack.c.l.b16 %v209
        %v292 = vunpack.c.h.b16 %v209
        %v293 = vunpack.c.l.b16 %v210
        %v294 = vunpack.c.h.b16 %v210
        %v295 = vunpack.c.l.b16 %v211
        %v296 = vunpack.c.h.b16 %v211
        %v297 = vunpack.c.l.b16 %v212
        %v298 = vunpack.c.h.b16 %v212
        %v299 = vunpack.c.l.b16 %v213
        %v300 = vunpack.c.h.b16 %v213
        %v301 = vunpack.c.l.b16 %v214
        %v302 = vunpack.c.h.b16 %v214
        %v303 = vunpack.c.l.b16 %v215
        %v304 = vunpack.c.h.b16 %v215
        %v305 = vunpack.c.l.b16 %v216
        %v306 = vunpack.c.h.b16 %v216
        %v307 = vunpack.c.l.b16 %v217
        %v308 = vunpack.c.h.b16 %v217
        %v309 = vunpack.c.l.b16 %v218
        %v310 = vunpack.c.h.b16 %v218
        %v311 = vunpack.c.l.b16 %v219
        %v312 = vunpack.c.h.b16 %v219
        %v313 = vunpack.c.l.b16 %v220
        %v314 = vunpack.c.h.b16 %v220
        %v315 = vunpack.c.l.b16 %v221
        %v316 = vunpack.c.h.b16 %v221
        %v317 = vunpack.c.l.b16 %v222
        %v318 = vunpack.c.h.b16 %v222
        %v319 = vpack.c.b16 %v259, %v255
        %v320 = vpack.c.b16 %v260, %v256
        %v321 = vpack.c.b16 %v261, %v257
        %v322 = vpack.c.b16 %v262, %v258
        %v323 = vpack.c.b16 %v267, %v263
        %v324 = vpack.c.b16 %v268, %v264
        %v325 = vpack.c.b16 %v269, %v265
        %v326 = vpack.c.b16 %v270, %v266
        %v327 = vpack.c.b16 %v275, %v271
        %v328 = vpack.c.b16 %v276, %v272
        %v329 = vpack.c.b16 %v277, %v273
        %v330 = vpack.c.b16 %v278, %v274
        %v331 = vpack.c.b16 %v283, %v279
        %v332 = vpack.c.b16 %v284, %v280
        %v333 = vpack.c.b16 %v285, %v281
        %v334 = vpack.c.b16 %v286, %v282
        %v335 = vpack.c.b16 %v291, %v287
        %v336 = vpack.c.b16 %v292, %v288
        %v337 = vpack.c.b16 %v293, %v289
        %v338 = vpack.c.b16 %v294, %v290
        %v339 = vpack.c.b16 %v299, %v295
        %v340 = vpack.c.b16 %v300, %v296
        %v341 = vpack.c.b16 %v301, %v297
        %v342 = vpack.c.b16 %v302, %v298
        %v343 = vpack.c.b16 %v307, %v303
        %v344 = vpack.c.b16 %v308, %v304
        %v345 = vpack.c.b16 %v309, %v305
        %v346 = vpack.c.b16 %v310, %v306
        %v347 = vpack.c.b16 %v315, %v311
        %v348 = vpack.c.b16 %v316, %v312
        %v349 = vpack.c.b16 %v317, %v313
        %v350 = vpack.c.b16 %v318, %v314
        %383 = vmatprep.subr.bf16.mxu0 %v348
        %384 = vmatpush1.bf16.msra.mxu0 %v347
        %385 = vmatprep.subr.bf16.mxu0 %v344
        %386 = vmatpush1.bf16.msra.mxu0 %v343
        %387 = vmatprep.subr.bf16.mxu0 %v340
        %388 = vmatpush1.bf16.msra.mxu0 %v339
        %389 = vmatprep.subr.bf16.mxu0 %v336
        %390 = vmatpush1.bf16.msra.mxu0 %v335
        %391 = vmatprep.subr.bf16.mxu0 %v332
        %392 = vmatpush1.bf16.msra.mxu0 %v331
        %393 = vmatprep.subr.bf16.mxu0 %v328
        %394 = vmatpush1.bf16.msra.mxu0 %v327
        %395 = vmatprep.subr.bf16.mxu0 %v324
        %396 = vmatpush1.bf16.msra.mxu0 %v323
        %397 = vmatprep.subr.bf16.mxu0 %v320
        %398 = vmatpush1.bf16.msra.mxu0 %v319
        %399 = vmatprep.subr.bf16.mxu0 0
        %400 = vmatpush2.bf16.msra.mxu0 0
        %401 = vmatprep.subr.bf16.mxu0 0
        %402 = vmatpush2.bf16.msra.mxu0 0
        %403 = vmatprep.subr.bf16.mxu0 0
        %404 = vmatpush2.bf16.msra.mxu0 0
        %405 = vmatprep.subr.bf16.mxu0 0
        %406 = vmatpush2.bf16.msra.mxu0 0
        %407 = vmatprep.subr.bf16.mxu0 0
        %408 = vmatpush2.bf16.msra.mxu0 0
        %409 = vmatprep.subr.bf16.mxu0 0
        %410 = vmatpush2.bf16.msra.mxu0 0
        %411 = vmatprep.subr.bf16.mxu0 0
        %412 = vmatpush2.bf16.msra.mxu0 0
        %413 = vmatprep.subr.bf16.mxu0 0
        %414 = vmatpush2.bf16.msra.mxu0 0
        %415 = vmatprep.mubr.bf16.mxu0 0
        %416 = vmatmul.mubr.bf16.gmra.mxu0 %v190
        %v417 = vpop.f32.mrf.mxu0
        %v418 = vadd.f32 0.0, %v417
        %v419 = vpop.f32.mrf.mxu0
        %v420 = vadd.f32 0.0, %v419
        %v421 = vpop.f32.mrf.mxu0
        %v422 = vadd.f32 0.0, %v421
        %v423 = vpop.f32.mrf.mxu0
        %v424 = vadd.f32 0.0, %v423
        %425 = vdwg.mxu0
        %426 = vmatprep.subr.bf16.mxu0 %v350
        %427 = vmatpush1.bf16.msra.mxu0 %v349
        %428 = vmatprep.subr.bf16.mxu0 %v346
        %429 = vmatpush1.bf16.msra.mxu0 %v345
        %430 = vmatprep.subr.bf16.mxu0 %v342
        %431 = vmatpush1.bf16.msra.mxu0 %v341
        %432 = vmatprep.subr.bf16.mxu0 %v338
        %433 = vmatpush1.bf16.msra.mxu0 %v337
        %434 = vmatprep.subr.bf16.mxu0 %v334
        %435 = vmatpush1.bf16.msra.mxu0 %v333
        %436 = vmatprep.subr.bf16.mxu0 %v330
        %437 = vmatpush1.bf16.msra.mxu0 %v329
        %438 = vmatprep.subr.bf16.mxu0 %v326
        %439 = vmatpush1.bf16.msra.mxu0 %v325
        %440 = vmatprep.subr.bf16.mxu0 %v322
        %441 = vmatpush1.bf16.msra.mxu0 %v321
        %442 = vmatprep.subr.bf16.mxu0 0
        %443 = vmatpush2.bf16.msra.mxu0 0
        %444 = vmatprep.subr.bf16.mxu0 0
        %445 = vmatpush2.bf16.msra.mxu0 0
        %446 = vmatprep.subr.bf16.mxu0 0
        %447 = vmatpush2.bf16.msra.mxu0 0
        %448 = vmatprep.subr.bf16.mxu0 0
        %449 = vmatpush2.bf16.msra.mxu0 0
        %450 = vmatprep.subr.bf16.mxu0 0
        %451 = vmatpush2.bf16.msra.mxu0 0
        %452 = vmatprep.subr.bf16.mxu0 0
        %453 = vmatpush2.bf16.msra.mxu0 0
        %454 = vmatprep.subr.bf16.mxu0 0
        %455 = vmatpush2.bf16.msra.mxu0 0
        %456 = vmatprep.subr.bf16.mxu0 0
        %457 = vmatpush2.bf16.msra.mxu0 0
        %458 = vmatprep.mubr.bf16.mxu0 0
        %459 = vmatmul.mubr.bf16.gmra.mxu0 %v190
        %v460 = vpop.f32.mrf.mxu0
        %v461 = vadd.f32 0.0, %v460
        %v462 = vpop.f32.mrf.mxu0
        %v463 = vadd.f32 0.0, %v462
        %v464 = vpop.f32.mrf.mxu0
        %v465 = vadd.f32 0.0, %v464
        %v466 = vpop.f32.mrf.mxu0
        %v467 = vadd.f32 0.0, %v466
        %468 = vdwg.mxu0
        %v469 = vmul.f32 %v418, %v461
        %v470 = vmul.f32 %v420, %v463
        %v471 = vmul.f32 %v422, %v465
        %v472 = vmul.f32 %v424, %v467
        %v473 = vpack.c.bf16 %v471, %v469
        %v474 = vpack.c.bf16 %v472, %v470
        %v475 = vld [vmem:[%s2] sm:$0xf]
        %v476 = vld [vmem:[%s2 + $0x4] sm:$0xf]
        %v477 = vld [vmem:[%s2 + $0x8] sm:$0xf]
        %v478 = vld [vmem:[%s2 + $0xc] sm:$0xf]
        %v479 = vld [vmem:[%s2 + $0x10] sm:$0xf]
        %v480 = vld [vmem:[%s2 + $0x14] sm:$0xf]
        %v481 = vld [vmem:[%s2 + $0x18] sm:$0xf]
        %v482 = vld [vmem:[%s2 + $0x1c] sm:$0xf]
        %v483 = vld [vmem:[%s2 + $0x20] sm:$0xf]
        %v484 = vld [vmem:[%s2 + $0x24] sm:$0xf]
        %v485 = vld [vmem:[%s2 + $0x28] sm:$0xf]
        %v486 = vld [vmem:[%s2 + $0x2c] sm:$0xf]
        %v487 = vld [vmem:[%s2 + $0x30] sm:$0xf]
        %v488 = vld [vmem:[%s2 + $0x34] sm:$0xf]
        %v489 = vld [vmem:[%s2 + $0x38] sm:$0xf]
        %v490 = vld [vmem:[%s2 + $0x3c] sm:$0xf]
        %v491 = vld [vmem:[%s2 + $0x40] sm:$0xf]
        %v492 = vld [vmem:[%s2 + $0x44] sm:$0xf]
        %v493 = vld [vmem:[%s2 + $0x48] sm:$0xf]
        %v494 = vld [vmem:[%s2 + $0x4c] sm:$0xf]
        %v495 = vld [vmem:[%s2 + $0x50] sm:$0xf]
        %v496 = vld [vmem:[%s2 + $0x54] sm:$0xf]
        %v497 = vld [vmem:[%s2 + $0x58] sm:$0xf]
        %v498 = vld [vmem:[%s2 + $0x5c] sm:$0xf]
        %v499 = vld [vmem:[%s2 + $0x60] sm:$0xf]
        %v500 = vld [vmem:[%s2 + $0x64] sm:$0xf]
        %v501 = vld [vmem:[%s2 + $0x68] sm:$0xf]
        %v502 = vld [vmem:[%s2 + $0x6c] sm:$0xf]
        %v503 = vld [vmem:[%s2 + $0x70] sm:$0xf]
        %v504 = vld [vmem:[%s2 + $0x74] sm:$0xf]
        %v505 = vld [vmem:[%s2 + $0x78] sm:$0xf]
        %v506 = vld [vmem:[%s2 + $0x7c] sm:$0xf]
        %v539 = vunpack.c.l.b16 %v475
        %v540 = vunpack.c.l.b16 %v476
        %v541 = vunpack.c.l.b16 %v477
        %v542 = vunpack.c.l.b16 %v478
        %v543 = vunpack.c.l.b16 %v479
        %v544 = vunpack.c.l.b16 %v480
        %v545 = vunpack.c.l.b16 %v481
        %v546 = vunpack.c.l.b16 %v482
        %v547 = vunpack.c.l.b16 %v483
        %v548 = vunpack.c.l.b16 %v484
        %v549 = vunpack.c.l.b16 %v485
        %v550 = vunpack.c.l.b16 %v486
        %v551 = vunpack.c.l.b16 %v487
        %v552 = vunpack.c.l.b16 %v488
        %v553 = vunpack.c.l.b16 %v489
        %v554 = vunpack.c.l.b16 %v490
        %v555 = vunpack.c.l.b16 %v491
        %v556 = vunpack.c.l.b16 %v492
        %v557 = vunpack.c.l.b16 %v493
        %v558 = vunpack.c.l.b16 %v494
        %v559 = vunpack.c.l.b16 %v495
        %v560 = vunpack.c.l.b16 %v496
        %v561 = vunpack.c.l.b16 %v497
        %v562 = vunpack.c.l.b16 %v498
        %v563 = vunpack.c.l.b16 %v499
        %v564 = vunpack.c.l.b16 %v500
        %v565 = vunpack.c.l.b16 %v501
        %v566 = vunpack.c.l.b16 %v502
        %v567 = vunpack.c.l.b16 %v503
        %v568 = vunpack.c.l.b16 %v504
        %v569 = vunpack.c.l.b16 %v505
        %v570 = vunpack.c.l.b16 %v506
        %v571 = vpack.c.b16 %v540, %v539
        %v572 = vpack.c.b16 %v542, %v541
        %v573 = vpack.c.b16 %v544, %v543
        %v574 = vpack.c.b16 %v546, %v545
        %v575 = vpack.c.b16 %v548, %v547
        %v576 = vpack.c.b16 %v550, %v549
        %v577 = vpack.c.b16 %v552, %v551
        %v578 = vpack.c.b16 %v554, %v553
        %v579 = vpack.c.b16 %v556, %v555
        %v580 = vpack.c.b16 %v558, %v557
        %v581 = vpack.c.b16 %v560, %v559
        %v582 = vpack.c.b16 %v562, %v561
        %v583 = vpack.c.b16 %v564, %v563
        %v584 = vpack.c.b16 %v566, %v565
        %v585 = vpack.c.b16 %v568, %v567
        %v586 = vpack.c.b16 %v570, %v569
        %603 = vmatprep.subr.bf16.mxu0 0
        %604 = vmatpush1.bf16.msra.mxu0 %v578
        %605 = vmatprep.subr.bf16.mxu0 0
        %606 = vmatpush1.bf16.msra.mxu0 %v577
        %607 = vmatprep.subr.bf16.mxu0 0
        %608 = vmatpush1.bf16.msra.mxu0 %v576
        %609 = vmatprep.subr.bf16.mxu0 0
        %610 = vmatpush1.bf16.msra.mxu0 %v575
        %611 = vmatprep.subr.bf16.mxu0 0
        %612 = vmatpush1.bf16.msra.mxu0 %v574
        %613 = vmatprep.subr.bf16.mxu0 0
        %614 = vmatpush1.bf16.msra.mxu0 %v573
        %615 = vmatprep.subr.bf16.mxu0 0
        %616 = vmatpush1.bf16.msra.mxu0 %v572
        %617 = vmatprep.subr.bf16.mxu0 0
        %618 = vmatpush1.bf16.msra.mxu0 %v571
        %619 = vmatprep.subr.bf16.mxu0 0
        %620 = vmatpush2.bf16.msra.mxu0 %v586
        %621 = vmatprep.subr.bf16.mxu0 0
        %622 = vmatpush2.bf16.msra.mxu0 %v585
        %623 = vmatprep.subr.bf16.mxu0 0
        %624 = vmatpush2.bf16.msra.mxu0 %v584
        %625 = vmatprep.subr.bf16.mxu0 0
        %626 = vmatpush2.bf16.msra.mxu0 %v583
        %627 = vmatprep.subr.bf16.mxu0 0
        %628 = vmatpush2.bf16.msra.mxu0 %v582
        %629 = vmatprep.subr.bf16.mxu0 0
        %630 = vmatpush2.bf16.msra.mxu0 %v581
        %631 = vmatprep.subr.bf16.mxu0 0
        %632 = vmatpush2.bf16.msra.mxu0 %v580
        %633 = vmatprep.subr.bf16.mxu0 0
        %634 = vmatpush2.bf16.msra.mxu0 %v579
        %635 = vmatprep.mubr.bf16.mxu0 %v474
        %636 = vmatmul.mubr.bf16.gmra.mxu0 %v473
        %v637 = vpop.f32.mrf.mxu0
        %v638 = vadd.f32 %v188, %v637
        %v639 = vpop.f32.mrf.mxu0
        %v640 = vpop.f32.mrf.mxu0
        %v641 = vadd.f32 %v189, %v640
        %v642 = vpop.f32.mrf.mxu0
        %643 = vdwg.mxu0
        %644 = vst [vmem:[%s164] sm:$0xff] %v638
        %645 = vst [vmem:[%s164 + $0x8] sm:$0xff] %v641
        %s646 = sand.u32 %s93, 1
        %s647 = scalar_lea.sflag [#allocation3], %s646
        %s648 = sand.u32 %s93, 1
        %s649 = smul.addr %s648, 16
        %s650 = scalar_lea.vmem [#allocation2], %s649
        // Predicated region
        $region33: #{transformer_forward.11} parent=31 // pred_check
          %p651 = pneg %p103
        $region34: #{transformer_forward.11} parent=31 // pred_check_branch
          %653 = sbr.rel (%p651) target = $region36
        $region35: #{transformer_forward.11} parent=31 // pred_region
          %s654 = smul.u32 2, %s17
          %s656 = ssub.s32 256, 256
          %657 = vsyncadd %s647, %s656
          %s658 = smul.addr %s654, 128
          %s659 = scalar_lea.hbm %s3, %s658
          %s660 = sshll.u32 %s650, 4
          %s661 = int_to_ptr.vmem [resolvable:$true] %s660
          %666 = dma.vmem_to_hbm [thread:$0]  %s661, 256, %s659, %s647, 128, 128, 8
        $region36: #{transformer_forward.11} parent=31 // pred_fallthru
          _
      $region32: #{transformer_forward.11} parent=5 // pred_fallthru
        _
      %p667 = scmp.le.s32.totalorder 2, %s12
      // Predicated region
      $region37: #{transformer_forward.11} parent=5 // pred_check
        %p668 = pneg %p667
      $region38: #{transformer_forward.11} parent=5 // pred_check_branch
        %670 = sbr.rel (%p668) target = $region40
      $region39: #{transformer_forward.11} parent=5 // pred_region
        %s671 = ssub.s32 %s12, 2
        // Predicated region
        $region41: #{transformer_forward.11} parent=39 // pred_check
          %p672 = pneg %p109
        $region42: #{transformer_forward.11} parent=39 // pred_check_branch
          %674 = sbr.rel (%p672) target = $region44
        $region43: #{transformer_forward.11} parent=39 // pred_region
          %s675 = sand.u32 %s94, 1
          %s676 = scalar_lea.sflag [#allocation3], %s675
          %s677 = sand.u32 %s94, 1
          %s678 = smul.addr %s677, 16
          %s679 = scalar_lea.vmem [#allocation2], %s678
          %680 = dma.done %s676, 256
        $region44: #{transformer_forward.11} parent=39 // pred_fallthru
          _
      $region40: #{transformer_forward.11} parent=5 // pred_fallthru
        _
    $region6: #{transformer_forward.11} parent=1 // loop_footer
      %s16 = sadd.s32 1, %s12
    $region7: #{transformer_forward.11} parent=1 // loop_footer_branch
      %11 = sbr.rel target = $region3
    $region8: #{transformer_forward.11} parent=1 // loop_exit
      _
    %681 = vsyncpa [#allocation3], 1
    %s682 = scalar_lea.sflag [#allocation3], 1
    %683 = vsyncpa %s682, 1

// kernel: transformer_forward.8
$region0: #{transformer_forward.8}
  #allocation0 [shape = 'u32[]', space=smem, size = 0x4, offset = 0x4, fixed_abs, tag = 'smem constant byte address 0x4 - core index']
  #allocation1 [shape = 'u32[144,128]{1,0:T(1,128)}', space=vmem, size = 0x12000, scoped, tag = 'internal scratch']
  %s0 = inlined_call_operand.vmem [shape: f32[32,128], index: 0, kind: input, shape index: {}]
  %s1 = inlined_call_operand.vmem [shape: bf16[128,512], index: 1, kind: input, shape index: {}]
  %s2 = inlined_call_operand.vmem [shape: bf16[256,128], index: 2, kind: input, shape index: {}]
  %s3 = inlined_call_operand.vmem [shape: f32[32,128], index: 3, kind: output, shape index: {}]
  %s4 = sld [smem:[#allocation0]]
  $region45: #{transformer_forward.8} parent=0
    _
  %s6 = ssub.s32 1, %s4
  %s7 = scalar_select 0, %s6, %s4
  loop: start=0, step=1, limit=4
  $region2: #{transformer_forward.8} parent=0 // loop_pre_header
    _
  $region3: #{transformer_forward.8} parent=0 // loop_header
    %s9 = sphi 0, %s13
    %p10 = scmp.ge.s32.totalorder %s9, 4
    %s19 = sphi 0, %s21
    %s22 = sphi 0, %s19
    %s23 = sphi 0, %s22
    %s39 = sphi 0, %s23
    %s43 = sphi 0, %s43
    %s45 = sphi 0, %s43
    %s46 = sphi 0, %s45
    %s60 = sphi 0, %s46
    %s64 = sphi 0, %s64
    %s66 = sphi 0, %s64
    %s67 = sphi 0, %s66
    %s81 = sphi 0, %s67
    %s87 = sphi 0, %s89
    %s90 = sphi 0, %s87
    %s91 = sphi 0, %s90
    %s107 = sphi 0, %s91
  $region4: #{transformer_forward.8} parent=0 // loop_header_branch
    %12 = sbr.rel (%p10) target = $region8
  $region5: #{transformer_forward.8} parent=0 // loop_body
    %s14 = ssub.s32 %s9, 1
    %s15 = ssub.s32 %s9, 2
    %s16 = sadd.s32 %s9, 1
    %s17 = ssub.s32 %s9, %s16
    %p18 = scmp.eq.s32.totalorder %s17, 0
    %s20 = sadd.s32 %s19, 1
    %s21 = scalar_select %p18, %s19, %s20
    %p24 = pneg %p18
    %p25 = scmp.eq.s32.totalorder %s9, 1
    %p26 = por %p24, %p25
    %p27 = scmp.ne.s32.totalorder %s19, %s22
    %p28 = scmp.eq.s32.totalorder %s9, 0
    %p29 = por %p27, %p28
    %p30 = scmp.ne.s32.totalorder %s19, %s22
    %p31 = scmp.eq.s32.totalorder %s14, 1
    %p32 = por %p30, %p31
    %p33 = scmp.ne.s32.totalorder %s22, %s23
    %p34 = scmp.eq.s32.totalorder %s14, 0
    %p35 = por %p33, %p34
    %p36 = scmp.ne.s32.totalorder %s22, %s23
    %p37 = scmp.eq.s32.totalorder %s15, 1
    %p38 = por %p36, %p37
    %p40 = scmp.ne.s32.totalorder %s23, %s39
    %p41 = scmp.eq.s32.totalorder %s15, 0
    %p42 = por %p40, %p41
    %s44 = sadd.s32 %s43, 1
    %p47 = scmp.eq.s32.totalorder %s9, 1
    %p48 = scmp.ne.s32.totalorder %s43, %s45
    %p49 = scmp.eq.s32.totalorder %s9, 0
    %p50 = por %p48, %p49
    %p51 = scmp.ne.s32.totalorder %s43, %s45
    %p52 = scmp.eq.s32.totalorder %s14, 1
    %p53 = por %p51, %p52
    %p54 = scmp.ne.s32.totalorder %s45, %s46
    %p55 = scmp.eq.s32.totalorder %s14, 0
    %p56 = por %p54, %p55
    %p57 = scmp.ne.s32.totalorder %s45, %s46
    %p58 = scmp.eq.s32.totalorder %s15, 1
    %p59 = por %p57, %p58
    %p61 = scmp.ne.s32.totalorder %s46, %s60
    %p62 = scmp.eq.s32.totalorder %s15, 0
    %p63 = por %p61, %p62
    %s65 = sadd.s32 %s64, 1
    %p68 = scmp.eq.s32.totalorder %s9, 1
    %p69 = scmp.ne.s32.totalorder %s64, %s66
    %p70 = scmp.eq.s32.totalorder %s9, 0
    %p71 = por %p69, %p70
    %p72 = scmp.ne.s32.totalorder %s64, %s66
    %p73 = scmp.eq.s32.totalorder %s14, 1
    %p74 = por %p72, %p73
    %p75 = scmp.ne.s32.totalorder %s66, %s67
    %p76 = scmp.eq.s32.totalorder %s14, 0
    %p77 = por %p75, %p76
    %p78 = scmp.ne.s32.totalorder %s66, %s67
    %p79 = scmp.eq.s32.totalorder %s15, 1
    %p80 = por %p78, %p79
    %p82 = scmp.ne.s32.totalorder %s67, %s81
    %p83 = scmp.eq.s32.totalorder %s15, 0
    %p84 = por %p82, %p83
    %s85 = ssub.s32 %s9, %s16
    %p86 = scmp.eq.s32.totalorder %s85, 0
    %s88 = sadd.s32 %s87, 1
    %s89 = scalar_select %p86, %s87, %s88
    %p92 = pneg %p86
    %p93 = scmp.eq.s32.totalorder %s9, 1
    %p94 = por %p92, %p93
    %p95 = scmp.ne.s32.totalorder %s87, %s90
    %p96 = scmp.eq.s32.totalorder %s9, 0
    %p97 = por %p95, %p96
    %p98 = scmp.ne.s32.totalorder %s87, %s90
    %p99 = scmp.eq.s32.totalorder %s14, 1
    %p100 = por %p98, %p99
    %p101 = scmp.ne.s32.totalorder %s90, %s91
    %p102 = scmp.eq.s32.totalorder %s14, 0
    %p103 = por %p101, %p102
    %p104 = scmp.ne.s32.totalorder %s90, %s91
    %p105 = scmp.eq.s32.totalorder %s15, 1
    %p106 = por %p104, %p105
    %p108 = scmp.ne.s32.totalorder %s91, %s107
    %p109 = scmp.eq.s32.totalorder %s15, 0
    %p110 = por %p108, %p109
    %p111 = scmp.le.s32.totalorder 1, %s9
    %p112 = scmp.lt.s32.totalorder %s9, 3
    %p113 = pnand %p111, %p112
    %p114 = pneg %p113
    // Predicated region
    $region9: #{transformer_forward.8} parent=5 // pred_check
      _
    $region10: #{transformer_forward.8} parent=5 // pred_check_branch
      %116 = sbr.rel (%p113) target = $region12
    $region11: #{transformer_forward.8} parent=5 // pred_region
      %s117 = ssub.s32 %s9, 1
      // Predicated region
      $region13: #{transformer_forward.8} parent=11 // pred_check
        %p118 = pneg %p56
      $region14: #{transformer_forward.8} parent=11 // pred_check_branch
        %120 = sbr.rel (%p118) target = $region16
      $region15: #{transformer_forward.8} parent=11 // pred_region
        _
      $region16: #{transformer_forward.8} parent=11 // pred_fallthru
        _
      // Predicated region
      $region17: #{transformer_forward.8} parent=11 // pred_check
        %p121 = pneg %p77
      $region18: #{transformer_forward.8} parent=11 // pred_check_branch
        %123 = sbr.rel (%p121) target = $region20
      $region19: #{transformer_forward.8} parent=11 // pred_region
        _
      $region20: #{transformer_forward.8} parent=11 // pred_fallthru
        _
    $region12: #{transformer_forward.8} parent=5 // pred_fallthru
      _
    %p124 = scmp.lt.s32.totalorder %s9, 2
    // Predicated region
    $region21: #{transformer_forward.8} parent=5 // pred_check
      %p125 = pneg %p124
    $region22: #{transformer_forward.8} parent=5 // pred_check_branch
      %127 = sbr.rel (%p125) target = $region24
    $region23: #{transformer_forward.8} parent=5 // pred_region
      // Predicated region
      $region25: #{transformer_forward.8} parent=23 // pred_check
        %p128 = pneg %p29
      $region26: #{transformer_forward.8} parent=23 // pred_check_branch
        %130 = sbr.rel (%p128) target = $region28
      $region27: #{transformer_forward.8} parent=23 // pred_region
        %s131 = smul.u32 2, %s9
        %p132 = scmp.lt.s32.totalorder %s131, 3
        %s133 = scalar_select %p132, %s131, 3
        %s134 = smul.addr %s133, 8
        %s135 = scalar_lea.vmem %s0, %s134
        %s136 = smul.u32 2, %s9
      $region28: #{transformer_forward.8} parent=23 // pred_fallthru
        _
    $region24: #{transformer_forward.8} parent=5 // pred_fallthru
      _
    %p137 = scmp.le.s32.totalorder 1, %s9
    %p138 = scmp.lt.s32.totalorder %s9, 3
    %p139 = pnand %p137, %p138
    %p140 = pneg %p139
    // Predicated region
    $region29: #{transformer_forward.8} parent=5 // pred_check
      _
    $region30: #{transformer_forward.8} parent=5 // pred_check_branch
      %142 = sbr.rel (%p139) target = $region32
    $region31: #{transformer_forward.8} parent=5 // pred_region
      %s143 = ssub.s32 %s9, 1
      %s144 = smul.u32 2, %s14
      %p145 = scmp.lt.s32.totalorder %s144, 3
      %s146 = scalar_select %p145, %s144, 3
      %s147 = smul.addr %s146, 8
      %s148 = scalar_lea.vmem %s0, %s147
      %p149 = pneg %p35
      %p150 = pneg %p32
      %p151 = pneg %p56
      %p152 = pneg %p53
      %p153 = pneg %p77
      %p154 = pneg %p74
      %p155 = pneg %p103
      %p156 = pneg %p100
      %s157 = smul.u32 2, %s14
      %p158 = scmp.lt.s32.totalorder %s157, 3
      %s159 = scalar_select %p158, %s157, 3
      %s160 = smul.addr %s159, 8
      %s161 = scalar_lea.vmem %s3, %s160
      %s162 = smul.u32 2, %s14
      %p163 = scmp.lt.s32.totalorder %s162, 3
      %s164 = scalar_select %p163, %s162, 3
      %s165 = smul.addr %s164, 8
      %s166 = scalar_lea.vmem %s0, %s165
      %s167 = smul.u32 2, %s14
      %s168 = smul.u32 2, %s14
      %p169 = scmp.lt.s32.totalorder %s168, 3
      %s170 = scalar_select %p169, %s168, 3
      %s171 = smul.addr %s170, 8
      %s172 = scalar_lea.vmem %s3, %s171
      %s173 = smul.u32 2, %s14
      %v175 = vld [vmem:[%s166] sm:$0xff]
      %v176 = vld [vmem:[%s166 + $0x8] sm:$0xff]
      %v177 = vmul.f32 %v175, %v175
      %v178 = vmul.f32 %v176, %v176
      %179 = vadd.xlane.f32.xlu0 %v177
      %v180 = vpop.xlane.xlu0 %179
      %181 = vadd.xlane.f32.xlu0 %v178
      %v182 = vpop.xlane.xlu0 %181
      %v183 = vrcp.pop 128.0
      %v184 = vmul.f32 %v180, %v183
      %v185 = vmul.f32 %v182, %v183
      %v186 = vadd.f32 %v184, 1e-06
      %v187 = vadd.f32 %v185, 1e-06
      %v188 = vrsqrt.pop %v186
      %v189 = vrsqrt.pop %v187
      %v190 = vmul.f32 %v175, %v188
      %v191 = vmul.f32 %v176, %v189
      %v192 = vpack.c.bf16 %v191, %v190
      %v193 = vld [vmem:[%s1] sm:$0xff]
      %v194 = vld [vmem:[%s1 + $0x8] sm:$0xff]
      %v195 = vld [vmem:[%s1 + $0x10] sm:$0xff]
      %v196 = vld [vmem:[%s1 + $0x18] sm:$0xff]
      %v197 = vld [vmem:[%s1 + $0x20] sm:$0xff]
      %v198 = vld [vmem:[%s1 + $0x28] sm:$0xff]
      %v199 = vld [vmem:[%s1 + $0x30] sm:$0xff]
      %v200 = vld [vmem:[%s1 + $0x38] sm:$0xff]
      %v201 = vld [vmem:[%s1 + $0x40] sm:$0xff]
      %v202 = vld [vmem:[%s1 + $0x48] sm:$0xff]
      %v203 = vld [vmem:[%s1 + $0x50] sm:$0xff]
      %v204 = vld [vmem:[%s1 + $0x58] sm:$0xff]
      %v205 = vld [vmem:[%s1 + $0x60] sm:$0xff]
      %v206 = vld [vmem:[%s1 + $0x68] sm:$0xff]
      %v207 = vld [vmem:[%s1 + $0x70] sm:$0xff]
      %v208 = vld [vmem:[%s1 + $0x78] sm:$0xff]
      %v209 = vld [vmem:[%s1 + $0x80] sm:$0xff]
      %v210 = vld [vmem:[%s1 + $0x88] sm:$0xff]
      %v211 = vld [vmem:[%s1 + $0x90] sm:$0xff]
      %v212 = vld [vmem:[%s1 + $0x98] sm:$0xff]
      %v213 = vld [vmem:[%s1 + $0xa0] sm:$0xff]
      %v214 = vld [vmem:[%s1 + $0xa8] sm:$0xff]
      %v215 = vld [vmem:[%s1 + $0xb0] sm:$0xff]
      %v216 = vld [vmem:[%s1 + $0xb8] sm:$0xff]
      %v217 = vld [vmem:[%s1 + $0xc0] sm:$0xff]
      %v218 = vld [vmem:[%s1 + $0xc8] sm:$0xff]
      %v219 = vld [vmem:[%s1 + $0xd0] sm:$0xff]
      %v220 = vld [vmem:[%s1 + $0xd8] sm:$0xff]
      %v221 = vld [vmem:[%s1 + $0xe0] sm:$0xff]
      %v222 = vld [vmem:[%s1 + $0xe8] sm:$0xff]
      %v223 = vld [vmem:[%s1 + $0xf0] sm:$0xff]
      %v224 = vld [vmem:[%s1 + $0xf8] sm:$0xff]
      %v257 = vunpack.c.l.b16 %v193
      %v258 = vunpack.c.h.b16 %v193
      %v259 = vunpack.c.l.b16 %v194
      %v260 = vunpack.c.h.b16 %v194
      %v261 = vunpack.c.l.b16 %v195
      %v262 = vunpack.c.h.b16 %v195
      %v263 = vunpack.c.l.b16 %v196
      %v264 = vunpack.c.h.b16 %v196
      %v265 = vunpack.c.l.b16 %v197
      %v266 = vunpack.c.h.b16 %v197
      %v267 = vunpack.c.l.b16 %v198
      %v268 = vunpack.c.h.b16 %v198
      %v269 = vunpack.c.l.b16 %v199
      %v270 = vunpack.c.h.b16 %v199
      %v271 = vunpack.c.l.b16 %v200
      %v272 = vunpack.c.h.b16 %v200
      %v273 = vunpack.c.l.b16 %v201
      %v274 = vunpack.c.h.b16 %v201
      %v275 = vunpack.c.l.b16 %v202
      %v276 = vunpack.c.h.b16 %v202
      %v277 = vunpack.c.l.b16 %v203
      %v278 = vunpack.c.h.b16 %v203
      %v279 = vunpack.c.l.b16 %v204
      %v280 = vunpack.c.h.b16 %v204
      %v281 = vunpack.c.l.b16 %v205
      %v282 = vunpack.c.h.b16 %v205
      %v283 = vunpack.c.l.b16 %v206
      %v284 = vunpack.c.h.b16 %v206
      %v285 = vunpack.c.l.b16 %v207
      %v286 = vunpack.c.h.b16 %v207
      %v287 = vunpack.c.l.b16 %v208
      %v288 = vunpack.c.h.b16 %v208
      %v289 = vunpack.c.l.b16 %v209
      %v290 = vunpack.c.h.b16 %v209
      %v291 = vunpack.c.l.b16 %v210
      %v292 = vunpack.c.h.b16 %v210
      %v293 = vunpack.c.l.b16 %v211
      %v294 = vunpack.c.h.b16 %v211
      %v295 = vunpack.c.l.b16 %v212
      %v296 = vunpack.c.h.b16 %v212
      %v297 = vunpack.c.l.b16 %v213
      %v298 = vunpack.c.h.b16 %v213
      %v299 = vunpack.c.l.b16 %v214
      %v300 = vunpack.c.h.b16 %v214
      %v301 = vunpack.c.l.b16 %v215
      %v302 = vunpack.c.h.b16 %v215
      %v303 = vunpack.c.l.b16 %v216
      %v304 = vunpack.c.h.b16 %v216
      %v305 = vunpack.c.l.b16 %v217
      %v306 = vunpack.c.h.b16 %v217
      %v307 = vunpack.c.l.b16 %v218
      %v308 = vunpack.c.h.b16 %v218
      %v309 = vunpack.c.l.b16 %v219
      %v310 = vunpack.c.h.b16 %v219
      %v311 = vunpack.c.l.b16 %v220
      %v312 = vunpack.c.h.b16 %v220
      %v313 = vunpack.c.l.b16 %v221
      %v314 = vunpack.c.h.b16 %v221
      %v315 = vunpack.c.l.b16 %v222
      %v316 = vunpack.c.h.b16 %v222
      %v317 = vunpack.c.l.b16 %v223
      %v318 = vunpack.c.h.b16 %v223
      %v319 = vunpack.c.l.b16 %v224
      %v320 = vunpack.c.h.b16 %v224
      %v321 = vpack.c.b16 %v261, %v257
      %v322 = vpack.c.b16 %v262, %v258
      %v323 = vpack.c.b16 %v263, %v259
      %v324 = vpack.c.b16 %v264, %v260
      %v325 = vpack.c.b16 %v269, %v265
      %v326 = vpack.c.b16 %v270, %v266
      %v327 = vpack.c.b16 %v271, %v267
      %v328 = vpack.c.b16 %v272, %v268
      %v329 = vpack.c.b16 %v277, %v273
      %v330 = vpack.c.b16 %v278, %v274
      %v331 = vpack.c.b16 %v279, %v275
      %v332 = vpack.c.b16 %v280, %v276
      %v333 = vpack.c.b16 %v285, %v281
      %v334 = vpack.c.b16 %v286, %v282
      %v335 = vpack.c.b16 %v287, %v283
      %v336 = vpack.c.b16 %v288, %v284
      %v337 = vpack.c.b16 %v293, %v289
      %v338 = vpack.c.b16 %v294, %v290
      %v339 = vpack.c.b16 %v295, %v291
      %v340 = vpack.c.b16 %v296, %v292
      %v341 = vpack.c.b16 %v301, %v297
      %v342 = vpack.c.b16 %v302, %v298
      %v343 = vpack.c.b16 %v303, %v299
      %v344 = vpack.c.b16 %v304, %v300
      %v345 = vpack.c.b16 %v309, %v305
      %v346 = vpack.c.b16 %v310, %v306
      %v347 = vpack.c.b16 %v311, %v307
      %v348 = vpack.c.b16 %v312, %v308
      %v349 = vpack.c.b16 %v317, %v313
      %v350 = vpack.c.b16 %v318, %v314
      %v351 = vpack.c.b16 %v319, %v315
      %v352 = vpack.c.b16 %v320, %v316
      %385 = vmatprep.subr.bf16.mxu0 %v350
      %386 = vmatpush1.bf16.msra.mxu0 %v349
      %387 = vmatprep.subr.bf16.mxu0 %v346
      %388 = vmatpush1.bf16.msra.mxu0 %v345
      %389 = vmatprep.subr.bf16.mxu0 %v342
      %390 = vmatpush1.bf16.msra.mxu0 %v341
      %391 = vmatprep.subr.bf16.mxu0 %v338
      %392 = vmatpush1.bf16.msra.mxu0 %v337
      %393 = vmatprep.subr.bf16.mxu0 %v334
      %394 = vmatpush1.bf16.msra.mxu0 %v333
      %395 = vmatprep.subr.bf16.mxu0 %v330
      %396 = vmatpush1.bf16.msra.mxu0 %v329
      %397 = vmatprep.subr.bf16.mxu0 %v326
      %398 = vmatpush1.bf16.msra.mxu0 %v325
      %399 = vmatprep.subr.bf16.mxu0 %v322
      %400 = vmatpush1.bf16.msra.mxu0 %v321
      %401 = vmatprep.subr.bf16.mxu0 0
      %402 = vmatpush2.bf16.msra.mxu0 0
      %403 = vmatprep.subr.bf16.mxu0 0
      %404 = vmatpush2.bf16.msra.mxu0 0
      %405 = vmatprep.subr.bf16.mxu0 0
      %406 = vmatpush2.bf16.msra.mxu0 0
      %407 = vmatprep.subr.bf16.mxu0 0
      %408 = vmatpush2.bf16.msra.mxu0 0
      %409 = vmatprep.subr.bf16.mxu0 0
      %410 = vmatpush2.bf16.msra.mxu0 0
      %411 = vmatprep.subr.bf16.mxu0 0
      %412 = vmatpush2.bf16.msra.mxu0 0
      %413 = vmatprep.subr.bf16.mxu0 0
      %414 = vmatpush2.bf16.msra.mxu0 0
      %415 = vmatprep.subr.bf16.mxu0 0
      %416 = vmatpush2.bf16.msra.mxu0 0
      %417 = vmatprep.mubr.bf16.mxu0 0
      %418 = vmatmul.mubr.bf16.gmra.mxu0 %v192
      %v419 = vpop.f32.mrf.mxu0
      %v420 = vadd.f32 0.0, %v419
      %v421 = vpop.f32.mrf.mxu0
      %v422 = vadd.f32 0.0, %v421
      %v423 = vpop.f32.mrf.mxu0
      %v424 = vadd.f32 0.0, %v423
      %v425 = vpop.f32.mrf.mxu0
      %v426 = vadd.f32 0.0, %v425
      %427 = vdwg.mxu0
      %428 = vmatprep.subr.bf16.mxu0 %v352
      %429 = vmatpush1.bf16.msra.mxu0 %v351
      %430 = vmatprep.subr.bf16.mxu0 %v348
      %431 = vmatpush1.bf16.msra.mxu0 %v347
      %432 = vmatprep.subr.bf16.mxu0 %v344
      %433 = vmatpush1.bf16.msra.mxu0 %v343
      %434 = vmatprep.subr.bf16.mxu0 %v340
      %435 = vmatpush1.bf16.msra.mxu0 %v339
      %436 = vmatprep.subr.bf16.mxu0 %v336
      %437 = vmatpush1.bf16.msra.mxu0 %v335
      %438 = vmatprep.subr.bf16.mxu0 %v332
      %439 = vmatpush1.bf16.msra.mxu0 %v331
      %440 = vmatprep.subr.bf16.mxu0 %v328
      %441 = vmatpush1.bf16.msra.mxu0 %v327
      %442 = vmatprep.subr.bf16.mxu0 %v324
      %443 = vmatpush1.bf16.msra.mxu0 %v323
      %444 = vmatprep.subr.bf16.mxu0 0
      %445 = vmatpush2.bf16.msra.mxu0 0
      %446 = vmatprep.subr.bf16.mxu0 0
      %447 = vmatpush2.bf16.msra.mxu0 0
      %448 = vmatprep.subr.bf16.mxu0 0
      %449 = vmatpush2.bf16.msra.mxu0 0
      %450 = vmatprep.subr.bf16.mxu0 0
      %451 = vmatpush2.bf16.msra.mxu0 0
      %452 = vmatprep.subr.bf16.mxu0 0
      %453 = vmatpush2.bf16.msra.mxu0 0
      %454 = vmatprep.subr.bf16.mxu0 0
      %455 = vmatpush2.bf16.msra.mxu0 0
      %456 = vmatprep.subr.bf16.mxu0 0
      %457 = vmatpush2.bf16.msra.mxu0 0
      %458 = vmatprep.subr.bf16.mxu0 0
      %459 = vmatpush2.bf16.msra.mxu0 0
      %460 = vmatprep.mubr.bf16.mxu0 0
      %461 = vmatmul.mubr.bf16.gmra.mxu0 %v192
      %v462 = vpop.f32.mrf.mxu0
      %v463 = vadd.f32 0.0, %v462
      %v464 = vpop.f32.mrf.mxu0
      %v465 = vadd.f32 0.0, %v464
      %v466 = vpop.f32.mrf.mxu0
      %v467 = vadd.f32 0.0, %v466
      %v468 = vpop.f32.mrf.mxu0
      %v469 = vadd.f32 0.0, %v468
      %470 = vdwg.mxu0
      %v471 = vmul.f32 %v420, %v463
      %v472 = vmul.f32 %v422, %v465
      %v473 = vmul.f32 %v424, %v467
      %v474 = vmul.f32 %v426, %v469
      %v475 = vpack.c.bf16 %v473, %v471
      %v476 = vpack.c.bf16 %v474, %v472
      %v477 = vld [vmem:[%s2] sm:$0xf]
      %v478 = vld [vmem:[%s2 + $0x4] sm:$0xf]
      %v479 = vld [vmem:[%s2 + $0x8] sm:$0xf]
      %v480 = vld [vmem:[%s2 + $0xc] sm:$0xf]
      %v481 = vld [vmem:[%s2 + $0x10] sm:$0xf]
      %v482 = vld [vmem:[%s2 + $0x14] sm:$0xf]
      %v483 = vld [vmem:[%s2 + $0x18] sm:$0xf]
      %v484 = vld [vmem:[%s2 + $0x1c] sm:$0xf]
      %v485 = vld [vmem:[%s2 + $0x20] sm:$0xf]
      %v486 = vld [vmem:[%s2 + $0x24] sm:$0xf]
      %v487 = vld [vmem:[%s2 + $0x28] sm:$0xf]
      %v488 = vld [vmem:[%s2 + $0x2c] sm:$0xf]
      %v489 = vld [vmem:[%s2 + $0x30] sm:$0xf]
      %v490 = vld [vmem:[%s2 + $0x34] sm:$0xf]
      %v491 = vld [vmem:[%s2 + $0x38] sm:$0xf]
      %v492 = vld [vmem:[%s2 + $0x3c] sm:$0xf]
      %v493 = vld [vmem:[%s2 + $0x40] sm:$0xf]
      %v494 = vld [vmem:[%s2 + $0x44] sm:$0xf]
      %v495 = vld [vmem:[%s2 + $0x48] sm:$0xf]
      %v496 = vld [vmem:[%s2 + $0x4c] sm:$0xf]
      %v497 = vld [vmem:[%s2 + $0x50] sm:$0xf]
      %v498 = vld [vmem:[%s2 + $0x54] sm:$0xf]
      %v499 = vld [vmem:[%s2 + $0x58] sm:$0xf]
      %v500 = vld [vmem:[%s2 + $0x5c] sm:$0xf]
      %v501 = vld [vmem:[%s2 + $0x60] sm:$0xf]
      %v502 = vld [vmem:[%s2 + $0x64] sm:$0xf]
      %v503 = vld [vmem:[%s2 + $0x68] sm:$0xf]
      %v504 = vld [vmem:[%s2 + $0x6c] sm:$0xf]
      %v505 = vld [vmem:[%s2 + $0x70] sm:$0xf]
      %v506 = vld [vmem:[%s2 + $0x74] sm:$0xf]
      %v507 = vld [vmem:[%s2 + $0x78] sm:$0xf]
      %v508 = vld [vmem:[%s2 + $0x7c] sm:$0xf]
      %v541 = vunpack.c.l.b16 %v477
      %v542 = vunpack.c.l.b16 %v478
      %v543 = vunpack.c.l.b16 %v479
      %v544 = vunpack.c.l.b16 %v480
      %v545 = vunpack.c.l.b16 %v481
      %v546 = vunpack.c.l.b16 %v482
      %v547 = vunpack.c.l.b16 %v483
      %v548 = vunpack.c.l.b16 %v484
      %v549 = vunpack.c.l.b16 %v485
      %v550 = vunpack.c.l.b16 %v486
      %v551 = vunpack.c.l.b16 %v487
      %v552 = vunpack.c.l.b16 %v488
      %v553 = vunpack.c.l.b16 %v489
      %v554 = vunpack.c.l.b16 %v490
      %v555 = vunpack.c.l.b16 %v491
      %v556 = vunpack.c.l.b16 %v492
      %v557 = vunpack.c.l.b16 %v493
      %v558 = vunpack.c.l.b16 %v494
      %v559 = vunpack.c.l.b16 %v495
      %v560 = vunpack.c.l.b16 %v496
      %v561 = vunpack.c.l.b16 %v497
      %v562 = vunpack.c.l.b16 %v498
      %v563 = vunpack.c.l.b16 %v499
      %v564 = vunpack.c.l.b16 %v500
      %v565 = vunpack.c.l.b16 %v501
      %v566 = vunpack.c.l.b16 %v502
      %v567 = vunpack.c.l.b16 %v503
      %v568 = vunpack.c.l.b16 %v504
      %v569 = vunpack.c.l.b16 %v505
      %v570 = vunpack.c.l.b16 %v506
      %v571 = vunpack.c.l.b16 %v507
      %v572 = vunpack.c.l.b16 %v508
      %v573 = vpack.c.b16 %v542, %v541
      %v574 = vpack.c.b16 %v544, %v543
      %v575 = vpack.c.b16 %v546, %v545
      %v576 = vpack.c.b16 %v548, %v547
      %v577 = vpack.c.b16 %v550, %v549
      %v578 = vpack.c.b16 %v552, %v551
      %v579 = vpack.c.b16 %v554, %v553
      %v580 = vpack.c.b16 %v556, %v555
      %v581 = vpack.c.b16 %v558, %v557
      %v582 = vpack.c.b16 %v560, %v559
      %v583 = vpack.c.b16 %v562, %v561
      %v584 = vpack.c.b16 %v564, %v563
      %v585 = vpack.c.b16 %v566, %v565
      %v586 = vpack.c.b16 %v568, %v567
      %v587 = vpack.c.b16 %v570, %v569
      %v588 = vpack.c.b16 %v572, %v571
      %605 = vmatprep.subr.bf16.mxu0 0
      %606 = vmatpush1.bf16.msra.mxu0 %v580
      %607 = vmatprep.subr.bf16.mxu0 0
      %608 = vmatpush1.bf16.msra.mxu0 %v579
      %609 = vmatprep.subr.bf16.mxu0 0
      %610 = vmatpush1.bf16.msra.mxu0 %v578
      %611 = vmatprep.subr.bf16.mxu0 0
      %612 = vmatpush1.bf16.msra.mxu0 %v577
      %613 = vmatprep.subr.bf16.mxu0 0
      %614 = vmatpush1.bf16.msra.mxu0 %v576
      %615 = vmatprep.subr.bf16.mxu0 0
      %616 = vmatpush1.bf16.msra.mxu0 %v575
      %617 = vmatprep.subr.bf16.mxu0 0
      %618 = vmatpush1.bf16.msra.mxu0 %v574
      %619 = vmatprep.subr.bf16.mxu0 0
      %620 = vmatpush1.bf16.msra.mxu0 %v573
      %621 = vmatprep.subr.bf16.mxu0 0
      %622 = vmatpush2.bf16.msra.mxu0 %v588
      %623 = vmatprep.subr.bf16.mxu0 0
      %624 = vmatpush2.bf16.msra.mxu0 %v587
      %625 = vmatprep.subr.bf16.mxu0 0
      %626 = vmatpush2.bf16.msra.mxu0 %v586
      %627 = vmatprep.subr.bf16.mxu0 0
      %628 = vmatpush2.bf16.msra.mxu0 %v585
      %629 = vmatprep.subr.bf16.mxu0 0
      %630 = vmatpush2.bf16.msra.mxu0 %v584
      %631 = vmatprep.subr.bf16.mxu0 0
      %632 = vmatpush2.bf16.msra.mxu0 %v583
      %633 = vmatprep.subr.bf16.mxu0 0
      %634 = vmatpush2.bf16.msra.mxu0 %v582
      %635 = vmatprep.subr.bf16.mxu0 0
      %636 = vmatpush2.bf16.msra.mxu0 %v581
      %637 = vmatprep.mubr.bf16.mxu0 %v476
      %638 = vmatmul.mubr.bf16.gmra.mxu0 %v475
      %v639 = vpop.f32.mrf.mxu0
      %v640 = vadd.f32 %v190, %v639
      %v641 = vpop.f32.mrf.mxu0
      %v642 = vpop.f32.mrf.mxu0
      %v643 = vadd.f32 %v191, %v642
      %v644 = vpop.f32.mrf.mxu0
      %645 = vdwg.mxu0
      %646 = vst [vmem:[%s172] sm:$0xff] %v640
      %647 = vst [vmem:[%s172 + $0x8] sm:$0xff] %v643
      %s648 = smul.u32 2, %s14
      %p649 = scmp.lt.s32.totalorder %s648, 3
      %s650 = scalar_select %p649, %s648, 3
      %s651 = smul.addr %s650, 8
      %s652 = scalar_lea.vmem %s3, %s651
      // Predicated region
      $region33: #{transformer_forward.8} parent=31 // pred_check
        %p653 = pneg %p100
      $region34: #{transformer_forward.8} parent=31 // pred_check_branch
        %655 = sbr.rel (%p653) target = $region36
      $region35: #{transformer_forward.8} parent=31 // pred_region
        %s656 = smul.u32 2, %s14
      $region36: #{transformer_forward.8} parent=31 // pred_fallthru
        _
    $region32: #{transformer_forward.8} parent=5 // pred_fallthru
      _
    %p657 = scmp.le.s32.totalorder 2, %s9
    // Predicated region
    $region37: #{transformer_forward.8} parent=5 // pred_check
      %p658 = pneg %p657
    $region38: #{transformer_forward.8} parent=5 // pred_check_branch
      %660 = sbr.rel (%p658) target = $region40
    $region39: #{transformer_forward.8} parent=5 // pred_region
      %s661 = ssub.s32 %s9, 2
      // Predicated region
      $region41: #{transformer_forward.8} parent=39 // pred_check
        %p662 = pneg %p106
      $region42: #{transformer_forward.8} parent=39 // pred_check_branch
        %664 = sbr.rel (%p662) target = $region44
      $region43: #{transformer_forward.8} parent=39 // pred_region
        %s665 = smul.u32 2, %s15
        %p666 = scmp.lt.s32.totalorder %s665, 3
        %s667 = scalar_select %p666, %s665, 3
        %s668 = smul.addr %s667, 8
        %s669 = scalar_lea.vmem %s3, %s668
      $region44: #{transformer_forward.8} parent=39 // pred_fallthru
        _
    $region40: #{transformer_forward.8} parent=5 // pred_fallthru
      _
  $region6: #{transformer_forward.8} parent=0 // loop_footer
    %s13 = sadd.s32 1, %s9
  $region7: #{transformer_forward.8} parent=0 // loop_footer_branch
    %8 = sbr.rel target = $region3
  $region8: #{transformer_forward.8} parent=0 // loop_exit
    _

// kernel: transformer_forward.6
$region0: #{transformer_forward.6}
  #allocation0 [shape = 'u32[]', space=smem, size = 0x4, offset = 0x4, fixed_abs, tag = 'smem constant byte address 0x4 - core index']
  #allocation1 [shape = 'u32[144,128]{1,0:T(1,128)}', space=vmem, size = 0x12000, scoped, tag = 'internal scratch']
  #allocation2 [shape = 'f32[16,128]{1,0:T(8,128)}', space=vmem, size = 0x2000, scoped, tag = 'scratch operand']
  #allocation3 [shape = 'f32[1]{0:T(128)S(6)}', space=smem, size = 0x200, scoped, tag = 'scoped memory for transformer_forward.6']
  %s0 = inlined_call_operand.hbm [shape: f32[2,16,128], index: 0, kind: input, shape index: {}]
  %s1 = inlined_call_operand.hbm [shape: bf16[128,384], index: 1, kind: input, shape index: {}]
  %s2 = inlined_call_operand.hbm [shape: bf16[128,128], index: 2, kind: input, shape index: {}]
  %s3 = inlined_call_operand.vmem [shape: bf16[1,128], index: 3, kind: input, shape index: {}]
  %s4 = inlined_call_operand.<no memory space> [shape: f32[1], index: 4, kind: input, shape index: {}]
  %s5 = inlined_call_operand.vmem [shape: f32[2,16,128], index: 5, kind: output, shape index: {}]
  %s6 = sld [smem:[#allocation0]]
  $region65: #{transformer_forward.6} parent=0
    _
  %s8 = ssub.s32 1, %s6
  %s9 = scalar_select 0, %s8, %s6
  %10 = sst [smem:[#allocation3]] %s4
  $region1: #{transformer_forward.6} parent=0
    #allocation4 [shape = 'u8[16384]{0}', space=vmem, size = 0x4000, scoped, tag = 'input window, operand 0']
    #allocation5 [shape = 's32[2]{0}', space=sflag, size = 0x8, scoped, tag = 'scoped memory for transformer_forward.6']
    #allocation6 [shape = 'u8[98304]{0}', space=vmem, size = 0x18000, scoped, tag = 'input window, operand 1, single buffered']
    #allocation7 [shape = 's32[1]{0}', space=sflag, size = 0x4, scoped, tag = 'scoped memory for transformer_forward.6']
    #allocation8 [shape = 'u8[32768]{0}', space=vmem, size = 0x8000, scoped, tag = 'input window, operand 2, single buffered']
    %11 = vsyncpa [#allocation5], 0
    %s12 = scalar_lea.sflag [#allocation5], 1
    %13 = vsyncpa %s12, 0
    %14 = vsyncpa [#allocation7], 0
    loop: start=0, step=1, limit=4
    $region2: #{transformer_forward.6} parent=1 // loop_pre_header
      _
    $region3: #{transformer_forward.6} parent=1 // loop_header
      %s16 = sphi 0, %s20
      %p17 = scmp.ge.s32.totalorder %s16, 4
      %s23 = sphi 0, %s35
      %s24 = sphi 0, %s31
      %s25 = sphi 0, %s23
      %s26 = sphi 0, %s24
      %s27 = sphi 0, %s25
      %s28 = sphi 0, %s26
      %s38 = sphi 0, %s40
      %s41 = sphi 0, %s38
      %s42 = sphi 0, %s41
      %s58 = sphi 0, %s42
      %s62 = sphi 0, %s62
      %s64 = sphi 0, %s62
      %s65 = sphi 0, %s64
      %s79 = sphi 0, %s65
      %s83 = sphi 0, %s83
      %s85 = sphi 0, %s83
      %s86 = sphi 0, %s85
      %s100 = sphi 0, %s86
      %s104 = sphi 0, %s104
      %s106 = sphi 0, %s104
      %s107 = sphi 0, %s106
      %s121 = sphi 0, %s107
      %s125 = sphi 0, %s125
      %s127 = sphi 0, %s125
      %s128 = sphi 0, %s127
      %s142 = sphi 0, %s128
      %s150 = sphi 0, %s152
      %s153 = sphi 0, %s150
      %s154 = sphi 0, %s153
      %s170 = sphi 0, %s154
    $region4: #{transformer_forward.6} parent=1 // loop_header_branch
      %19 = sbr.rel (%p17) target = $region8
    $region5: #{transformer_forward.6} parent=1 // loop_body
      %s21 = ssub.s32 %s16, 1
      %s22 = ssub.s32 %s16, 2
      %s29 = sadd.s32 1, %s24
      %p30 = scmp.ge.s32.totalorder %s29, 1
      %s31 = scalar_select %p30, 0, %s29
      %s32 = sadd.s32 1, %s23
      %s33 = scalar_select %p30, %s32, %s23
      %p34 = scmp.ge.s32.totalorder %s33, 2
      %s35 = scalar_select %p34, 0, %s33
      %s36 = ssub.s32 %s23, %s35
      %p37 = scmp.eq.s32.totalorder %s36, 0
      %s39 = sadd.s32 %s38, 1
      %s40 = scalar_select %p37, %s38, %s39
      %p43 = pneg %p37
      %p44 = scmp.eq.s32.totalorder %s16, 1
      %p45 = por %p43, %p44
      %p46 = scmp.ne.s32.totalorder %s38, %s41
      %p47 = scmp.eq.s32.totalorder %s16, 0
      %p48 = por %p46, %p47
      %p49 = scmp.ne.s32.totalorder %s38, %s41
      %p50 = scmp.eq.s32.totalorder %s21, 1
      %p51 = por %p49, %p50
      %p52 = scmp.ne.s32.totalorder %s41, %s42
      %p53 = scmp.eq.s32.totalorder %s21, 0
      %p54 = por %p52, %p53
      %p55 = scmp.ne.s32.totalorder %s41, %s42
      %p56 = scmp.eq.s32.totalorder %s22, 1
      %p57 = por %p55, %p56
      %p59 = scmp.ne.s32.totalorder %s42, %s58
      %p60 = scmp.eq.s32.totalorder %s22, 0
      %p61 = por %p59, %p60
      %s63 = sadd.s32 %s62, 1
      %p66 = scmp.eq.s32.totalorder %s16, 1
      %p67 = scmp.ne.s32.totalorder %s62, %s64
      %p68 = scmp.eq.s32.totalorder %s16, 0
      %p69 = por %p67, %p68
      %p70 = scmp.ne.s32.totalorder %s62, %s64
      %p71 = scmp.eq.s32.totalorder %s21, 1
      %p72 = por %p70, %p71
      %p73 = scmp.ne.s32.totalorder %s64, %s65
      %p74 = scmp.eq.s32.totalorder %s21, 0
      %p75 = por %p73, %p74
      %p76 = scmp.ne.s32.totalorder %s64, %s65
      %p77 = scmp.eq.s32.totalorder %s22, 1
      %p78 = por %p76, %p77
      %p80 = scmp.ne.s32.totalorder %s65, %s79
      %p81 = scmp.eq.s32.totalorder %s22, 0
      %p82 = por %p80, %p81
      %s84 = sadd.s32 %s83, 1
      %p87 = scmp.eq.s32.totalorder %s16, 1
      %p88 = scmp.ne.s32.totalorder %s83, %s85
      %p89 = scmp.eq.s32.totalorder %s16, 0
      %p90 = por %p88, %p89
      %p91 = scmp.ne.s32.totalorder %s83, %s85
      %p92 = scmp.eq.s32.totalorder %s21, 1
      %p93 = por %p91, %p92
      %p94 = scmp.ne.s32.totalorder %s85, %s86
      %p95 = scmp.eq.s32.totalorder %s21, 0
      %p96 = por %p94, %p95
      %p97 = scmp.ne.s32.totalorder %s85, %s86
      %p98 = scmp.eq.s32.totalorder %s22, 1
      %p99 = por %p97, %p98
      %p101 = scmp.ne.s32.totalorder %s86, %s100
      %p102 = scmp.eq.s32.totalorder %s22, 0
      %p103 = por %p101, %p102
      %s105 = sadd.s32 %s104, 1
      %p108 = scmp.eq.s32.totalorder %s16, 1
      %p109 = scmp.ne.s32.totalorder %s104, %s106
      %p110 = scmp.eq.s32.totalorder %s16, 0
      %p111 = por %p109, %p110
      %p112 = scmp.ne.s32.totalorder %s104, %s106
      %p113 = scmp.eq.s32.totalorder %s21, 1
      %p114 = por %p112, %p113
      %p115 = scmp.ne.s32.totalorder %s106, %s107
      %p116 = scmp.eq.s32.totalorder %s21, 0
      %p117 = por %p115, %p116
      %p118 = scmp.ne.s32.totalorder %s106, %s107
      %p119 = scmp.eq.s32.totalorder %s22, 1
      %p120 = por %p118, %p119
      %p122 = scmp.ne.s32.totalorder %s107, %s121
      %p123 = scmp.eq.s32.totalorder %s22, 0
      %p124 = por %p122, %p123
      %s126 = sadd.s32 %s125, 1
      %p129 = scmp.eq.s32.totalorder %s16, 1
      %p130 = scmp.ne.s32.totalorder %s125, %s127
      %p131 = scmp.eq.s32.totalorder %s16, 0
      %p132 = por %p130, %p131
      %p133 = scmp.ne.s32.totalorder %s125, %s127
      %p134 = scmp.eq.s32.totalorder %s21, 1
      %p135 = por %p133, %p134
      %p136 = scmp.ne.s32.totalorder %s127, %s128
      %p137 = scmp.eq.s32.totalorder %s21, 0
      %p138 = por %p136, %p137
      %p139 = scmp.ne.s32.totalorder %s127, %s128
      %p140 = scmp.eq.s32.totalorder %s22, 1
      %p141 = por %p139, %p140
      %p143 = scmp.ne.s32.totalorder %s128, %s142
      %p144 = scmp.eq.s32.totalorder %s22, 0
      %p145 = por %p143, %p144
      %s146 = ssub.s32 %s23, %s35
      %s147 = ssub.s32 %s24, %s31
      %s148 = sor.u32 %s146, %s147
      %p149 = scmp.eq.s32.totalorder %s148, 0
      %s151 = sadd.s32 %s150, 1
      %s152 = scalar_select %p149, %s150, %s151
      %p155 = pneg %p149
      %p156 = scmp.eq.s32.totalorder %s16, 1
      %p157 = por %p155, %p156
      %p158 = scmp.ne.s32.totalorder %s150, %s153
      %p159 = scmp.eq.s32.totalorder %s16, 0
      %p160 = por %p158, %p159
      %p161 = scmp.ne.s32.totalorder %s150, %s153
      %p162 = scmp.eq.s32.totalorder %s21, 1
      %p163 = por %p161, %p162
      %p164 = scmp.ne.s32.totalorder %s153, %s154
      %p165 = scmp.eq.s32.totalorder %s21, 0
      %p166 = por %p164, %p165
      %p167 = scmp.ne.s32.totalorder %s153, %s154
      %p168 = scmp.eq.s32.totalorder %s22, 1
      %p169 = por %p167, %p168
      %p171 = scmp.ne.s32.totalorder %s154, %s170
      %p172 = scmp.eq.s32.totalorder %s22, 0
      %p173 = por %p171, %p172
      %p174 = scmp.le.s32.totalorder 1, %s16
      %p175 = scmp.lt.s32.totalorder %s16, 3
      %p176 = pnand %p174, %p175
      %p177 = pneg %p176
      // Predicated region
      $region9: #{transformer_forward.6} parent=5 // pred_check
        _
      $region10: #{transformer_forward.6} parent=5 // pred_check_branch
        %179 = sbr.rel (%p176) target = $region12
      $region11: #{transformer_forward.6} parent=5 // pred_region
        %s180 = ssub.s32 %s16, 1
        // Predicated region
        $region13: #{transformer_forward.6} parent=11 // pred_check
          %p181 = pneg %p75
        $region14: #{transformer_forward.6} parent=11 // pred_check_branch
          %183 = sbr.rel (%p181) target = $region16
        $region15: #{transformer_forward.6} parent=11 // pred_region
          %s185 = ssub.s32 3072, 3072
          %186 = vsyncadd [#allocation7], %s185
          %s187 = sshll.u32 [#allocation6], 4
          %s188 = int_to_ptr.vmem [resolvable:$true] %s187
          %193 = dma.hbm_to_vmem [thread:$0]  %s1, 3072, %s188, [#allocation7], 192, 192, 12
        $region16: #{transformer_forward.6} parent=11 // pred_fallthru
          _
        // Predicated region
        $region17: #{transformer_forward.6} parent=11 // pred_check
          %p194 = pneg %p96
        $region18: #{transformer_forward.6} parent=11 // pred_check_branch
          %196 = sbr.rel (%p194) target = $region20
        $region19: #{transformer_forward.6} parent=11 // pred_region
          %s198 = ssub.s32 1024, 1024
          %199 = vsyncadd [#allocation7], %s198
          %s200 = sshll.u32 [#allocation8], 4
          %s201 = int_to_ptr.vmem [resolvable:$true] %s200
          %206 = dma.hbm_to_vmem [thread:$0]  %s2, 1024, %s201, [#allocation7], 64, 64, 4
        $region20: #{transformer_forward.6} parent=11 // pred_fallthru
          _
        // Predicated region
        $region21: #{transformer_forward.6} parent=11 // pred_check
          %p207 = pneg %p117
        $region22: #{transformer_forward.6} parent=11 // pred_check_branch
          %209 = sbr.rel (%p207) target = $region24
        $region23: #{transformer_forward.6} parent=11 // pred_region
          _
        $region24: #{transformer_forward.6} parent=11 // pred_fallthru
          _
        // Predicated region
        $region25: #{transformer_forward.6} parent=11 // pred_check
          %p210 = pneg %p138
        $region26: #{transformer_forward.6} parent=11 // pred_check_branch
          %212 = sbr.rel (%p210) target = $region28
        $region27: #{transformer_forward.6} parent=11 // pred_region
          _
        $region28: #{transformer_forward.6} parent=11 // pred_fallthru
          _
      $region12: #{transformer_forward.6} parent=5 // pred_fallthru
        _
      %p213 = scmp.lt.s32.totalorder %s16, 2
      // Predicated region
      $region29: #{transformer_forward.6} parent=5 // pred_check
        %p214 = pneg %p213
      $region30: #{transformer_forward.6} parent=5 // pred_check_branch
        %216 = sbr.rel (%p214) target = $region32
      $region31: #{transformer_forward.6} parent=5 // pred_region
        // Predicated region
        $region33: #{transformer_forward.6} parent=31 // pred_check
          %p217 = pneg %p48
        $region34: #{transformer_forward.6} parent=31 // pred_check_branch
          %219 = sbr.rel (%p217) target = $region36
        $region35: #{transformer_forward.6} parent=31 // pred_region
          %s220 = sand.u32 %s38, 1
          %s221 = scalar_lea.sflag [#allocation5], %s220
          %s222 = sand.u32 %s38, 1
          %s223 = smul.addr %s222, 16
          %s224 = scalar_lea.vmem [#allocation4], %s223
          %s226 = ssub.s32 256, 256
          %227 = vsyncadd %s221, %s226
          %s228 = smul.addr %s23, 2
          %s229 = smul.addr %s228, 128
          %s230 = scalar_lea.hbm %s0, %s229
          %s231 = sshll.u32 %s224, 4
          %s232 = int_to_ptr.vmem [resolvable:$true] %s231
          %237 = dma.hbm_to_vmem [thread:$0]  %s230, 256, %s232, %s221, 128, 128, 8
        $region36: #{transformer_forward.6} parent=31 // pred_fallthru
          _
      $region32: #{transformer_forward.6} parent=5 // pred_fallthru
        _
      %p238 = scmp.le.s32.totalorder 1, %s16
      %p239 = scmp.lt.s32.totalorder %s16, 3
      %p240 = pnand %p238, %p239
      %p241 = pneg %p240
      // Predicated region
      $region37: #{transformer_forward.6} parent=5 // pred_check
        _
      $region38: #{transformer_forward.6} parent=5 // pred_check_branch
        %243 = sbr.rel (%p240) target = $region40
      $region39: #{transformer_forward.6} parent=5 // pred_region
        %s244 = ssub.s32 %s16, 1
        %s245 = sand.u32 %s41, 1
        %s246 = scalar_lea.sflag [#allocation5], %s245
        %s247 = sand.u32 %s41, 1
        %s248 = smul.addr %s247, 16
        %s249 = scalar_lea.vmem [#allocation4], %s248
        // Predicated region
        $region41: #{transformer_forward.6} parent=39 // pred_check
          %p250 = pneg %p54
        $region42: #{transformer_forward.6} parent=39 // pred_check_branch
          %252 = sbr.rel (%p250) target = $region44
        $region43: #{transformer_forward.6} parent=39 // pred_region
          %253 = dma.done %s246, 256
        $region44: #{transformer_forward.6} parent=39 // pred_fallthru
          _
        // Predicated region
        $region45: #{transformer_forward.6} parent=39 // pred_check
          %p254 = pneg %p75
        $region46: #{transformer_forward.6} parent=39 // pred_check_branch
          %256 = sbr.rel (%p254) target = $region48
        $region47: #{transformer_forward.6} parent=39 // pred_region
          %257 = dma.done [#allocation7], 3072
        $region48: #{transformer_forward.6} parent=39 // pred_fallthru
          _
        // Predicated region
        $region49: #{transformer_forward.6} parent=39 // pred_check
          %p258 = pneg %p96
        $region50: #{transformer_forward.6} parent=39 // pred_check_branch
          %260 = sbr.rel (%p258) target = $region52
        $region51: #{transformer_forward.6} parent=39 // pred_region
          %261 = dma.done [#allocation7], 1024
        $region52: #{transformer_forward.6} parent=39 // pred_fallthru
          _
        %s262 = sand.u32 %s41, 1
        %s263 = scalar_lea.sflag [#allocation5], %s262
        %s264 = sand.u32 %s41, 1
        %s265 = smul.addr %s264, 16
        %s266 = scalar_lea.vmem [#allocation4], %s265
        %p267 = pneg %p54
        %p268 = pneg %p51
        %p269 = pneg %p75
        %p270 = pneg %p72
        %p271 = pneg %p96
        %p272 = pneg %p93
        %p273 = pneg %p117
        %p274 = pneg %p114
        %p275 = pneg %p138
        %p276 = pneg %p135
        %p277 = pneg %p166
        %p278 = pneg %p163
        %s279 = smul.u32 2, %s26
        %p280 = scmp.lt.s32.totalorder %s25, 1
        %s281 = scalar_select %p280, %s25, 1
        %p282 = scmp.lt.s32.totalorder %s279, 1
        %s283 = scalar_select %p282, %s279, 1
        %s284 = smul.addr %s281, 2
        %s285 = sadd.s32 %s283, %s284
        %s286 = smul.addr %s285, 8
        %s287 = scalar_lea.vmem %s5, %s286
        %s288 = smul.u32 2, %s26
        %p289 = scmp.lt.s32.totalorder %s25, 1
        %s290 = scalar_select %p289, %s25, 1
        %p291 = scmp.lt.s32.totalorder %s288, 1
        %s292 = scalar_select %p291, %s288, 1
        %s293 = smul.addr %s290, 2
        %s294 = sadd.s32 %s292, %s293
        %s295 = smul.addr %s294, 8
        %s296 = scalar_lea.vmem %s5, %s295
        %s297 = smul.u32 2, %s26
        %v299 = vld [vmem:[%s249] sm:$0xff]
        %v300 = vld [vmem:[%s249 + $0x8] sm:$0xff]
        %v301 = vmul.f32 %v299, %v299
        %v302 = vmul.f32 %v300, %v300
        %303 = vadd.xlane.f32.xlu0 %v301
        %v304 = vpop.xlane.xlu0 %303
        %305 = vadd.xlane.f32.xlu0 %v302
        %v306 = vpop.xlane.xlu0 %305
        %v307 = vrcp.pop 128.0
        %v308 = vmul.f32 %v304, %v307
        %v309 = vmul.f32 %v306, %v307
        %v310 = vadd.f32 %v308, 1e-06
        %v311 = vadd.f32 %v309, 1e-06
        %v312 = vrsqrt.pop %v310
        %v313 = vrsqrt.pop %v311
        %v314 = vmul.f32 %v299, %v312
        %v315 = vmul.f32 %v300, %v313
        %v316 = vpack.c.bf16 %v315, %v314
        %v317 = vld [vmem:[#allocation6] sm:$0xf]
        %v318 = vld [vmem:[#allocation6 + $0xc] sm:$0xf]
        %v319 = vld [vmem:[#allocation6 + $0x18] sm:$0xf]
        %v320 = vld [vmem:[#allocation6 + $0x24] sm:$0xf]
        %v321 = vld [vmem:[#allocation6 + $0x30] sm:$0xf]
        %v322 = vld [vmem:[#allocation6 + $0x3c] sm:$0xf]
        %v323 = vld [vmem:[#allocation6 + $0x48] sm:$0xf]
        %v324 = vld [vmem:[#allocation6 + $0x54] sm:$0xf]
        %v325 = vld [vmem:[#allocation6 + $0x60] sm:$0xf]
        %v326 = vld [vmem:[#allocation6 + $0x6c] sm:$0xf]
        %v327 = vld [vmem:[#allocation6 + $0x78] sm:$0xf]
        %v328 = vld [vmem:[#allocation6 + $0x84] sm:$0xf]
        %v329 = vld [vmem:[#allocation6 + $0x90] sm:$0xf]
        %v330 = vld [vmem:[#allocation6 + $0x9c] sm:$0xf]
        %v331 = vld [vmem:[#allocation6 + $0xa8] sm:$0xf]
        %v332 = vld [vmem:[#allocation6 + $0xb4] sm:$0xf]
        %v349 = vunpack.c.l.b16 %v317
        %v350 = vunpack.c.l.b16 %v318
        %v351 = vunpack.c.l.b16 %v319
        %v352 = vunpack.c.l.b16 %v320
        %v353 = vunpack.c.l.b16 %v321
        %v354 = vunpack.c.l.b16 %v322
        %v355 = vunpack.c.l.b16 %v323
        %v356 = vunpack.c.l.b16 %v324
        %v357 = vunpack.c.l.b16 %v325
        %v358 = vunpack.c.l.b16 %v326
        %v359 = vunpack.c.l.b16 %v327
        %v360 = vunpack.c.l.b16 %v328
        %v361 = vunpack.c.l.b16 %v329
        %v362 = vunpack.c.l.b16 %v330
        %v363 = vunpack.c.l.b16 %v331
        %v364 = vunpack.c.l.b16 %v332
        %v365 = vpack.c.b16 %v350, %v349
        %v366 = vpack.c.b16 %v352, %v351
        %v367 = vpack.c.b16 %v354, %v353
        %v368 = vpack.c.b16 %v356, %v355
        %v369 = vpack.c.b16 %v358, %v357
        %v370 = vpack.c.b16 %v360, %v359
        %v371 = vpack.c.b16 %v362, %v361
        %v372 = vpack.c.b16 %v364, %v363
        %381 = vmatprep.subr.bf16.mxu0 0
        %382 = vmatpush1.bf16.msra.mxu0 %v372
        %383 = vmatprep.subr.bf16.mxu0 0
        %384 = vmatpush1.bf16.msra.mxu0 %v371
        %385 = vmatprep.subr.bf16.mxu0 0
        %386 = vmatpush1.bf16.msra.mxu0 %v370
        %387 = vmatprep.subr.bf16.mxu0 0
        %388 = vmatpush1.bf16.msra.mxu0 %v369
        %389 = vmatprep.subr.bf16.mxu0 0
        %390 = vmatpush1.bf16.msra.mxu0 %v368
        %391 = vmatprep.subr.bf16.mxu0 0
        %392 = vmatpush1.bf16.msra.mxu0 %v367
        %393 = vmatprep.subr.bf16.mxu0 0
        %394 = vmatpush1.bf16.msra.mxu0 %v366
        %395 = vmatprep.subr.bf16.mxu0 0
        %396 = vmatpush1.bf16.msra.mxu0 %v365
        %397 = vmatprep.subr.bf16.mxu0 0
        %398 = vmatpush2.bf16.msra.mxu0 0
        %399 = vmatprep.subr.bf16.mxu0 0
        %400 = vmatpush2.bf16.msra.mxu0 0
        %401 = vmatprep.subr.bf16.mxu0 0
        %402 = vmatpush2.bf16.msra.mxu0 0
        %403 = vmatprep.subr.bf16.mxu0 0
        %404 = vmatpush2.bf16.msra.mxu0 0
        %405 = vmatprep.subr.bf16.mxu0 0
        %406 = vmatpush2.bf16.msra.mxu0 0
        %407 = vmatprep.subr.bf16.mxu0 0
        %408 = vmatpush2.bf16.msra.mxu0 0
        %409 = vmatprep.subr.bf16.mxu0 0
        %410 = vmatpush2.bf16.msra.mxu0 0
        %411 = vmatprep.subr.bf16.mxu0 0
        %412 = vmatpush2.bf16.msra.mxu0 0
        %413 = vmatprep.mubr.bf16.mxu0 0
        %414 = vmatmul.mubr.bf16.gmra.mxu0 %v316
        %v415 = vpop.f32.mrf.mxu0
        %v416 = vadd.f32 0.0, %v415
        %v417 = vpop.f32.mrf.mxu0
        %v418 = vpop.f32.mrf.mxu0
        %v419 = vadd.f32 0.0, %v418
        %v420 = vpop.f32.mrf.mxu0
        %421 = vdwg.mxu0
        %v422 = vld [vmem:[#allocation6 + $0x4] sm:$0xff]
        %v423 = vld [vmem:[#allocation6 + $0x10] sm:$0xff]
        %v424 = vld [vmem:[#allocation6 + $0x1c] sm:$0xff]
        %v425 = vld [vmem:[#allocation6 + $0x28] sm:$0xff]
        %v426 = vld [vmem:[#allocation6 + $0x34] sm:$0xff]
        %v427 = vld [vmem:[#allocation6 + $0x40] sm:$0xff]
        %v428 = vld [vmem:[#allocation6 + $0x4c] sm:$0xff]
        %v429 = vld [vmem:[#allocation6 + $0x58] sm:$0xff]
        %v430 = vld [vmem:[#allocation6 + $0x64] sm:$0xff]
        %v431 = vld [vmem:[#allocation6 + $0x70] sm:$0xff]
        %v432 = vld [vmem:[#allocation6 + $0x7c] sm:$0xff]
        %v433 = vld [vmem:[#allocation6 + $0x88] sm:$0xff]
        %v434 = vld [vmem:[#allocation6 + $0x94] sm:$0xff]
        %v435 = vld [vmem:[#allocation6 + $0xa0] sm:$0xff]
        %v436 = vld [vmem:[#allocation6 + $0xac] sm:$0xff]
        %v437 = vld [vmem:[#allocation6 + $0xb8] sm:$0xff]
        %v454 = vunpack.c.l.b16 %v422
        %v455 = vunpack.c.h.b16 %v422
        %v456 = vunpack.c.l.b16 %v423
        %v457 = vunpack.c.h.b16 %v423
        %v458 = vunpack.c.l.b16 %v424
        %v459 = vunpack.c.h.b16 %v424
        %v460 = vunpack.c.l.b16 %v425
        %v461 = vunpack.c.h.b16 %v425
        %v462 = vunpack.c.l.b16 %v426
        %v463 = vunpack.c.h.b16 %v426
        %v464 = vunpack.c.l.b16 %v427
        %v465 = vunpack.c.h.b16 %v427
        %v466 = vunpack.c.l.b16 %v428
        %v467 = vunpack.c.h.b16 %v428
        %v468 = vunpack.c.l.b16 %v429
        %v469 = vunpack.c.h.b16 %v429
        %v470 = vunpack.c.l.b16 %v430
        %v471 = vunpack.c.h.b16 %v430
        %v472 = vunpack.c.l.b16 %v431
        %v473 = vunpack.c.h.b16 %v431
        %v474 = vunpack.c.l.b16 %v432
        %v475 = vunpack.c.h.b16 %v432
        %v476 = vunpack.c.l.b16 %v433
        %v477 = vunpack.c.h.b16 %v433
        %v478 = vunpack.c.l.b16 %v434
        %v479 = vunpack.c.h.b16 %v434
        %v480 = vunpack.c.l.b16 %v435
        %v481 = vunpack.c.h.b16 %v435
        %v482 = vunpack.c.l.b16 %v436
        %v483 = vunpack.c.h.b16 %v436
        %v484 = vunpack.c.l.b16 %v437
        %v485 = vunpack.c.h.b16 %v437
        %v486 = vpack.c.b16 %v456, %v454
        %v487 = vpack.c.b16 %v457, %v455
        %v488 = vpack.c.b16 %v460, %v458
        %v489 = vpack.c.b16 %v461, %v459
        %v490 = vpack.c.b16 %v464, %v462
        %v491 = vpack.c.b16 %v465, %v463
        %v492 = vpack.c.b16 %v468, %v466
        %v493 = vpack.c.b16 %v469, %v467
        %v494 = vpack.c.b16 %v472, %v470
        %v495 = vpack.c.b16 %v473, %v471
        %v496 = vpack.c.b16 %v476, %v474
        %v497 = vpack.c.b16 %v477, %v475
        %v498 = vpack.c.b16 %v480, %v478
        %v499 = vpack.c.b16 %v481, %v479
        %v500 = vpack.c.b16 %v484, %v482
        %v501 = vpack.c.b16 %v485, %v483
        %518 = vmatprep.subr.bf16.mxu0 %v501
        %519 = vmatpush1.bf16.msra.mxu0 %v500
        %520 = vmatprep.subr.bf16.mxu0 %v499
        %521 = vmatpush1.bf16.msra.mxu0 %v498
        %522 = vmatprep.subr.bf16.mxu0 %v497
        %523 = vmatpush1.bf16.msra.mxu0 %v496
        %524 = vmatprep.subr.bf16.mxu0 %v495
        %525 = vmatpush1.bf16.msra.mxu0 %v494
        %526 = vmatprep.subr.bf16.mxu0 %v493
        %527 = vmatpush1.bf16.msra.mxu0 %v492
        %528 = vmatprep.subr.bf16.mxu0 %v491
        %529 = vmatpush1.bf16.msra.mxu0 %v490
        %530 = vmatprep.subr.bf16.mxu0 %v489
        %531 = vmatpush1.bf16.msra.mxu0 %v488
        %532 = vmatprep.subr.bf16.mxu0 %v487
        %533 = vmatpush1.bf16.msra.mxu0 %v486
        %534 = vmatprep.subr.bf16.mxu0 0
        %535 = vmatpush2.bf16.msra.mxu0 0
        %536 = vmatprep.subr.bf16.mxu0 0
        %537 = vmatpush2.bf16.msra.mxu0 0
        %538 = vmatprep.subr.bf16.mxu0 0
        %539 = vmatpush2.bf16.msra.mxu0 0
        %540 = vmatprep.subr.bf16.mxu0 0
        %541 = vmatpush2.bf16.msra.mxu0 0
        %542 = vmatprep.subr.bf16.mxu0 0
        %543 = vmatpush2.bf16.msra.mxu0 0
        %544 = vmatprep.subr.bf16.mxu0 0
        %545 = vmatpush2.bf16.msra.mxu0 0
        %546 = vmatprep.subr.bf16.mxu0 0
        %547 = vmatpush2.bf16.msra.mxu0 0
        %548 = vmatprep.subr.bf16.mxu0 0
        %549 = vmatpush2.bf16.msra.mxu0 0
        %550 = vmatprep.mubr.bf16.mxu0 0
        %551 = vmatmul.mubr.bf16.gmra.mxu0 %v316
        %v552 = vpop.f32.mrf.mxu0
        %v553 = vadd.f32 0.0, %v552
        %v554 = vpop.f32.mrf.mxu0
        %v555 = vadd.f32 0.0, %v554
        %v556 = vpop.f32.mrf.mxu0
        %v557 = vadd.f32 0.0, %v556
        %v558 = vpop.f32.mrf.mxu0
        %v559 = vadd.f32 0.0, %v558
        %560 = vdwg.mxu0
        %s561 = sld [smem:[#allocation3]]
        %v562 = vstv %s561
        %v563 = vmul.f32 %v416, %v562
        %v564 = vmul.f32 %v419, %v562
        %v565 = vlaneseq
        %v566 = vshrl.u32 %v565, 7
        %v567 = vadd.s32 %v566, 8
        %v568 = vlaneseq
        %v569 = vand.u32 %v568, 127
        %vm570 = vcmp.eq.s32.totalorder %v566, %v569
        %vm571 = vcmp.eq.s32.totalorder %v567, %v569
        %v572 = vpack.c.bf16 %v564, %v563
        %v573 = vpack.c.bf16 %v557, %v553
        %v574 = vpack.c.bf16 %v559, %v555
        %vm575 = vcmask 261120
        %v577 = vsel %vm575, %v572, 0
        %v580 = vsel %vm575, %v573, 0
        %582 = vmatprep.subr.bf16.mxu0 0
        %583 = vmatpush1.bf16.xpose.msra.mxu0 0
        %584 = vmatprep.subr.bf16.mxu0 0
        %585 = vmatpush1.bf16.xpose.msra.mxu0 0
        %586 = vmatprep.subr.bf16.mxu0 0
        %587 = vmatpush1.bf16.xpose.msra.mxu0 0
        %588 = vmatprep.subr.bf16.mxu0 0
        %589 = vmatpush1.bf16.xpose.msra.mxu0 0
        %590 = vmatprep.subr.bf16.mxu0 0
        %591 = vmatpush1.bf16.xpose.msra.mxu0 0
        %592 = vmatprep.subr.bf16.mxu0 0
        %593 = vmatpush1.bf16.xpose.msra.mxu0 0
        %594 = vmatprep.subr.bf16.mxu0 0
        %595 = vmatpush1.bf16.xpose.msra.mxu0 0
        %596 = vmatprep.subr.bf16.mxu0 0
        %597 = vmatpush1.bf16.xpose.msra.mxu0 %v580
        %598 = vmatprep.subr.bf16.mxu0 0
        %599 = vmatpush2.bf16.xpose.msra.mxu0 0
        %600 = vmatprep.subr.bf16.mxu0 0
        %601 = vmatpush2.bf16.xpose.msra.mxu0 0
        %602 = vmatprep.subr.bf16.mxu0 0
        %603 = vmatpush2.bf16.xpose.msra.mxu0 0
        %604 = vmatprep.subr.bf16.mxu0 0
        %605 = vmatpush2.bf16.xpose.msra.mxu0 0
        %606 = vmatprep.subr.bf16.mxu0 0
        %607 = vmatpush2.bf16.xpose.msra.mxu0 0
        %608 = vmatprep.subr.bf16.mxu0 0
        %609 = vmatpush2.bf16.xpose.msra.mxu0 0
        %610 = vmatprep.subr.bf16.mxu0 0
        %611 = vmatpush2.bf16.xpose.msra.mxu0 0
        %612 = vmatprep.subr.bf16.mxu0 0
        %613 = vmatpush2.bf16.xpose.msra.mxu0 0
        %614 = vmatprep.mubr.bf16.mxu0 0
        %615 = vmatmul.mubr.bf16.gmra.mxu0 %v577
        %v616 = vpop.f32.mrf.mxu0
        %v617 = vadd.f32 0.0, %v616
        %v618 = vpop.f32.mrf.mxu0
        %v619 = vpop.f32.mrf.mxu0
        %v620 = vadd.f32 0.0, %v619
        %v621 = vpop.f32.mrf.mxu0
        %622 = vdwg.mxu0
        %v623 = vsel %vm570, -3.4028235e+38, %v617
        %v624 = vsel %vm571, -3.4028235e+38, %v620
        %vm625 = vcmask 130048
        %v626 = vsel %vm625, %v623, -inf
        %627 = vmax.xlane.f32.xlu0 %v626
        %v628 = vpop.xlane.xlu0 %627
        %v629 = vsel %vm625, %v624, -inf
        %630 = vmax.xlane.f32.xlu0 %v629
        %v631 = vpop.xlane.xlu0 %630
        %v632 = vsub.f32 %v623, %v628
        %v633 = vsub.f32 %v624, %v631
        %v634 = vmul.f32 %v632, 1.442695
        %v635 = vpow.pop %v634
        %v636 = vmul.f32 %v633, 1.442695
        %v637 = vpow.pop %v636
        %v638 = vsel %vm625, %v635, 0.0
        %639 = vadd.xlane.f32.xlu0 %v638
        %v640 = vpop.xlane.xlu0 %639
        %v641 = vsel %vm625, %v637, 0.0
        %642 = vadd.xlane.f32.xlu0 %v641
        %v643 = vpop.xlane.xlu0 %642
        %v644 = vrcp.pop %v640
        %v645 = vrcp.pop %v643
        %v646 = vmul.f32 %v635, %v644
        %v647 = vmul.f32 %v637, %v645
        %v648 = vpack.c.bf16 %v647, %v646
        %v650 = vsel %vm625, %v648, 0
        %652 = vmatprep.subr.bf16.mxu0 0
        %653 = vmatpush1.bf16.msra.mxu0 0
        %654 = vmatprep.subr.bf16.mxu0 0
        %655 = vmatpush1.bf16.msra.mxu0 0
        %656 = vmatprep.subr.bf16.mxu0 0
        %657 = vmatpush1.bf16.msra.mxu0 0
        %658 = vmatprep.subr.bf16.mxu0 0
        %659 = vmatpush1.bf16.msra.mxu0 0
        %660 = vmatprep.subr.bf16.mxu0 0
        %661 = vmatpush1.bf16.msra.mxu0 0
        %662 = vmatprep.subr.bf16.mxu0 0
        %663 = vmatpush1.bf16.msra.mxu0 0
        %664 = vmatprep.subr.bf16.mxu0 0
        %665 = vmatpush1.bf16.msra.mxu0 0
        %666 = vmatprep.subr.bf16.mxu0 0
        %667 = vmatpush1.bf16.msra.mxu0 %v574
        %668 = vmatprep.subr.bf16.mxu0 0
        %669 = vmatpush2.bf16.msra.mxu0 0
        %670 = vmatprep.subr.bf16.mxu0 0
        %671 = vmatpush2.bf16.msra.mxu0 0
        %672 = vmatprep.subr.bf16.mxu0 0
        %673 = vmatpush2.bf16.msra.mxu0 0
        %674 = vmatprep.subr.bf16.mxu0 0
        %675 = vmatpush2.bf16.msra.mxu0 0
        %676 = vmatprep.subr.bf16.mxu0 0
        %677 = vmatpush2.bf16.msra.mxu0 0
        %678 = vmatprep.subr.bf16.mxu0 0
        %679 = vmatpush2.bf16.msra.mxu0 0
        %680 = vmatprep.subr.bf16.mxu0 0
        %681 = vmatpush2.bf16.msra.mxu0 0
        %682 = vmatprep.subr.bf16.mxu0 0
        %683 = vmatpush2.bf16.msra.mxu0 0
        %684 = vmatprep.mubr.bf16.mxu0 0
        %685 = vmatmul.mubr.bf16.gmra.mxu0 %v650
        %v686 = vpop.f32.mrf.mxu0
        %v687 = vadd.f32 0.0, %v686
        %v688 = vpop.f32.mrf.mxu0
        %v689 = vpop.f32.mrf.mxu0
        %v690 = vadd.f32 0.0, %v689
        %v691 = vpop.f32.mrf.mxu0
        %692 = vdwg.mxu0
        %693 = vst.msk [vmem:[#allocation2] sm:$0xff] %vm575, %v687
        %694 = vst.msk [vmem:[#allocation2 + $0x8] sm:$0xff] %vm575, %v690
        %696 = vrot.lane.b32.xlu0 %v572, 96
        %v697 = vpop.permute.xlu0 %696
        %699 = vrot.lane.b32.xlu0 %v573, 96
        %v700 = vpop.permute.xlu0 %699
        %v702 = vsel %vm575, %v697, 0
        %v705 = vsel %vm575, %v700, 0
        %707 = vmatprep.subr.bf16.mxu0 0
        %708 = vmatpush1.bf16.xpose.msra.mxu0 0
        %709 = vmatprep.subr.bf16.mxu0 0
        %710 = vmatpush1.bf16.xpose.msra.mxu0 0
        %711 = vmatprep.subr.bf16.mxu0 0
        %712 = vmatpush1.bf16.xpose.msra.mxu0 0
        %713 = vmatprep.subr.bf16.mxu0 0
        %714 = vmatpush1.bf16.xpose.msra.mxu0 0
        %715 = vmatprep.subr.bf16.mxu0 0
        %716 = vmatpush1.bf16.xpose.msra.mxu0 0
        %717 = vmatprep.subr.bf16.mxu0 0
        %718 = vmatpush1.bf16.xpose.msra.mxu0 0
        %719 = vmatprep.subr.bf16.mxu0 0
        %720 = vmatpush1.bf16.xpose.msra.mxu0 0
        %721 = vmatprep.subr.bf16.mxu0 0
        %722 = vmatpush1.bf16.xpose.msra.mxu0 %v705
        %723 = vmatprep.subr.bf16.mxu0 0
        %724 = vmatpush2.bf16.xpose.msra.mxu0 0
        %725 = vmatprep.subr.bf16.mxu0 0
        %726 = vmatpush2.bf16.xpose.msra.mxu0 0
        %727 = vmatprep.subr.bf16.mxu0 0
        %728 = vmatpush2.bf16.xpose.msra.mxu0 0
        %729 = vmatprep.subr.bf16.mxu0 0
        %730 = vmatpush2.bf16.xpose.msra.mxu0 0
        %731 = vmatprep.subr.bf16.mxu0 0
        %732 = vmatpush2.bf16.xpose.msra.mxu0 0
        %733 = vmatprep.subr.bf16.mxu0 0
        %734 = vmatpush2.bf16.xpose.msra.mxu0 0
        %735 = vmatprep.subr.bf16.mxu0 0
        %736 = vmatpush2.bf16.xpose.msra.mxu0 0
        %737 = vmatprep.subr.bf16.mxu0 0
        %738 = vmatpush2.bf16.xpose.msra.mxu0 0
        %739 = vmatprep.mubr.bf16.mxu0 0
        %740 = vmatmul.mubr.bf16.gmra.mxu0 %v702
        %v741 = vpop.f32.mrf.mxu0
        %v742 = vadd.f32 0.0, %v741
        %v743 = vpop.f32.mrf.mxu0
        %v744 = vpop.f32.mrf.mxu0
        %v745 = vadd.f32 0.0, %v744
        %v746 = vpop.f32.mrf.mxu0
        %747 = vdwg.mxu0
        %v748 = vsel %vm570, -3.4028235e+38, %v742
        %v749 = vsel %vm571, -3.4028235e+38, %v745
        %v750 = vsel %vm625, %v748, -inf
        %751 = vmax.xlane.f32.xlu0 %v750
        %v752 = vpop.xlane.xlu0 %751
        %v753 = vsel %vm625, %v749, -inf
        %754 = vmax.xlane.f32.xlu0 %v753
        %v755 = vpop.xlane.xlu0 %754
        %v756 = vsub.f32 %v748, %v752
        %v757 = vsub.f32 %v749, %v755
        %v758 = vmul.f32 %v756, 1.442695
        %v759 = vpow.pop %v758
        %v760 = vmul.f32 %v757, 1.442695
        %v761 = vpow.pop %v760
        %v762 = vsel %vm625, %v759, 0.0
        %763 = vadd.xlane.f32.xlu0 %v762
        %v764 = vpop.xlane.xlu0 %763
        %v765 = vsel %vm625, %v761, 0.0
        %766 = vadd.xlane.f32.xlu0 %v765
        %v767 = vpop.xlane.xlu0 %766
        %v768 = vrcp.pop %v764
        %v769 = vrcp.pop %v767
        %v770 = vmul.f32 %v759, %v768
        %v771 = vmul.f32 %v761, %v769
        %v772 = vpack.c.bf16 %v771, %v770
        %774 = vrot.lane.b32.xlu0 %v574, 96
        %v775 = vpop.permute.xlu0 %774
        %v778 = vsel %vm625, %v772, 0
        %780 = vmatprep.subr.bf16.mxu0 0
        %781 = vmatpush1.bf16.msra.mxu0 0
        %782 = vmatprep.subr.bf16.mxu0 0
        %783 = vmatpush1.bf16.msra.mxu0 0
        %784 = vmatprep.subr.bf16.mxu0 0
        %785 = vmatpush1.bf16.msra.mxu0 0
        %786 = vmatprep.subr.bf16.mxu0 0
        %787 = vmatpush1.bf16.msra.mxu0 0
        %788 = vmatprep.subr.bf16.mxu0 0
        %789 = vmatpush1.bf16.msra.mxu0 0
        %790 = vmatprep.subr.bf16.mxu0 0
        %791 = vmatpush1.bf16.msra.mxu0 0
        %792 = vmatprep.subr.bf16.mxu0 0
        %793 = vmatpush1.bf16.msra.mxu0 0
        %794 = vmatprep.subr.bf16.mxu0 0
        %795 = vmatpush1.bf16.msra.mxu0 %v775
        %796 = vmatprep.subr.bf16.mxu0 0
        %797 = vmatpush2.bf16.msra.mxu0 0
        %798 = vmatprep.subr.bf16.mxu0 0
        %799 = vmatpush2.bf16.msra.mxu0 0
        %800 = vmatprep.subr.bf16.mxu0 0
        %801 = vmatpush2.bf16.msra.mxu0 0
        %802 = vmatprep.subr.bf16.mxu0 0
        %803 = vmatpush2.bf16.msra.mxu0 0
        %804 = vmatprep.subr.bf16.mxu0 0
        %805 = vmatpush2.bf16.msra.mxu0 0
        %806 = vmatprep.subr.bf16.mxu0 0
        %807 = vmatpush2.bf16.msra.mxu0 0
        %808 = vmatprep.subr.bf16.mxu0 0
        %809 = vmatpush2.bf16.msra.mxu0 0
        %810 = vmatprep.subr.bf16.mxu0 0
        %811 = vmatpush2.bf16.msra.mxu0 0
        %812 = vmatprep.mubr.bf16.mxu0 0
        %813 = vmatmul.mubr.bf16.gmra.mxu0 %v778
        %v814 = vpop.f32.mrf.mxu0
        %v815 = vadd.f32 0.0, %v814
        %v816 = vpop.f32.mrf.mxu0
        %v817 = vpop.f32.mrf.mxu0
        %v818 = vadd.f32 0.0, %v817
        %v819 = vpop.f32.mrf.mxu0
        %820 = vdwg.mxu0
        %823 = vrot.lane.b32.xlu0 %v815, 32
        %v824 = vpop.permute.xlu0 %823
        %825 = vrot.lane.b32.xlu0 %v818, 32
        %v826 = vpop.permute.xlu0 %825
        %vm829 = vcmask 523520
        %830 = vst.msk [vmem:[#allocation2] sm:$0xff] %vm829, %v824
        %831 = vst.msk [vmem:[#allocation2 + $0x8] sm:$0xff] %vm829, %v826
        %832 = vrot.lane.b32.xlu0 %v572, 64
        %v833 = vpop.permute.xlu0 %832
        %834 = vrot.lane.b32.xlu0 %v573, 64
        %v835 = vpop.permute.xlu0 %834
        %v837 = vsel %vm575, %v833, 0
        %v840 = vsel %vm575, %v835, 0
        %842 = vmatprep.subr.bf16.mxu0 0
        %843 = vmatpush1.bf16.xpose.msra.mxu0 0
        %844 = vmatprep.subr.bf16.mxu0 0
        %845 = vmatpush1.bf16.xpose.msra.mxu0 0
        %846 = vmatprep.subr.bf16.mxu0 0
        %847 = vmatpush1.bf16.xpose.msra.mxu0 0
        %848 = vmatprep.subr.bf16.mxu0 0
        %849 = vmatpush1.bf16.xpose.msra.mxu0 0
        %850 = vmatprep.subr.bf16.mxu0 0
        %851 = vmatpush1.bf16.xpose.msra.mxu0 0
        %852 = vmatprep.subr.bf16.mxu0 0
        %853 = vmatpush1.bf16.xpose.msra.mxu0 0
        %854 = vmatprep.subr.bf16.mxu0 0
        %855 = vmatpush1.bf16.xpose.msra.mxu0 0
        %856 = vmatprep.subr.bf16.mxu0 0
        %857 = vmatpush1.bf16.xpose.msra.mxu0 %v840
        %858 = vmatprep.subr.bf16.mxu0 0
        %859 = vmatpush2.bf16.xpose.msra.mxu0 0
        %860 = vmatprep.subr.bf16.mxu0 0
        %861 = vmatpush2.bf16.xpose.msra.mxu0 0
        %862 = vmatprep.subr.bf16.mxu0 0
        %863 = vmatpush2.bf16.xpose.msra.mxu0 0
        %864 = vmatprep.subr.bf16.mxu0 0
        %865 = vmatpush2.bf16.xpose.msra.mxu0 0
        %866 = vmatprep.subr.bf16.mxu0 0
        %867 = vmatpush2.bf16.xpose.msra.mxu0 0
        %868 = vmatprep.subr.bf16.mxu0 0
        %869 = vmatpush2.bf16.xpose.msra.mxu0 0
        %870 = vmatprep.subr.bf16.mxu0 0
        %871 = vmatpush2.bf16.xpose.msra.mxu0 0
        %872 = vmatprep.subr.bf16.mxu0 0
        %873 = vmatpush2.bf16.xpose.msra.mxu0 0
        %874 = vmatprep.mubr.bf16.mxu0 0
        %875 = vmatmul.mubr.bf16.gmra.mxu0 %v837
        %v876 = vpop.f32.mrf.mxu0
        %v877 = vadd.f32 0.0, %v876
        %v878 = vpop.f32.mrf.mxu0
        %v879 = vpop.f32.mrf.mxu0
        %v880 = vadd.f32 0.0, %v879
        %v881 = vpop.f32.mrf.mxu0
        %882 = vdwg.mxu0
        %v883 = vsel %vm570, -3.4028235e+38, %v877
        %v884 = vsel %vm571, -3.4028235e+38, %v880
        %v885 = vsel %vm625, %v883, -inf
        %886 = vmax.xlane.f32.xlu0 %v885
        %v887 = vpop.xlane.xlu0 %886
        %v888 = vsel %vm625, %v884, -inf
        %889 = vmax.xlane.f32.xlu0 %v888
        %v890 = vpop.xlane.xlu0 %889
        %v891 = vsub.f32 %v883, %v887
        %v892 = vsub.f32 %v884, %v890
        %v893 = vmul.f32 %v891, 1.442695
        %v894 = vpow.pop %v893
        %v895 = vmul.f32 %v892, 1.442695
        %v896 = vpow.pop %v895
        %v897 = vsel %vm625, %v894, 0.0
        %898 = vadd.xlane.f32.xlu0 %v897
        %v899 = vpop.xlane.xlu0 %898
        %v900 = vsel %vm625, %v896, 0.0
        %901 = vadd.xlane.f32.xlu0 %v900
        %v902 = vpop.xlane.xlu0 %901
        %v903 = vrcp.pop %v899
        %v904 = vrcp.pop %v902
        %v905 = vmul.f32 %v894, %v903
        %v906 = vmul.f32 %v896, %v904
        %v907 = vpack.c.bf16 %v906, %v905
        %908 = vrot.lane.b32.xlu0 %v574, 64
        %v909 = vpop.permute.xlu0 %908
        %v912 = vsel %vm625, %v907, 0
        %914 = vmatprep.subr.bf16.mxu0 0
        %915 = vmatpush1.bf16.msra.mxu0 0
        %916 = vmatprep.subr.bf16.mxu0 0
        %917 = vmatpush1.bf16.msra.mxu0 0
        %918 = vmatprep.subr.bf16.mxu0 0
        %919 = vmatpush1.bf16.msra.mxu0 0
        %920 = vmatprep.subr.bf16.mxu0 0
        %921 = vmatpush1.bf16.msra.mxu0 0
        %922 = vmatprep.subr.bf16.mxu0 0
        %923 = vmatpush1.bf16.msra.mxu0 0
        %924 = vmatprep.subr.bf16.mxu0 0
        %925 = vmatpush1.bf16.msra.mxu0 0
        %926 = vmatprep.subr.bf16.mxu0 0
        %927 = vmatpush1.bf16.msra.mxu0 0
        %928 = vmatprep.subr.bf16.mxu0 0
        %929 = vmatpush1.bf16.msra.mxu0 %v909
        %930 = vmatprep.subr.bf16.mxu0 0
        %931 = vmatpush2.bf16.msra.mxu0 0
        %932 = vmatprep.subr.bf16.mxu0 0
        %933 = vmatpush2.bf16.msra.mxu0 0
        %934 = vmatprep.subr.bf16.mxu0 0
        %935 = vmatpush2.bf16.msra.mxu0 0
        %936 = vmatprep.subr.bf16.mxu0 0
        %937 = vmatpush2.bf16.msra.mxu0 0
        %938 = vmatprep.subr.bf16.mxu0 0
        %939 = vmatpush2.bf16.msra.mxu0 0
        %940 = vmatprep.subr.bf16.mxu0 0
        %941 = vmatpush2.bf16.msra.mxu0 0
        %942 = vmatprep.subr.bf16.mxu0 0
        %943 = vmatpush2.bf16.msra.mxu0 0
        %944 = vmatprep.subr.bf16.mxu0 0
        %945 = vmatpush2.bf16.msra.mxu0 0
        %946 = vmatprep.mubr.bf16.mxu0 0
        %947 = vmatmul.mubr.bf16.gmra.mxu0 %v912
        %v948 = vpop.f32.mrf.mxu0
        %v949 = vadd.f32 0.0, %v948
        %v950 = vpop.f32.mrf.mxu0
        %v951 = vpop.f32.mrf.mxu0
        %v952 = vadd.f32 0.0, %v951
        %v953 = vpop.f32.mrf.mxu0
        %954 = vdwg.mxu0
        %957 = vrot.lane.b32.xlu0 %v949, 64
        %v958 = vpop.permute.xlu0 %957
        %959 = vrot.lane.b32.xlu0 %v952, 64
        %v960 = vpop.permute.xlu0 %959
        %vm963 = vcmask 785920
        %964 = vst.msk [vmem:[#allocation2] sm:$0xff] %vm963, %v958
        %965 = vst.msk [vmem:[#allocation2 + $0x8] sm:$0xff] %vm963, %v960
        %966 = vrot.lane.b32.xlu0 %v572, 32
        %v967 = vpop.permute.xlu0 %966
        %968 = vrot.lane.b32.xlu0 %v573, 32
        %v969 = vpop.permute.xlu0 %968
        %v971 = vsel %vm575, %v967, 0
        %v974 = vsel %vm575, %v969, 0
        %976 = vmatprep.subr.bf16.mxu0 0
        %977 = vmatpush1.bf16.xpose.msra.mxu0 0
        %978 = vmatprep.subr.bf16.mxu0 0
        %979 = vmatpush1.bf16.xpose.msra.mxu0 0
        %980 = vmatprep.subr.bf16.mxu0 0
        %981 = vmatpush1.bf16.xpose.msra.mxu0 0
        %982 = vmatprep.subr.bf16.mxu0 0
        %983 = vmatpush1.bf16.xpose.msra.mxu0 0
        %984 = vmatprep.subr.bf16.mxu0 0
        %985 = vmatpush1.bf16.xpose.msra.mxu0 0
        %986 = vmatprep.subr.bf16.mxu0 0
        %987 = vmatpush1.bf16.xpose.msra.mxu0 0
        %988 = vmatprep.subr.bf16.mxu0 0
        %989 = vmatpush1.bf16.xpose.msra.mxu0 0
        %990 = vmatprep.subr.bf16.mxu0 0
        %991 = vmatpush1.bf16.xpose.msra.mxu0 %v974
        %992 = vmatprep.subr.bf16.mxu0 0
        %993 = vmatpush2.bf16.xpose.msra.mxu0 0
        %994 = vmatprep.subr.bf16.mxu0 0
        %995 = vmatpush2.bf16.xpose.msra.mxu0 0
        %996 = vmatprep.subr.bf16.mxu0 0
        %997 = vmatpush2.bf16.xpose.msra.mxu0 0
        %998 = vmatprep.subr.bf16.mxu0 0
        %999 = vmatpush2.bf16.xpose.msra.mxu0 0
        %1000 = vmatprep.subr.bf16.mxu0 0
        %1001 = vmatpush2.bf16.xpose.msra.mxu0 0
        %1002 = vmatprep.subr.bf16.mxu0 0
        %1003 = vmatpush2.bf16.xpose.msra.mxu0 0
        %1004 = vmatprep.subr.bf16.mxu0 0
        %1005 = vmatpush2.bf16.xpose.msra.mxu0 0
        %1006 = vmatprep.subr.bf16.mxu0 0
        %1007 = vmatpush2.bf16.xpose.msra.mxu0 0
        %1008 = vmatprep.mubr.bf16.mxu0 0
        %1009 = vmatmul.mubr.bf16.gmra.mxu0 %v971
        %v1010 = vpop.f32.mrf.mxu0
        %v1011 = vadd.f32 0.0, %v1010
        %v1012 = vpop.f32.mrf.mxu0
        %v1013 = vpop.f32.mrf.mxu0
        %v1014 = vadd.f32 0.0, %v1013
        %v1015 = vpop.f32.mrf.mxu0
        %1016 = vdwg.mxu0
        %v1017 = vsel %vm570, -3.4028235e+38, %v1011
        %v1018 = vsel %vm571, -3.4028235e+38, %v1014
        %v1019 = vsel %vm625, %v1017, -inf
        %1020 = vmax.xlane.f32.xlu0 %v1019
        %v1021 = vpop.xlane.xlu0 %1020
        %v1022 = vsel %vm625, %v1018, -inf
        %1023 = vmax.xlane.f32.xlu0 %v1022
        %v1024 = vpop.xlane.xlu0 %1023
        %v1025 = vsub.f32 %v1017, %v1021
        %v1026 = vsub.f32 %v1018, %v1024
        %v1027 = vmul.f32 %v1025, 1.442695
        %v1028 = vpow.pop %v1027
        %v1029 = vmul.f32 %v1026, 1.442695
        %v1030 = vpow.pop %v1029
        %v1031 = vsel %vm625, %v1028, 0.0
        %1032 = vadd.xlane.f32.xlu0 %v1031
        %v1033 = vpop.xlane.xlu0 %1032
        %v1034 = vsel %vm625, %v1030, 0.0
        %1035 = vadd.xlane.f32.xlu0 %v1034
        %v1036 = vpop.xlane.xlu0 %1035
        %v1037 = vrcp.pop %v1033
        %v1038 = vrcp.pop %v1036
        %v1039 = vmul.f32 %v1028, %v1037
        %v1040 = vmul.f32 %v1030, %v1038
        %v1041 = vpack.c.bf16 %v1040, %v1039
        %1042 = vrot.lane.b32.xlu0 %v574, 32
        %v1043 = vpop.permute.xlu0 %1042
        %v1046 = vsel %vm625, %v1041, 0
        %1048 = vmatprep.subr.bf16.mxu0 0
        %1049 = vmatpush1.bf16.msra.mxu0 0
        %1050 = vmatprep.subr.bf16.mxu0 0
        %1051 = vmatpush1.bf16.msra.mxu0 0
        %1052 = vmatprep.subr.bf16.mxu0 0
        %1053 = vmatpush1.bf16.msra.mxu0 0
        %1054 = vmatprep.subr.bf16.mxu0 0
        %1055 = vmatpush1.bf16.msra.mxu0 0
        %1056 = vmatprep.subr.bf16.mxu0 0
        %1057 = vmatpush1.bf16.msra.mxu0 0
        %1058 = vmatprep.subr.bf16.mxu0 0
        %1059 = vmatpush1.bf16.msra.mxu0 0
        %1060 = vmatprep.subr.bf16.mxu0 0
        %1061 = vmatpush1.bf16.msra.mxu0 0
        %1062 = vmatprep.subr.bf16.mxu0 0
        %1063 = vmatpush1.bf16.msra.mxu0 %v1043
        %1064 = vmatprep.subr.bf16.mxu0 0
        %1065 = vmatpush2.bf16.msra.mxu0 0
        %1066 = vmatprep.subr.bf16.mxu0 0
        %1067 = vmatpush2.bf16.msra.mxu0 0
        %1068 = vmatprep.subr.bf16.mxu0 0
        %1069 = vmatpush2.bf16.msra.mxu0 0
        %1070 = vmatprep.subr.bf16.mxu0 0
        %1071 = vmatpush2.bf16.msra.mxu0 0
        %1072 = vmatprep.subr.bf16.mxu0 0
        %1073 = vmatpush2.bf16.msra.mxu0 0
        %1074 = vmatprep.subr.bf16.mxu0 0
        %1075 = vmatpush2.bf16.msra.mxu0 0
        %1076 = vmatprep.subr.bf16.mxu0 0
        %1077 = vmatpush2.bf16.msra.mxu0 0
        %1078 = vmatprep.subr.bf16.mxu0 0
        %1079 = vmatpush2.bf16.msra.mxu0 0
        %1080 = vmatprep.mubr.bf16.mxu0 0
        %1081 = vmatmul.mubr.bf16.gmra.mxu0 %v1046
        %v1082 = vpop.f32.mrf.mxu0
        %v1083 = vadd.f32 0.0, %v1082
        %v1084 = vpop.f32.mrf.mxu0
        %v1085 = vpop.f32.mrf.mxu0
        %v1086 = vadd.f32 0.0, %v1085
        %v1087 = vpop.f32.mrf.mxu0
        %1088 = vdwg.mxu0
        %1091 = vrot.lane.b32.xlu0 %v1083, 96
        %v1092 = vpop.permute.xlu0 %1091
        %1093 = vrot.lane.b32.xlu0 %v1086, 96
        %v1094 = vpop.permute.xlu0 %1093
        %vm1097 = vcmask 1048320
        %1098 = vst.msk [vmem:[#allocation2] sm:$0xff] %vm1097, %v1092
        %1099 = vst.msk [vmem:[#allocation2 + $0x8] sm:$0xff] %vm1097, %v1094
        %v1100 = vld [vmem:[#allocation2] sm:$0xff]
        %v1101 = vld [vmem:[#allocation2 + $0x8] sm:$0xff]
        %v1102 = vpack.c.bf16 %v1101, %v1100
        %v1103 = vld [vmem:[#allocation8] sm:$0xf]
        %v1104 = vld [vmem:[#allocation8 + $0x4] sm:$0xf]
        %v1105 = vld [vmem:[#allocation8 + $0x8] sm:$0xf]
        %v1106 = vld [vmem:[#allocation8 + $0xc] sm:$0xf]
        %v1107 = vld [vmem:[#allocation8 + $0x10] sm:$0xf]
        %v1108 = vld [vmem:[#allocation8 + $0x14] sm:$0xf]
        %v1109 = vld [vmem:[#allocation8 + $0x18] sm:$0xf]
        %v1110 = vld [vmem:[#allocation8 + $0x1c] sm:$0xf]
        %v1111 = vld [vmem:[#allocation8 + $0x20] sm:$0xf]
        %v1112 = vld [vmem:[#allocation8 + $0x24] sm:$0xf]
        %v1113 = vld [vmem:[#allocation8 + $0x28] sm:$0xf]
        %v1114 = vld [vmem:[#allocation8 + $0x2c] sm:$0xf]
        %v1115 = vld [vmem:[#allocation8 + $0x30] sm:$0xf]
        %v1116 = vld [vmem:[#allocation8 + $0x34] sm:$0xf]
        %v1117 = vld [vmem:[#allocation8 + $0x38] sm:$0xf]
        %v1118 = vld [vmem:[#allocation8 + $0x3c] sm:$0xf]
        %v1119 = vld [vmem:[%s3] sm:$0x1]
        %v1120 = vunpack.c.l.bf16 %v1119
        %v1121 = vlaneseq
        %v1122 = vshrl.u32 %v1121, 7
        %v1123 = vsub.s32 0, %v1122
        %v1124 = vrot.slane %v1120, %v1123
        %v1141 = vunpack.c.l.b16 %v1103
        %v1142 = vunpack.c.l.b16 %v1104
        %v1143 = vunpack.c.l.b16 %v1105
        %v1144 = vunpack.c.l.b16 %v1106
        %v1145 = vunpack.c.l.b16 %v1107
        %v1146 = vunpack.c.l.b16 %v1108
        %v1147 = vunpack.c.l.b16 %v1109
        %v1148 = vunpack.c.l.b16 %v1110
        %v1149 = vunpack.c.l.b16 %v1111
        %v1150 = vunpack.c.l.b16 %v1112
        %v1151 = vunpack.c.l.b16 %v1113
        %v1152 = vunpack.c.l.b16 %v1114
        %v1153 = vunpack.c.l.b16 %v1115
        %v1154 = vunpack.c.l.b16 %v1116
        %v1155 = vunpack.c.l.b16 %v1117
        %v1156 = vunpack.c.l.b16 %v1118
        %v1157 = vpack.c.b16 %v1142, %v1141
        %v1158 = vpack.c.b16 %v1144, %v1143
        %v1159 = vpack.c.b16 %v1146, %v1145
        %v1160 = vpack.c.b16 %v1148, %v1147
        %v1161 = vpack.c.b16 %v1150, %v1149
        %v1162 = vpack.c.b16 %v1152, %v1151
        %v1163 = vpack.c.b16 %v1154, %v1153
        %v1164 = vpack.c.b16 %v1156, %v1155
        %1173 = vmatprep.subr.bf16.mxu0 0
        %1174 = vmatpush1.bf16.msra.mxu0 %v1164
        %1175 = vmatprep.subr.bf16.mxu0 0
        %1176 = vmatpush1.bf16.msra.mxu0 %v1163
        %1177 = vmatprep.subr.bf16.mxu0 0
        %1178 = vmatpush1.bf16.msra.mxu0 %v1162
        %1179 = vmatprep.subr.bf16.mxu0 0
        %1180 = vmatpush1.bf16.msra.mxu0 %v1161
        %1181 = vmatprep.subr.bf16.mxu0 0
        %1182 = vmatpush1.bf16.msra.mxu0 %v1160
        %1183 = vmatprep.subr.bf16.mxu0 0
        %1184 = vmatpush1.bf16.msra.mxu0 %v1159
        %1185 = vmatprep.subr.bf16.mxu0 0
        %1186 = vmatpush1.bf16.msra.mxu0 %v1158
        %1187 = vmatprep.subr.bf16.mxu0 0
        %1188 = vmatpush1.bf16.msra.mxu0 %v1157
        %1189 = vmatprep.subr.bf16.mxu0 0
        %1190 = vmatpush2.bf16.msra.mxu0 0
        %1191 = vmatprep.subr.bf16.mxu0 0
        %1192 = vmatpush2.bf16.msra.mxu0 0
        %1193 = vmatprep.subr.bf16.mxu0 0
        %1194 = vmatpush2.bf16.msra.mxu0 0
        %1195 = vmatprep.subr.bf16.mxu0 0
        %1196 = vmatpush2.bf16.msra.mxu0 0
        %1197 = vmatprep.subr.bf16.mxu0 0
        %1198 = vmatpush2.bf16.msra.mxu0 0
        %1199 = vmatprep.subr.bf16.mxu0 0
        %1200 = vmatpush2.bf16.msra.mxu0 0
        %1201 = vmatprep.subr.bf16.mxu0 0
        %1202 = vmatpush2.bf16.msra.mxu0 0
        %1203 = vmatprep.subr.bf16.mxu0 0
        %1204 = vmatpush2.bf16.msra.mxu0 0
        %1205 = vmatprep.mubr.bf16.mxu0 0
        %1206 = vmatmul.mubr.bf16.gmra.mxu0 %v1102
        %v1207 = vpop.f32.mrf.mxu0
        %v1208 = vadd.f32 %v1124, %v1207
        %v1209 = vpop.f32.mrf.mxu0
        %v1210 = vpop.f32.mrf.mxu0
        %v1211 = vadd.f32 %v1124, %v1210
        %v1212 = vpop.f32.mrf.mxu0
        %1213 = vdwg.mxu0
        %v1214 = vadd.f32 %v1208, %v314
        %v1215 = vadd.f32 %v1211, %v315
        %1216 = vst [vmem:[%s296] sm:$0xff] %v1214
        %1217 = vst [vmem:[%s296 + $0x8] sm:$0xff] %v1215
        %s1218 = smul.u32 2, %s26
        %p1219 = scmp.lt.s32.totalorder %s25, 1
        %s1220 = scalar_select %p1219, %s25, 1
        %p1221 = scmp.lt.s32.totalorder %s1218, 1
        %s1222 = scalar_select %p1221, %s1218, 1
        %s1223 = smul.addr %s1220, 2
        %s1224 = sadd.s32 %s1222, %s1223
        %s1225 = smul.addr %s1224, 8
        %s1226 = scalar_lea.vmem %s5, %s1225
        // Predicated region
        $region53: #{transformer_forward.6} parent=39 // pred_check
          %p1227 = pneg %p163
        $region54: #{transformer_forward.6} parent=39 // pred_check_branch
          %1229 = sbr.rel (%p1227) target = $region56
        $region55: #{transformer_forward.6} parent=39 // pred_region
          %s1230 = smul.u32 2, %s26
        $region56: #{transformer_forward.6} parent=39 // pred_fallthru
          _
      $region40: #{transformer_forward.6} parent=5 // pred_fallthru
        _
      %p1231 = scmp.le.s32.totalorder 2, %s16
      // Predicated region
      $region57: #{transformer_forward.6} parent=5 // pred_check
        %p1232 = pneg %p1231
      $region58: #{transformer_forward.6} parent=5 // pred_check_branch
        %1234 = sbr.rel (%p1232) target = $region60
      $region59: #{transformer_forward.6} parent=5 // pred_region
        %s1235 = ssub.s32 %s16, 2
        // Predicated region
        $region61: #{transformer_forward.6} parent=59 // pred_check
          %p1236 = pneg %p169
        $region62: #{transformer_forward.6} parent=59 // pred_check_branch
          %1238 = sbr.rel (%p1236) target = $region64
        $region63: #{transformer_forward.6} parent=59 // pred_region
          %s1239 = smul.u32 2, %s28
          %p1240 = scmp.lt.s32.totalorder %s27, 1
          %s1241 = scalar_select %p1240, %s27, 1
          %p1242 = scmp.lt.s32.totalorder %s1239, 1
          %s1243 = scalar_select %p1242, %s1239, 1
          %s1244 = smul.addr %s1241, 2
          %s1245 = sadd.s32 %s1243, %s1244
          %s1246 = smul.addr %s1245, 8
          %s1247 = scalar_lea.vmem %s5, %s1246
        $region64: #{transformer_forward.6} parent=59 // pred_fallthru
          _
      $region60: #{transformer_forward.6} parent=5 // pred_fallthru
        _
    $region6: #{transformer_forward.6} parent=1 // loop_footer
      %s20 = sadd.s32 1, %s16
    $region7: #{transformer_forward.6} parent=1 // loop_footer_branch
      %15 = sbr.rel target = $region3
    $region8: #{transformer_forward.6} parent=1 // loop_exit
      _
    %1248 = vsyncpa [#allocation5], 1
    %s1249 = scalar_lea.sflag [#allocation5], 1
    %1250 = vsyncpa %s1249, 1
    %1251 = vsyncpa [#allocation7], 1

// kernel: transformer_forward.7
$region0: #{transformer_forward.7}
  #allocation0 [shape = 'u32[]', space=smem, size = 0x4, offset = 0x4, fixed_abs, tag = 'smem constant byte address 0x4 - core index']
  #allocation1 [shape = 'u32[144,128]{1,0:T(1,128)}', space=vmem, size = 0x12000, scoped, tag = 'internal scratch']
  #allocation2 [shape = 'f32[16,128]{1,0:T(8,128)}', space=vmem, size = 0x2000, scoped, tag = 'scratch operand']
  #allocation3 [shape = 'f32[1]{0:T(128)S(6)}', space=smem, size = 0x200, scoped, tag = 'scoped memory for transformer_forward.7']
  %s0 = inlined_call_operand.vmem [shape: f32[2,16,128], index: 0, kind: input, shape index: {}]
  %s1 = inlined_call_operand.vmem [shape: bf16[128,384], index: 1, kind: input, shape index: {}]
  %s2 = inlined_call_operand.vmem [shape: bf16[128,128], index: 2, kind: input, shape index: {}]
  %s3 = inlined_call_operand.vmem [shape: bf16[1,128], index: 3, kind: input, shape index: {}]
  %s4 = inlined_call_operand.<no memory space> [shape: f32[1], index: 4, kind: input, shape index: {}]
  %s5 = inlined_call_operand.vmem [shape: f32[2,16,128], index: 5, kind: output, shape index: {}]
  %s6 = sld [smem:[#allocation0]]
  $region53: #{transformer_forward.7} parent=0
    _
  %s8 = ssub.s32 1, %s6
  %s9 = scalar_select 0, %s8, %s6
  %10 = sst [smem:[#allocation3]] %s4
  loop: start=0, step=1, limit=4
  $region2: #{transformer_forward.7} parent=0 // loop_pre_header
    _
  $region3: #{transformer_forward.7} parent=0 // loop_header
    %s12 = sphi 0, %s16
    %p13 = scmp.ge.s32.totalorder %s12, 4
    %s19 = sphi 0, %s31
    %s20 = sphi 0, %s27
    %s21 = sphi 0, %s19
    %s22 = sphi 0, %s20
    %s23 = sphi 0, %s21
    %s24 = sphi 0, %s22
    %s34 = sphi 0, %s36
    %s37 = sphi 0, %s34
    %s38 = sphi 0, %s37
    %s54 = sphi 0, %s38
    %s58 = sphi 0, %s58
    %s60 = sphi 0, %s58
    %s61 = sphi 0, %s60
    %s75 = sphi 0, %s61
    %s79 = sphi 0, %s79
    %s81 = sphi 0, %s79
    %s82 = sphi 0, %s81
    %s96 = sphi 0, %s82
    %s100 = sphi 0, %s100
    %s102 = sphi 0, %s100
    %s103 = sphi 0, %s102
    %s117 = sphi 0, %s103
    %s121 = sphi 0, %s121
    %s123 = sphi 0, %s121
    %s124 = sphi 0, %s123
    %s138 = sphi 0, %s124
    %s146 = sphi 0, %s148
    %s149 = sphi 0, %s146
    %s150 = sphi 0, %s149
    %s166 = sphi 0, %s150
  $region4: #{transformer_forward.7} parent=0 // loop_header_branch
    %15 = sbr.rel (%p13) target = $region8
  $region5: #{transformer_forward.7} parent=0 // loop_body
    %s17 = ssub.s32 %s12, 1
    %s18 = ssub.s32 %s12, 2
    %s25 = sadd.s32 1, %s20
    %p26 = scmp.ge.s32.totalorder %s25, 1
    %s27 = scalar_select %p26, 0, %s25
    %s28 = sadd.s32 1, %s19
    %s29 = scalar_select %p26, %s28, %s19
    %p30 = scmp.ge.s32.totalorder %s29, 2
    %s31 = scalar_select %p30, 0, %s29
    %s32 = ssub.s32 %s19, %s31
    %p33 = scmp.eq.s32.totalorder %s32, 0
    %s35 = sadd.s32 %s34, 1
    %s36 = scalar_select %p33, %s34, %s35
    %p39 = pneg %p33
    %p40 = scmp.eq.s32.totalorder %s12, 1
    %p41 = por %p39, %p40
    %p42 = scmp.ne.s32.totalorder %s34, %s37
    %p43 = scmp.eq.s32.totalorder %s12, 0
    %p44 = por %p42, %p43
    %p45 = scmp.ne.s32.totalorder %s34, %s37
    %p46 = scmp.eq.s32.totalorder %s17, 1
    %p47 = por %p45, %p46
    %p48 = scmp.ne.s32.totalorder %s37, %s38
    %p49 = scmp.eq.s32.totalorder %s17, 0
    %p50 = por %p48, %p49
    %p51 = scmp.ne.s32.totalorder %s37, %s38
    %p52 = scmp.eq.s32.totalorder %s18, 1
    %p53 = por %p51, %p52
    %p55 = scmp.ne.s32.totalorder %s38, %s54
    %p56 = scmp.eq.s32.totalorder %s18, 0
    %p57 = por %p55, %p56
    %s59 = sadd.s32 %s58, 1
    %p62 = scmp.eq.s32.totalorder %s12, 1
    %p63 = scmp.ne.s32.totalorder %s58, %s60
    %p64 = scmp.eq.s32.totalorder %s12, 0
    %p65 = por %p63, %p64
    %p66 = scmp.ne.s32.totalorder %s58, %s60
    %p67 = scmp.eq.s32.totalorder %s17, 1
    %p68 = por %p66, %p67
    %p69 = scmp.ne.s32.totalorder %s60, %s61
    %p70 = scmp.eq.s32.totalorder %s17, 0
    %p71 = por %p69, %p70
    %p72 = scmp.ne.s32.totalorder %s60, %s61
    %p73 = scmp.eq.s32.totalorder %s18, 1
    %p74 = por %p72, %p73
    %p76 = scmp.ne.s32.totalorder %s61, %s75
    %p77 = scmp.eq.s32.totalorder %s18, 0
    %p78 = por %p76, %p77
    %s80 = sadd.s32 %s79, 1
    %p83 = scmp.eq.s32.totalorder %s12, 1
    %p84 = scmp.ne.s32.totalorder %s79, %s81
    %p85 = scmp.eq.s32.totalorder %s12, 0
    %p86 = por %p84, %p85
    %p87 = scmp.ne.s32.totalorder %s79, %s81
    %p88 = scmp.eq.s32.totalorder %s17, 1
    %p89 = por %p87, %p88
    %p90 = scmp.ne.s32.totalorder %s81, %s82
    %p91 = scmp.eq.s32.totalorder %s17, 0
    %p92 = por %p90, %p91
    %p93 = scmp.ne.s32.totalorder %s81, %s82
    %p94 = scmp.eq.s32.totalorder %s18, 1
    %p95 = por %p93, %p94
    %p97 = scmp.ne.s32.totalorder %s82, %s96
    %p98 = scmp.eq.s32.totalorder %s18, 0
    %p99 = por %p97, %p98
    %s101 = sadd.s32 %s100, 1
    %p104 = scmp.eq.s32.totalorder %s12, 1
    %p105 = scmp.ne.s32.totalorder %s100, %s102
    %p106 = scmp.eq.s32.totalorder %s12, 0
    %p107 = por %p105, %p106
    %p108 = scmp.ne.s32.totalorder %s100, %s102
    %p109 = scmp.eq.s32.totalorder %s17, 1
    %p110 = por %p108, %p109
    %p111 = scmp.ne.s32.totalorder %s102, %s103
    %p112 = scmp.eq.s32.totalorder %s17, 0
    %p113 = por %p111, %p112
    %p114 = scmp.ne.s32.totalorder %s102, %s103
    %p115 = scmp.eq.s32.totalorder %s18, 1
    %p116 = por %p114, %p115
    %p118 = scmp.ne.s32.totalorder %s103, %s117
    %p119 = scmp.eq.s32.totalorder %s18, 0
    %p120 = por %p118, %p119
    %s122 = sadd.s32 %s121, 1
    %p125 = scmp.eq.s32.totalorder %s12, 1
    %p126 = scmp.ne.s32.totalorder %s121, %s123
    %p127 = scmp.eq.s32.totalorder %s12, 0
    %p128 = por %p126, %p127
    %p129 = scmp.ne.s32.totalorder %s121, %s123
    %p130 = scmp.eq.s32.totalorder %s17, 1
    %p131 = por %p129, %p130
    %p132 = scmp.ne.s32.totalorder %s123, %s124
    %p133 = scmp.eq.s32.totalorder %s17, 0
    %p134 = por %p132, %p133
    %p135 = scmp.ne.s32.totalorder %s123, %s124
    %p136 = scmp.eq.s32.totalorder %s18, 1
    %p137 = por %p135, %p136
    %p139 = scmp.ne.s32.totalorder %s124, %s138
    %p140 = scmp.eq.s32.totalorder %s18, 0
    %p141 = por %p139, %p140
    %s142 = ssub.s32 %s19, %s31
    %s143 = ssub.s32 %s20, %s27
    %s144 = sor.u32 %s142, %s143
    %p145 = scmp.eq.s32.totalorder %s144, 0
    %s147 = sadd.s32 %s146, 1
    %s148 = scalar_select %p145, %s146, %s147
    %p151 = pneg %p145
    %p152 = scmp.eq.s32.totalorder %s12, 1
    %p153 = por %p151, %p152
    %p154 = scmp.ne.s32.totalorder %s146, %s149
    %p155 = scmp.eq.s32.totalorder %s12, 0
    %p156 = por %p154, %p155
    %p157 = scmp.ne.s32.totalorder %s146, %s149
    %p158 = scmp.eq.s32.totalorder %s17, 1
    %p159 = por %p157, %p158
    %p160 = scmp.ne.s32.totalorder %s149, %s150
    %p161 = scmp.eq.s32.totalorder %s17, 0
    %p162 = por %p160, %p161
    %p163 = scmp.ne.s32.totalorder %s149, %s150
    %p164 = scmp.eq.s32.totalorder %s18, 1
    %p165 = por %p163, %p164
    %p167 = scmp.ne.s32.totalorder %s150, %s166
    %p168 = scmp.eq.s32.totalorder %s18, 0
    %p169 = por %p167, %p168
    %p170 = scmp.le.s32.totalorder 1, %s12
    %p171 = scmp.lt.s32.totalorder %s12, 3
    %p172 = pnand %p170, %p171
    %p173 = pneg %p172
    // Predicated region
    $region9: #{transformer_forward.7} parent=5 // pred_check
      _
    $region10: #{transformer_forward.7} parent=5 // pred_check_branch
      %175 = sbr.rel (%p172) target = $region12
    $region11: #{transformer_forward.7} parent=5 // pred_region
      %s176 = ssub.s32 %s12, 1
      // Predicated region
      $region13: #{transformer_forward.7} parent=11 // pred_check
        %p177 = pneg %p71
      $region14: #{transformer_forward.7} parent=11 // pred_check_branch
        %179 = sbr.rel (%p177) target = $region16
      $region15: #{transformer_forward.7} parent=11 // pred_region
        _
      $region16: #{transformer_forward.7} parent=11 // pred_fallthru
        _
      // Predicated region
      $region17: #{transformer_forward.7} parent=11 // pred_check
        %p180 = pneg %p92
      $region18: #{transformer_forward.7} parent=11 // pred_check_branch
        %182 = sbr.rel (%p180) target = $region20
      $region19: #{transformer_forward.7} parent=11 // pred_region
        _
      $region20: #{transformer_forward.7} parent=11 // pred_fallthru
        _
      // Predicated region
      $region21: #{transformer_forward.7} parent=11 // pred_check
        %p183 = pneg %p113
      $region22: #{transformer_forward.7} parent=11 // pred_check_branch
        %185 = sbr.rel (%p183) target = $region24
      $region23: #{transformer_forward.7} parent=11 // pred_region
        _
      $region24: #{transformer_forward.7} parent=11 // pred_fallthru
        _
      // Predicated region
      $region25: #{transformer_forward.7} parent=11 // pred_check
        %p186 = pneg %p134
      $region26: #{transformer_forward.7} parent=11 // pred_check_branch
        %188 = sbr.rel (%p186) target = $region28
      $region27: #{transformer_forward.7} parent=11 // pred_region
        _
      $region28: #{transformer_forward.7} parent=11 // pred_fallthru
        _
    $region12: #{transformer_forward.7} parent=5 // pred_fallthru
      _
    %p189 = scmp.lt.s32.totalorder %s12, 2
    // Predicated region
    $region29: #{transformer_forward.7} parent=5 // pred_check
      %p190 = pneg %p189
    $region30: #{transformer_forward.7} parent=5 // pred_check_branch
      %192 = sbr.rel (%p190) target = $region32
    $region31: #{transformer_forward.7} parent=5 // pred_region
      // Predicated region
      $region33: #{transformer_forward.7} parent=31 // pred_check
        %p193 = pneg %p44
      $region34: #{transformer_forward.7} parent=31 // pred_check_branch
        %195 = sbr.rel (%p193) target = $region36
      $region35: #{transformer_forward.7} parent=31 // pred_region
        %p196 = scmp.lt.s32.totalorder %s19, 1
        %s197 = scalar_select %p196, %s19, 1
        %s198 = smul.addr %s197, 2
        %s199 = smul.addr %s198, 8
        %s200 = scalar_lea.vmem %s0, %s199
      $region36: #{transformer_forward.7} parent=31 // pred_fallthru
        _
    $region32: #{transformer_forward.7} parent=5 // pred_fallthru
      _
    %p201 = scmp.le.s32.totalorder 1, %s12
    %p202 = scmp.lt.s32.totalorder %s12, 3
    %p203 = pnand %p201, %p202
    %p204 = pneg %p203
    // Predicated region
    $region37: #{transformer_forward.7} parent=5 // pred_check
      _
    $region38: #{transformer_forward.7} parent=5 // pred_check_branch
      %206 = sbr.rel (%p203) target = $region40
    $region39: #{transformer_forward.7} parent=5 // pred_region
      %s207 = ssub.s32 %s12, 1
      %p208 = scmp.lt.s32.totalorder %s21, 1
      %s209 = scalar_select %p208, %s21, 1
      %s210 = smul.addr %s209, 2
      %s211 = smul.addr %s210, 8
      %s212 = scalar_lea.vmem %s0, %s211
      %p213 = pneg %p50
      %p214 = pneg %p47
      %p215 = pneg %p71
      %p216 = pneg %p68
      %p217 = pneg %p92
      %p218 = pneg %p89
      %p219 = pneg %p113
      %p220 = pneg %p110
      %p221 = pneg %p134
      %p222 = pneg %p131
      %p223 = pneg %p162
      %p224 = pneg %p159
      %s225 = smul.u32 2, %s22
      %p226 = scmp.lt.s32.totalorder %s21, 1
      %s227 = scalar_select %p226, %s21, 1
      %p228 = scmp.lt.s32.totalorder %s225, 1
      %s229 = scalar_select %p228, %s225, 1
      %s230 = smul.addr %s227, 2
      %s231 = sadd.s32 %s229, %s230
      %s232 = smul.addr %s231, 8
      %s233 = scalar_lea.vmem %s5, %s232
      %p234 = scmp.lt.s32.totalorder %s21, 1
      %s235 = scalar_select %p234, %s21, 1
      %s236 = smul.addr %s235, 2
      %s237 = smul.addr %s236, 8
      %s238 = scalar_lea.vmem %s0, %s237
      %s239 = smul.u32 2, %s22
      %p240 = scmp.lt.s32.totalorder %s21, 1
      %s241 = scalar_select %p240, %s21, 1
      %p242 = scmp.lt.s32.totalorder %s239, 1
      %s243 = scalar_select %p242, %s239, 1
      %s244 = smul.addr %s241, 2
      %s245 = sadd.s32 %s243, %s244
      %s246 = smul.addr %s245, 8
      %s247 = scalar_lea.vmem %s5, %s246
      %s248 = smul.u32 2, %s22
      %v250 = vld [vmem:[%s238] sm:$0xff]
      %v251 = vld [vmem:[%s238 + $0x8] sm:$0xff]
      %v252 = vmul.f32 %v250, %v250
      %v253 = vmul.f32 %v251, %v251
      %254 = vadd.xlane.f32.xlu0 %v252
      %v255 = vpop.xlane.xlu0 %254
      %256 = vadd.xlane.f32.xlu0 %v253
      %v257 = vpop.xlane.xlu0 %256
      %v258 = vrcp.pop 128.0
      %v259 = vmul.f32 %v255, %v258
      %v260 = vmul.f32 %v257, %v258
      %v261 = vadd.f32 %v259, 1e-06
      %v262 = vadd.f32 %v260, 1e-06
      %v263 = vrsqrt.pop %v261
      %v264 = vrsqrt.pop %v262
      %v265 = vmul.f32 %v250, %v263
      %v266 = vmul.f32 %v251, %v264
      %v267 = vpack.c.bf16 %v266, %v265
      %v268 = vld [vmem:[%s1] sm:$0xf]
      %v269 = vld [vmem:[%s1 + $0xc] sm:$0xf]
      %v270 = vld [vmem:[%s1 + $0x18] sm:$0xf]
      %v271 = vld [vmem:[%s1 + $0x24] sm:$0xf]
      %v272 = vld [vmem:[%s1 + $0x30] sm:$0xf]
      %v273 = vld [vmem:[%s1 + $0x3c] sm:$0xf]
      %v274 = vld [vmem:[%s1 + $0x48] sm:$0xf]
      %v275 = vld [vmem:[%s1 + $0x54] sm:$0xf]
      %v276 = vld [vmem:[%s1 + $0x60] sm:$0xf]
      %v277 = vld [vmem:[%s1 + $0x6c] sm:$0xf]
      %v278 = vld [vmem:[%s1 + $0x78] sm:$0xf]
      %v279 = vld [vmem:[%s1 + $0x84] sm:$0xf]
      %v280 = vld [vmem:[%s1 + $0x90] sm:$0xf]
      %v281 = vld [vmem:[%s1 + $0x9c] sm:$0xf]
      %v282 = vld [vmem:[%s1 + $0xa8] sm:$0xf]
      %v283 = vld [vmem:[%s1 + $0xb4] sm:$0xf]
      %v300 = vunpack.c.l.b16 %v268
      %v301 = vunpack.c.l.b16 %v269
      %v302 = vunpack.c.l.b16 %v270
      %v303 = vunpack.c.l.b16 %v271
      %v304 = vunpack.c.l.b16 %v272
      %v305 = vunpack.c.l.b16 %v273
      %v306 = vunpack.c.l.b16 %v274
      %v307 = vunpack.c.l.b16 %v275
      %v308 = vunpack.c.l.b16 %v276
      %v309 = vunpack.c.l.b16 %v277
      %v310 = vunpack.c.l.b16 %v278
      %v311 = vunpack.c.l.b16 %v279
      %v312 = vunpack.c.l.b16 %v280
      %v313 = vunpack.c.l.b16 %v281
      %v314 = vunpack.c.l.b16 %v282
      %v315 = vunpack.c.l.b16 %v283
      %v316 = vpack.c.b16 %v301, %v300
      %v317 = vpack.c.b16 %v303, %v302
      %v318 = vpack.c.b16 %v305, %v304
      %v319 = vpack.c.b16 %v307, %v306
      %v320 = vpack.c.b16 %v309, %v308
      %v321 = vpack.c.b16 %v311, %v310
      %v322 = vpack.c.b16 %v313, %v312
      %v323 = vpack.c.b16 %v315, %v314
      %332 = vmatprep.subr.bf16.mxu0 0
      %333 = vmatpush1.bf16.msra.mxu0 %v323
      %334 = vmatprep.subr.bf16.mxu0 0
      %335 = vmatpush1.bf16.msra.mxu0 %v322
      %336 = vmatprep.subr.bf16.mxu0 0
      %337 = vmatpush1.bf16.msra.mxu0 %v321
      %338 = vmatprep.subr.bf16.mxu0 0
      %339 = vmatpush1.bf16.msra.mxu0 %v320
      %340 = vmatprep.subr.bf16.mxu0 0
      %341 = vmatpush1.bf16.msra.mxu0 %v319
      %342 = vmatprep.subr.bf16.mxu0 0
      %343 = vmatpush1.bf16.msra.mxu0 %v318
      %344 = vmatprep.subr.bf16.mxu0 0
      %345 = vmatpush1.bf16.msra.mxu0 %v317
      %346 = vmatprep.subr.bf16.mxu0 0
      %347 = vmatpush1.bf16.msra.mxu0 %v316
      %348 = vmatprep.subr.bf16.mxu0 0
      %349 = vmatpush2.bf16.msra.mxu0 0
      %350 = vmatprep.subr.bf16.mxu0 0
      %351 = vmatpush2.bf16.msra.mxu0 0
      %352 = vmatprep.subr.bf16.mxu0 0
      %353 = vmatpush2.bf16.msra.mxu0 0
      %354 = vmatprep.subr.bf16.mxu0 0
      %355 = vmatpush2.bf16.msra.mxu0 0
      %356 = vmatprep.subr.bf16.mxu0 0
      %357 = vmatpush2.bf16.msra.mxu0 0
      %358 = vmatprep.subr.bf16.mxu0 0
      %359 = vmatpush2.bf16.msra.mxu0 0
      %360 = vmatprep.subr.bf16.mxu0 0
      %361 = vmatpush2.bf16.msra.mxu0 0
      %362 = vmatprep.subr.bf16.mxu0 0
      %363 = vmatpush2.bf16.msra.mxu0 0
      %364 = vmatprep.mubr.bf16.mxu0 0
      %365 = vmatmul.mubr.bf16.gmra.mxu0 %v267
      %v366 = vpop.f32.mrf.mxu0
      %v367 = vadd.f32 0.0, %v366
      %v368 = vpop.f32.mrf.mxu0
      %v369 = vpop.f32.mrf.mxu0
      %v370 = vadd.f32 0.0, %v369
      %v371 = vpop.f32.mrf.mxu0
      %372 = vdwg.mxu0
      %v373 = vld [vmem:[%s1 + $0x4] sm:$0xff]
      %v374 = vld [vmem:[%s1 + $0x10] sm:$0xff]
      %v375 = vld [vmem:[%s1 + $0x1c] sm:$0xff]
      %v376 = vld [vmem:[%s1 + $0x28] sm:$0xff]
      %v377 = vld [vmem:[%s1 + $0x34] sm:$0xff]
      %v378 = vld [vmem:[%s1 + $0x40] sm:$0xff]
      %v379 = vld [vmem:[%s1 + $0x4c] sm:$0xff]
      %v380 = vld [vmem:[%s1 + $0x58] sm:$0xff]
      %v381 = vld [vmem:[%s1 + $0x64] sm:$0xff]
      %v382 = vld [vmem:[%s1 + $0x70] sm:$0xff]
      %v383 = vld [vmem:[%s1 + $0x7c] sm:$0xff]
      %v384 = vld [vmem:[%s1 + $0x88] sm:$0xff]
      %v385 = vld [vmem:[%s1 + $0x94] sm:$0xff]
      %v386 = vld [vmem:[%s1 + $0xa0] sm:$0xff]
      %v387 = vld [vmem:[%s1 + $0xac] sm:$0xff]
      %v388 = vld [vmem:[%s1 + $0xb8] sm:$0xff]
      %v405 = vunpack.c.l.b16 %v373
      %v406 = vunpack.c.h.b16 %v373
      %v407 = vunpack.c.l.b16 %v374
      %v408 = vunpack.c.h.b16 %v374
      %v409 = vunpack.c.l.b16 %v375
      %v410 = vunpack.c.h.b16 %v375
      %v411 = vunpack.c.l.b16 %v376
      %v412 = vunpack.c.h.b16 %v376
      %v413 = vunpack.c.l.b16 %v377
      %v414 = vunpack.c.h.b16 %v377
      %v415 = vunpack.c.l.b16 %v378
      %v416 = vunpack.c.h.b16 %v378
      %v417 = vunpack.c.l.b16 %v379
      %v418 = vunpack.c.h.b16 %v379
      %v419 = vunpack.c.l.b16 %v380
      %v420 = vunpack.c.h.b16 %v380
      %v421 = vunpack.c.l.b16 %v381
      %v422 = vunpack.c.h.b16 %v381
      %v423 = vunpack.c.l.b16 %v382
      %v424 = vunpack.c.h.b16 %v382
      %v425 = vunpack.c.l.b16 %v383
      %v426 = vunpack.c.h.b16 %v383
      %v427 = vunpack.c.l.b16 %v384
      %v428 = vunpack.c.h.b16 %v384
      %v429 = vunpack.c.l.b16 %v385
      %v430 = vunpack.c.h.b16 %v385
      %v431 = vunpack.c.l.b16 %v386
      %v432 = vunpack.c.h.b16 %v386
      %v433 = vunpack.c.l.b16 %v387
      %v434 = vunpack.c.h.b16 %v387
      %v435 = vunpack.c.l.b16 %v388
      %v436 = vunpack.c.h.b16 %v388
      %v437 = vpack.c.b16 %v407, %v405
      %v438 = vpack.c.b16 %v408, %v406
      %v439 = vpack.c.b16 %v411, %v409
      %v440 = vpack.c.b16 %v412, %v410
      %v441 = vpack.c.b16 %v415, %v413
      %v442 = vpack.c.b16 %v416, %v414
      %v443 = vpack.c.b16 %v419, %v417
      %v444 = vpack.c.b16 %v420, %v418
      %v445 = vpack.c.b16 %v423, %v421
      %v446 = vpack.c.b16 %v424, %v422
      %v447 = vpack.c.b16 %v427, %v425
      %v448 = vpack.c.b16 %v428, %v426
      %v449 = vpack.c.b16 %v431, %v429
      %v450 = vpack.c.b16 %v432, %v430
      %v451 = vpack.c.b16 %v435, %v433
      %v452 = vpack.c.b16 %v436, %v434
      %469 = vmatprep.subr.bf16.mxu0 %v452
      %470 = vmatpush1.bf16.msra.mxu0 %v451
      %471 = vmatprep.subr.bf16.mxu0 %v450
      %472 = vmatpush1.bf16.msra.mxu0 %v449
      %473 = vmatprep.subr.bf16.mxu0 %v448
      %474 = vmatpush1.bf16.msra.mxu0 %v447
      %475 = vmatprep.subr.bf16.mxu0 %v446
      %476 = vmatpush1.bf16.msra.mxu0 %v445
      %477 = vmatprep.subr.bf16.mxu0 %v444
      %478 = vmatpush1.bf16.msra.mxu0 %v443
      %479 = vmatprep.subr.bf16.mxu0 %v442
      %480 = vmatpush1.bf16.msra.mxu0 %v441
      %481 = vmatprep.subr.bf16.mxu0 %v440
      %482 = vmatpush1.bf16.msra.mxu0 %v439
      %483 = vmatprep.subr.bf16.mxu0 %v438
      %484 = vmatpush1.bf16.msra.mxu0 %v437
      %485 = vmatprep.subr.bf16.mxu0 0
      %486 = vmatpush2.bf16.msra.mxu0 0
      %487 = vmatprep.subr.bf16.mxu0 0
      %488 = vmatpush2.bf16.msra.mxu0 0
      %489 = vmatprep.subr.bf16.mxu0 0
      %490 = vmatpush2.bf16.msra.mxu0 0
      %491 = vmatprep.subr.bf16.mxu0 0
      %492 = vmatpush2.bf16.msra.mxu0 0
      %493 = vmatprep.subr.bf16.mxu0 0
      %494 = vmatpush2.bf16.msra.mxu0 0
      %495 = vmatprep.subr.bf16.mxu0 0
      %496 = vmatpush2.bf16.msra.mxu0 0
      %497 = vmatprep.subr.bf16.mxu0 0
      %498 = vmatpush2.bf16.msra.mxu0 0
      %499 = vmatprep.subr.bf16.mxu0 0
      %500 = vmatpush2.bf16.msra.mxu0 0
      %501 = vmatprep.mubr.bf16.mxu0 0
      %502 = vmatmul.mubr.bf16.gmra.mxu0 %v267
      %v503 = vpop.f32.mrf.mxu0
      %v504 = vadd.f32 0.0, %v503
      %v505 = vpop.f32.mrf.mxu0
      %v506 = vadd.f32 0.0, %v505
      %v507 = vpop.f32.mrf.mxu0
      %v508 = vadd.f32 0.0, %v507
      %v509 = vpop.f32.mrf.mxu0
      %v510 = vadd.f32 0.0, %v509
      %511 = vdwg.mxu0
      %s512 = sld [smem:[#allocation3]]
      %v513 = vstv %s512
      %v514 = vmul.f32 %v367, %v513
      %v515 = vmul.f32 %v370, %v513
      %v516 = vlaneseq
      %v517 = vshrl.u32 %v516, 7
      %v518 = vadd.s32 %v517, 8
      %v519 = vlaneseq
      %v520 = vand.u32 %v519, 127
      %vm521 = vcmp.eq.s32.totalorder %v517, %v520
      %vm522 = vcmp.eq.s32.totalorder %v518, %v520
      %v523 = vpack.c.bf16 %v515, %v514
      %v524 = vpack.c.bf16 %v508, %v504
      %v525 = vpack.c.bf16 %v510, %v506
      %vm526 = vcmask 261120
      %v528 = vsel %vm526, %v523, 0
      %v531 = vsel %vm526, %v524, 0
      %533 = vmatprep.subr.bf16.mxu0 0
      %534 = vmatpush1.bf16.xpose.msra.mxu0 0
      %535 = vmatprep.subr.bf16.mxu0 0
      %536 = vmatpush1.bf16.xpose.msra.mxu0 0
      %537 = vmatprep.subr.bf16.mxu0 0
      %538 = vmatpush1.bf16.xpose.msra.mxu0 0
      %539 = vmatprep.subr.bf16.mxu0 0
      %540 = vmatpush1.bf16.xpose.msra.mxu0 0
      %541 = vmatprep.subr.bf16.mxu0 0
      %542 = vmatpush1.bf16.xpose.msra.mxu0 0
      %543 = vmatprep.subr.bf16.mxu0 0
      %544 = vmatpush1.bf16.xpose.msra.mxu0 0
      %545 = vmatprep.subr.bf16.mxu0 0
      %546 = vmatpush1.bf16.xpose.msra.mxu0 0
      %547 = vmatprep.subr.bf16.mxu0 0
      %548 = vmatpush1.bf16.xpose.msra.mxu0 %v531
      %549 = vmatprep.subr.bf16.mxu0 0
      %550 = vmatpush2.bf16.xpose.msra.mxu0 0
      %551 = vmatprep.subr.bf16.mxu0 0
      %552 = vmatpush2.bf16.xpose.msra.mxu0 0
      %553 = vmatprep.subr.bf16.mxu0 0
      %554 = vmatpush2.bf16.xpose.msra.mxu0 0
      %555 = vmatprep.subr.bf16.mxu0 0
      %556 = vmatpush2.bf16.xpose.msra.mxu0 0
      %557 = vmatprep.subr.bf16.mxu0 0
      %558 = vmatpush2.bf16.xpose.msra.mxu0 0
      %559 = vmatprep.subr.bf16.mxu0 0
      %560 = vmatpush2.bf16.xpose.msra.mxu0 0
      %561 = vmatprep.subr.bf16.mxu0 0
      %562 = vmatpush2.bf16.xpose.msra.mxu0 0
      %563 = vmatprep.subr.bf16.mxu0 0
      %564 = vmatpush2.bf16.xpose.msra.mxu0 0
      %565 = vmatprep.mubr.bf16.mxu0 0
      %566 = vmatmul.mubr.bf16.gmra.mxu0 %v528
      %v567 = vpop.f32.mrf.mxu0
      %v568 = vadd.f32 0.0, %v567
      %v569 = vpop.f32.mrf.mxu0
      %v570 = vpop.f32.mrf.mxu0
      %v571 = vadd.f32 0.0, %v570
      %v572 = vpop.f32.mrf.mxu0
      %573 = vdwg.mxu0
      %v574 = vsel %vm521, -3.4028235e+38, %v568
      %v575 = vsel %vm522, -3.4028235e+38, %v571
      %vm576 = vcmask 130048
      %v577 = vsel %vm576, %v574, -inf
      %578 = vmax.xlane.f32.xlu0 %v577
      %v579 = vpop.xlane.xlu0 %578
      %v580 = vsel %vm576, %v575, -inf
      %581 = vmax.xlane.f32.xlu0 %v580
      %v582 = vpop.xlane.xlu0 %581
      %v583 = vsub.f32 %v574, %v579
      %v584 = vsub.f32 %v575, %v582
      %v585 = vmul.f32 %v583, 1.442695
      %v586 = vpow.pop %v585
      %v587 = vmul.f32 %v584, 1.442695
      %v588 = vpow.pop %v587
      %v589 = vsel %vm576, %v586, 0.0
      %590 = vadd.xlane.f32.xlu0 %v589
      %v591 = vpop.xlane.xlu0 %590
      %v592 = vsel %vm576, %v588, 0.0
      %593 = vadd.xlane.f32.xlu0 %v592
      %v594 = vpop.xlane.xlu0 %593
      %v595 = vrcp.pop %v591
      %v596 = vrcp.pop %v594
      %v597 = vmul.f32 %v586, %v595
      %v598 = vmul.f32 %v588, %v596
      %v599 = vpack.c.bf16 %v598, %v597
      %v601 = vsel %vm576, %v599, 0
      %603 = vmatprep.subr.bf16.mxu0 0
      %604 = vmatpush1.bf16.msra.mxu0 0
      %605 = vmatprep.subr.bf16.mxu0 0
      %606 = vmatpush1.bf16.msra.mxu0 0
      %607 = vmatprep.subr.bf16.mxu0 0
      %608 = vmatpush1.bf16.msra.mxu0 0
      %609 = vmatprep.subr.bf16.mxu0 0
      %610 = vmatpush1.bf16.msra.mxu0 0
      %611 = vmatprep.subr.bf16.mxu0 0
      %612 = vmatpush1.bf16.msra.mxu0 0
      %613 = vmatprep.subr.bf16.mxu0 0
      %614 = vmatpush1.bf16.msra.mxu0 0
      %615 = vmatprep.subr.bf16.mxu0 0
      %616 = vmatpush1.bf16.msra.mxu0 0
      %617 = vmatprep.subr.bf16.mxu0 0
      %618 = vmatpush1.bf16.msra.mxu0 %v525
      %619 = vmatprep.subr.bf16.mxu0 0
      %620 = vmatpush2.bf16.msra.mxu0 0
      %621 = vmatprep.subr.bf16.mxu0 0
      %622 = vmatpush2.bf16.msra.mxu0 0
      %623 = vmatprep.subr.bf16.mxu0 0
      %624 = vmatpush2.bf16.msra.mxu0 0
      %625 = vmatprep.subr.bf16.mxu0 0
      %626 = vmatpush2.bf16.msra.mxu0 0
      %627 = vmatprep.subr.bf16.mxu0 0
      %628 = vmatpush2.bf16.msra.mxu0 0
      %629 = vmatprep.subr.bf16.mxu0 0
      %630 = vmatpush2.bf16.msra.mxu0 0
      %631 = vmatprep.subr.bf16.mxu0 0
      %632 = vmatpush2.bf16.msra.mxu0 0
      %633 = vmatprep.subr.bf16.mxu0 0
      %634 = vmatpush2.bf16.msra.mxu0 0
      %635 = vmatprep.mubr.bf16.mxu0 0
      %636 = vmatmul.mubr.bf16.gmra.mxu0 %v601
      %v637 = vpop.f32.mrf.mxu0
      %v638 = vadd.f32 0.0, %v637
      %v639 = vpop.f32.mrf.mxu0
      %v640 = vpop.f32.mrf.mxu0
      %v641 = vadd.f32 0.0, %v640
      %v642 = vpop.f32.mrf.mxu0
      %643 = vdwg.mxu0
      %644 = vst.msk [vmem:[#allocation2] sm:$0xff] %vm526, %v638
      %645 = vst.msk [vmem:[#allocation2 + $0x8] sm:$0xff] %vm526, %v641
      %647 = vrot.lane.b32.xlu0 %v523, 96
      %v648 = vpop.permute.xlu0 %647
      %650 = vrot.lane.b32.xlu0 %v524, 96
      %v651 = vpop.permute.xlu0 %650
      %v653 = vsel %vm526, %v648, 0
      %v656 = vsel %vm526, %v651, 0
      %658 = vmatprep.subr.bf16.mxu0 0
      %659 = vmatpush1.bf16.xpose.msra.mxu0 0
      %660 = vmatprep.subr.bf16.mxu0 0
      %661 = vmatpush1.bf16.xpose.msra.mxu0 0
      %662 = vmatprep.subr.bf16.mxu0 0
      %663 = vmatpush1.bf16.xpose.msra.mxu0 0
      %664 = vmatprep.subr.bf16.mxu0 0
      %665 = vmatpush1.bf16.xpose.msra.mxu0 0
      %666 = vmatprep.subr.bf16.mxu0 0
      %667 = vmatpush1.bf16.xpose.msra.mxu0 0
      %668 = vmatprep.subr.bf16.mxu0 0
      %669 = vmatpush1.bf16.xpose.msra.mxu0 0
      %670 = vmatprep.subr.bf16.mxu0 0
      %671 = vmatpush1.bf16.xpose.msra.mxu0 0
      %672 = vmatprep.subr.bf16.mxu0 0
      %673 = vmatpush1.bf16.xpose.msra.mxu0 %v656
      %674 = vmatprep.subr.bf16.mxu0 0
      %675 = vmatpush2.bf16.xpose.msra.mxu0 0
      %676 = vmatprep.subr.bf16.mxu0 0
      %677 = vmatpush2.bf16.xpose.msra.mxu0 0
      %678 = vmatprep.subr.bf16.mxu0 0
      %679 = vmatpush2.bf16.xpose.msra.mxu0 0
      %680 = vmatprep.subr.bf16.mxu0 0
      %681 = vmatpush2.bf16.xpose.msra.mxu0 0
      %682 = vmatprep.subr.bf16.mxu0 0
      %683 = vmatpush2.bf16.xpose.msra.mxu0 0
      %684 = vmatprep.subr.bf16.mxu0 0
      %685 = vmatpush2.bf16.xpose.msra.mxu0 0
      %686 = vmatprep.subr.bf16.mxu0 0
      %687 = vmatpush2.bf16.xpose.msra.mxu0 0
      %688 = vmatprep.subr.bf16.mxu0 0
      %689 = vmatpush2.bf16.xpose.msra.mxu0 0
      %690 = vmatprep.mubr.bf16.mxu0 0
      %691 = vmatmul.mubr.bf16.gmra.mxu0 %v653
      %v692 = vpop.f32.mrf.mxu0
      %v693 = vadd.f32 0.0, %v692
      %v694 = vpop.f32.mrf.mxu0
      %v695 = vpop.f32.mrf.mxu0
      %v696 = vadd.f32 0.0, %v695
      %v697 = vpop.f32.mrf.mxu0
      %698 = vdwg.mxu0
      %v699 = vsel %vm521, -3.4028235e+38, %v693
      %v700 = vsel %vm522, -3.4028235e+38, %v696
      %v701 = vsel %vm576, %v699, -inf
      %702 = vmax.xlane.f32.xlu0 %v701
      %v703 = vpop.xlane.xlu0 %702
      %v704 = vsel %vm576, %v700, -inf
      %705 = vmax.xlane.f32.xlu0 %v704
      %v706 = vpop.xlane.xlu0 %705
      %v707 = vsub.f32 %v699, %v703
      %v708 = vsub.f32 %v700, %v706
      %v709 = vmul.f32 %v707, 1.442695
      %v710 = vpow.pop %v709
      %v711 = vmul.f32 %v708, 1.442695
      %v712 = vpow.pop %v711
      %v713 = vsel %vm576, %v710, 0.0
      %714 = vadd.xlane.f32.xlu0 %v713
      %v715 = vpop.xlane.xlu0 %714
      %v716 = vsel %vm576, %v712, 0.0
      %717 = vadd.xlane.f32.xlu0 %v716
      %v718 = vpop.xlane.xlu0 %717
      %v719 = vrcp.pop %v715
      %v720 = vrcp.pop %v718
      %v721 = vmul.f32 %v710, %v719
      %v722 = vmul.f32 %v712, %v720
      %v723 = vpack.c.bf16 %v722, %v721
      %725 = vrot.lane.b32.xlu0 %v525, 96
      %v726 = vpop.permute.xlu0 %725
      %v729 = vsel %vm576, %v723, 0
      %731 = vmatprep.subr.bf16.mxu0 0
      %732 = vmatpush1.bf16.msra.mxu0 0
      %733 = vmatprep.subr.bf16.mxu0 0
      %734 = vmatpush1.bf16.msra.mxu0 0
      %735 = vmatprep.subr.bf16.mxu0 0
      %736 = vmatpush1.bf16.msra.mxu0 0
      %737 = vmatprep.subr.bf16.mxu0 0
      %738 = vmatpush1.bf16.msra.mxu0 0
      %739 = vmatprep.subr.bf16.mxu0 0
      %740 = vmatpush1.bf16.msra.mxu0 0
      %741 = vmatprep.subr.bf16.mxu0 0
      %742 = vmatpush1.bf16.msra.mxu0 0
      %743 = vmatprep.subr.bf16.mxu0 0
      %744 = vmatpush1.bf16.msra.mxu0 0
      %745 = vmatprep.subr.bf16.mxu0 0
      %746 = vmatpush1.bf16.msra.mxu0 %v726
      %747 = vmatprep.subr.bf16.mxu0 0
      %748 = vmatpush2.bf16.msra.mxu0 0
      %749 = vmatprep.subr.bf16.mxu0 0
      %750 = vmatpush2.bf16.msra.mxu0 0
      %751 = vmatprep.subr.bf16.mxu0 0
      %752 = vmatpush2.bf16.msra.mxu0 0
      %753 = vmatprep.subr.bf16.mxu0 0
      %754 = vmatpush2.bf16.msra.mxu0 0
      %755 = vmatprep.subr.bf16.mxu0 0
      %756 = vmatpush2.bf16.msra.mxu0 0
      %757 = vmatprep.subr.bf16.mxu0 0
      %758 = vmatpush2.bf16.msra.mxu0 0
      %759 = vmatprep.subr.bf16.mxu0 0
      %760 = vmatpush2.bf16.msra.mxu0 0
      %761 = vmatprep.subr.bf16.mxu0 0
      %762 = vmatpush2.bf16.msra.mxu0 0
      %763 = vmatprep.mubr.bf16.mxu0 0
      %764 = vmatmul.mubr.bf16.gmra.mxu0 %v729
      %v765 = vpop.f32.mrf.mxu0
      %v766 = vadd.f32 0.0, %v765
      %v767 = vpop.f32.mrf.mxu0
      %v768 = vpop.f32.mrf.mxu0
      %v769 = vadd.f32 0.0, %v768
      %v770 = vpop.f32.mrf.mxu0
      %771 = vdwg.mxu0
      %774 = vrot.lane.b32.xlu0 %v766, 32
      %v775 = vpop.permute.xlu0 %774
      %776 = vrot.lane.b32.xlu0 %v769, 32
      %v777 = vpop.permute.xlu0 %776
      %vm780 = vcmask 523520
      %781 = vst.msk [vmem:[#allocation2] sm:$0xff] %vm780, %v775
      %782 = vst.msk [vmem:[#allocation2 + $0x8] sm:$0xff] %vm780, %v777
      %783 = vrot.lane.b32.xlu0 %v523, 64
      %v784 = vpop.permute.xlu0 %783
      %785 = vrot.lane.b32.xlu0 %v524, 64
      %v786 = vpop.permute.xlu0 %785
      %v788 = vsel %vm526, %v784, 0
      %v791 = vsel %vm526, %v786, 0
      %793 = vmatprep.subr.bf16.mxu0 0
      %794 = vmatpush1.bf16.xpose.msra.mxu0 0
      %795 = vmatprep.subr.bf16.mxu0 0
      %796 = vmatpush1.bf16.xpose.msra.mxu0 0
      %797 = vmatprep.subr.bf16.mxu0 0
      %798 = vmatpush1.bf16.xpose.msra.mxu0 0
      %799 = vmatprep.subr.bf16.mxu0 0
      %800 = vmatpush1.bf16.xpose.msra.mxu0 0
      %801 = vmatprep.subr.bf16.mxu0 0
      %802 = vmatpush1.bf16.xpose.msra.mxu0 0
      %803 = vmatprep.subr.bf16.mxu0 0
      %804 = vmatpush1.bf16.xpose.msra.mxu0 0
      %805 = vmatprep.subr.bf16.mxu0 0
      %806 = vmatpush1.bf16.xpose.msra.mxu0 0
      %807 = vmatprep.subr.bf16.mxu0 0
      %808 = vmatpush1.bf16.xpose.msra.mxu0 %v791
      %809 = vmatprep.subr.bf16.mxu0 0
      %810 = vmatpush2.bf16.xpose.msra.mxu0 0
      %811 = vmatprep.subr.bf16.mxu0 0
      %812 = vmatpush2.bf16.xpose.msra.mxu0 0
      %813 = vmatprep.subr.bf16.mxu0 0
      %814 = vmatpush2.bf16.xpose.msra.mxu0 0
      %815 = vmatprep.subr.bf16.mxu0 0
      %816 = vmatpush2.bf16.xpose.msra.mxu0 0
      %817 = vmatprep.subr.bf16.mxu0 0
      %818 = vmatpush2.bf16.xpose.msra.mxu0 0
      %819 = vmatprep.subr.bf16.mxu0 0
      %820 = vmatpush2.bf16.xpose.msra.mxu0 0
      %821 = vmatprep.subr.bf16.mxu0 0
      %822 = vmatpush2.bf16.xpose.msra.mxu0 0
      %823 = vmatprep.subr.bf16.mxu0 0
      %824 = vmatpush2.bf16.xpose.msra.mxu0 0
      %825 = vmatprep.mubr.bf16.mxu0 0
      %826 = vmatmul.mubr.bf16.gmra.mxu0 %v788
      %v827 = vpop.f32.mrf.mxu0
      %v828 = vadd.f32 0.0, %v827
      %v829 = vpop.f32.mrf.mxu0
      %v830 = vpop.f32.mrf.mxu0
      %v831 = vadd.f32 0.0, %v830
      %v832 = vpop.f32.mrf.mxu0
      %833 = vdwg.mxu0
      %v834 = vsel %vm521, -3.4028235e+38, %v828
      %v835 = vsel %vm522, -3.4028235e+38, %v831
      %v836 = vsel %vm576, %v834, -inf
      %837 = vmax.xlane.f32.xlu0 %v836
      %v838 = vpop.xlane.xlu0 %837
      %v839 = vsel %vm576, %v835, -inf
      %840 = vmax.xlane.f32.xlu0 %v839
      %v841 = vpop.xlane.xlu0 %840
      %v842 = vsub.f32 %v834, %v838
      %v843 = vsub.f32 %v835, %v841
      %v844 = vmul.f32 %v842, 1.442695
      %v845 = vpow.pop %v844
      %v846 = vmul.f32 %v843, 1.442695
      %v847 = vpow.pop %v846
      %v848 = vsel %vm576, %v845, 0.0
      %849 = vadd.xlane.f32.xlu0 %v848
      %v850 = vpop.xlane.xlu0 %849
      %v851 = vsel %vm576, %v847, 0.0
      %852 = vadd.xlane.f32.xlu0 %v851
      %v853 = vpop.xlane.xlu0 %852
      %v854 = vrcp.pop %v850
      %v855 = vrcp.pop %v853
      %v856 = vmul.f32 %v845, %v854
      %v857 = vmul.f32 %v847, %v855
      %v858 = vpack.c.bf16 %v857, %v856
      %859 = vrot.lane.b32.xlu0 %v525, 64
      %v860 = vpop.permute.xlu0 %859
      %v863 = vsel %vm576, %v858, 0
      %865 = vmatprep.subr.bf16.mxu0 0
      %866 = vmatpush1.bf16.msra.mxu0 0
      %867 = vmatprep.subr.bf16.mxu0 0
      %868 = vmatpush1.bf16.msra.mxu0 0
      %869 = vmatprep.subr.bf16.mxu0 0
      %870 = vmatpush1.bf16.msra.mxu0 0
      %871 = vmatprep.subr.bf16.mxu0 0
      %872 = vmatpush1.bf16.msra.mxu0 0
      %873 = vmatprep.subr.bf16.mxu0 0
      %874 = vmatpush1.bf16.msra.mxu0 0
      %875 = vmatprep.subr.bf16.mxu0 0
      %876 = vmatpush1.bf16.msra.mxu0 0
      %877 = vmatprep.subr.bf16.mxu0 0
      %878 = vmatpush1.bf16.msra.mxu0 0
      %879 = vmatprep.subr.bf16.mxu0 0
      %880 = vmatpush1.bf16.msra.mxu0 %v860
      %881 = vmatprep.subr.bf16.mxu0 0
      %882 = vmatpush2.bf16.msra.mxu0 0
      %883 = vmatprep.subr.bf16.mxu0 0
      %884 = vmatpush2.bf16.msra.mxu0 0
      %885 = vmatprep.subr.bf16.mxu0 0
      %886 = vmatpush2.bf16.msra.mxu0 0
      %887 = vmatprep.subr.bf16.mxu0 0
      %888 = vmatpush2.bf16.msra.mxu0 0
      %889 = vmatprep.subr.bf16.mxu0 0
      %890 = vmatpush2.bf16.msra.mxu0 0
      %891 = vmatprep.subr.bf16.mxu0 0
      %892 = vmatpush2.bf16.msra.mxu0 0
      %893 = vmatprep.subr.bf16.mxu0 0
      %894 = vmatpush2.bf16.msra.mxu0 0
      %895 = vmatprep.subr.bf16.mxu0 0
      %896 = vmatpush2.bf16.msra.mxu0 0
      %897 = vmatprep.mubr.bf16.mxu0 0
      %898 = vmatmul.mubr.bf16.gmra.mxu0 %v863
      %v899 = vpop.f32.mrf.mxu0
      %v900 = vadd.f32 0.0, %v899
      %v901 = vpop.f32.mrf.mxu0
      %v902 = vpop.f32.mrf.mxu0
      %v903 = vadd.f32 0.0, %v902
      %v904 = vpop.f32.mrf.mxu0
      %905 = vdwg.mxu0
      %908 = vrot.lane.b32.xlu0 %v900, 64
      %v909 = vpop.permute.xlu0 %908
      %910 = vrot.lane.b32.xlu0 %v903, 64
      %v911 = vpop.permute.xlu0 %910
      %vm914 = vcmask 785920
      %915 = vst.msk [vmem:[#allocation2] sm:$0xff] %vm914, %v909
      %916 = vst.msk [vmem:[#allocation2 + $0x8] sm:$0xff] %vm914, %v911
      %917 = vrot.lane.b32.xlu0 %v523, 32
      %v918 = vpop.permute.xlu0 %917
      %919 = vrot.lane.b32.xlu0 %v524, 32
      %v920 = vpop.permute.xlu0 %919
      %v922 = vsel %vm526, %v918, 0
      %v925 = vsel %vm526, %v920, 0
      %927 = vmatprep.subr.bf16.mxu0 0
      %928 = vmatpush1.bf16.xpose.msra.mxu0 0
      %929 = vmatprep.subr.bf16.mxu0 0
      %930 = vmatpush1.bf16.xpose.msra.mxu0 0
      %931 = vmatprep.subr.bf16.mxu0 0
      %932 = vmatpush1.bf16.xpose.msra.mxu0 0
      %933 = vmatprep.subr.bf16.mxu0 0
      %934 = vmatpush1.bf16.xpose.msra.mxu0 0
      %935 = vmatprep.subr.bf16.mxu0 0
      %936 = vmatpush1.bf16.xpose.msra.mxu0 0
      %937 = vmatprep.subr.bf16.mxu0 0
      %938 = vmatpush1.bf16.xpose.msra.mxu0 0
      %939 = vmatprep.subr.bf16.mxu0 0
      %940 = vmatpush1.bf16.xpose.msra.mxu0 0
      %941 = vmatprep.subr.bf16.mxu0 0
      %942 = vmatpush1.bf16.xpose.msra.mxu0 %v925
      %943 = vmatprep.subr.bf16.mxu0 0
      %944 = vmatpush2.bf16.xpose.msra.mxu0 0
      %945 = vmatprep.subr.bf16.mxu0 0
      %946 = vmatpush2.bf16.xpose.msra.mxu0 0
      %947 = vmatprep.subr.bf16.mxu0 0
      %948 = vmatpush2.bf16.xpose.msra.mxu0 0
      %949 = vmatprep.subr.bf16.mxu0 0
      %950 = vmatpush2.bf16.xpose.msra.mxu0 0
      %951 = vmatprep.subr.bf16.mxu0 0
      %952 = vmatpush2.bf16.xpose.msra.mxu0 0
      %953 = vmatprep.subr.bf16.mxu0 0
      %954 = vmatpush2.bf16.xpose.msra.mxu0 0
      %955 = vmatprep.subr.bf16.mxu0 0
      %956 = vmatpush2.bf16.xpose.msra.mxu0 0
      %957 = vmatprep.subr.bf16.mxu0 0
      %958 = vmatpush2.bf16.xpose.msra.mxu0 0
      %959 = vmatprep.mubr.bf16.mxu0 0
      %960 = vmatmul.mubr.bf16.gmra.mxu0 %v922
      %v961 = vpop.f32.mrf.mxu0
      %v962 = vadd.f32 0.0, %v961
      %v963 = vpop.f32.mrf.mxu0
      %v964 = vpop.f32.mrf.mxu0
      %v965 = vadd.f32 0.0, %v964
      %v966 = vpop.f32.mrf.mxu0
      %967 = vdwg.mxu0
      %v968 = vsel %vm521, -3.4028235e+38, %v962
      %v969 = vsel %vm522, -3.4028235e+38, %v965
      %v970 = vsel %vm576, %v968, -inf
      %971 = vmax.xlane.f32.xlu0 %v970
      %v972 = vpop.xlane.xlu0 %971
      %v973 = vsel %vm576, %v969, -inf
      %974 = vmax.xlane.f32.xlu0 %v973
      %v975 = vpop.xlane.xlu0 %974
      %v976 = vsub.f32 %v968, %v972
      %v977 = vsub.f32 %v969, %v975
      %v978 = vmul.f32 %v976, 1.442695
      %v979 = vpow.pop %v978
      %v980 = vmul.f32 %v977, 1.442695
      %v981 = vpow.pop %v980
      %v982 = vsel %vm576, %v979, 0.0
      %983 = vadd.xlane.f32.xlu0 %v982
      %v984 = vpop.xlane.xlu0 %983
      %v985 = vsel %vm576, %v981, 0.0
      %986 = vadd.xlane.f32.xlu0 %v985
      %v987 = vpop.xlane.xlu0 %986
      %v988 = vrcp.pop %v984
      %v989 = vrcp.pop %v987
      %v990 = vmul.f32 %v979, %v988
      %v991 = vmul.f32 %v981, %v989
      %v992 = vpack.c.bf16 %v991, %v990
      %993 = vrot.lane.b32.xlu0 %v525, 32
      %v994 = vpop.permute.xlu0 %993
      %v997 = vsel %vm576, %v992, 0
      %999 = vmatprep.subr.bf16.mxu0 0
      %1000 = vmatpush1.bf16.msra.mxu0 0
      %1001 = vmatprep.subr.bf16.mxu0 0
      %1002 = vmatpush1.bf16.msra.mxu0 0
      %1003 = vmatprep.subr.bf16.mxu0 0
      %1004 = vmatpush1.bf16.msra.mxu0 0
      %1005 = vmatprep.subr.bf16.mxu0 0
      %1006 = vmatpush1.bf16.msra.mxu0 0
      %1007 = vmatprep.subr.bf16.mxu0 0
      %1008 = vmatpush1.bf16.msra.mxu0 0
      %1009 = vmatprep.subr.bf16.mxu0 0
      %1010 = vmatpush1.bf16.msra.mxu0 0
      %1011 = vmatprep.subr.bf16.mxu0 0
      %1012 = vmatpush1.bf16.msra.mxu0 0
      %1013 = vmatprep.subr.bf16.mxu0 0
      %1014 = vmatpush1.bf16.msra.mxu0 %v994
      %1015 = vmatprep.subr.bf16.mxu0 0
      %1016 = vmatpush2.bf16.msra.mxu0 0
      %1017 = vmatprep.subr.bf16.mxu0 0
      %1018 = vmatpush2.bf16.msra.mxu0 0
      %1019 = vmatprep.subr.bf16.mxu0 0
      %1020 = vmatpush2.bf16.msra.mxu0 0
      %1021 = vmatprep.subr.bf16.mxu0 0
      %1022 = vmatpush2.bf16.msra.mxu0 0
      %1023 = vmatprep.subr.bf16.mxu0 0
      %1024 = vmatpush2.bf16.msra.mxu0 0
      %1025 = vmatprep.subr.bf16.mxu0 0
      %1026 = vmatpush2.bf16.msra.mxu0 0
      %1027 = vmatprep.subr.bf16.mxu0 0
      %1028 = vmatpush2.bf16.msra.mxu0 0
      %1029 = vmatprep.subr.bf16.mxu0 0
      %1030 = vmatpush2.bf16.msra.mxu0 0
      %1031 = vmatprep.mubr.bf16.mxu0 0
      %1032 = vmatmul.mubr.bf16.gmra.mxu0 %v997
      %v1033 = vpop.f32.mrf.mxu0
      %v1034 = vadd.f32 0.0, %v1033
      %v1035 = vpop.f32.mrf.mxu0
      %v1036 = vpop.f32.mrf.mxu0
      %v1037 = vadd.f32 0.0, %v1036
      %v1038 = vpop.f32.mrf.mxu0
      %1039 = vdwg.mxu0
      %1042 = vrot.lane.b32.xlu0 %v1034, 96
      %v1043 = vpop.permute.xlu0 %1042
      %1044 = vrot.lane.b32.xlu0 %v1037, 96
      %v1045 = vpop.permute.xlu0 %1044
      %vm1048 = vcmask 1048320
      %1049 = vst.msk [vmem:[#allocation2] sm:$0xff] %vm1048, %v1043
      %1050 = vst.msk [vmem:[#allocation2 + $0x8] sm:$0xff] %vm1048, %v1045
      %v1051 = vld [vmem:[#allocation2] sm:$0xff]
      %v1052 = vld [vmem:[#allocation2 + $0x8] sm:$0xff]
      %v1053 = vpack.c.bf16 %v1052, %v1051
      %v1054 = vld [vmem:[%s2] sm:$0xf]
      %v1055 = vld [vmem:[%s2 + $0x4] sm:$0xf]
      %v1056 = vld [vmem:[%s2 + $0x8] sm:$0xf]
      %v1057 = vld [vmem:[%s2 + $0xc] sm:$0xf]
      %v1058 = vld [vmem:[%s2 + $0x10] sm:$0xf]
      %v1059 = vld [vmem:[%s2 + $0x14] sm:$0xf]
      %v1060 = vld [vmem:[%s2 + $0x18] sm:$0xf]
      %v1061 = vld [vmem:[%s2 + $0x1c] sm:$0xf]
      %v1062 = vld [vmem:[%s2 + $0x20] sm:$0xf]
      %v1063 = vld [vmem:[%s2 + $0x24] sm:$0xf]
      %v1064 = vld [vmem:[%s2 + $0x28] sm:$0xf]
      %v1065 = vld [vmem:[%s2 + $0x2c] sm:$0xf]
      %v1066 = vld [vmem:[%s2 + $0x30] sm:$0xf]
      %v1067 = vld [vmem:[%s2 + $0x34] sm:$0xf]
      %v1068 = vld [vmem:[%s2 + $0x38] sm:$0xf]
      %v1069 = vld [vmem:[%s2 + $0x3c] sm:$0xf]
      %v1070 = vld [vmem:[%s3] sm:$0x1]
      %v1071 = vunpack.c.l.bf16 %v1070
      %v1072 = vlaneseq
      %v1073 = vshrl.u32 %v1072, 7
      %v1074 = vsub.s32 0, %v1073
      %v1075 = vrot.slane %v1071, %v1074
      %v1092 = vunpack.c.l.b16 %v1054
      %v1093 = vunpack.c.l.b16 %v1055
      %v1094 = vunpack.c.l.b16 %v1056
      %v1095 = vunpack.c.l.b16 %v1057
      %v1096 = vunpack.c.l.b16 %v1058
      %v1097 = vunpack.c.l.b16 %v1059
      %v1098 = vunpack.c.l.b16 %v1060
      %v1099 = vunpack.c.l.b16 %v1061
      %v1100 = vunpack.c.l.b16 %v1062
      %v1101 = vunpack.c.l.b16 %v1063
      %v1102 = vunpack.c.l.b16 %v1064
      %v1103 = vunpack.c.l.b16 %v1065
      %v1104 = vunpack.c.l.b16 %v1066
      %v1105 = vunpack.c.l.b16 %v1067
      %v1106 = vunpack.c.l.b16 %v1068
      %v1107 = vunpack.c.l.b16 %v1069
      %v1108 = vpack.c.b16 %v1093, %v1092
      %v1109 = vpack.c.b16 %v1095, %v1094
      %v1110 = vpack.c.b16 %v1097, %v1096
      %v1111 = vpack.c.b16 %v1099, %v1098
      %v1112 = vpack.c.b16 %v1101, %v1100
      %v1113 = vpack.c.b16 %v1103, %v1102
      %v1114 = vpack.c.b16 %v1105, %v1104
      %v1115 = vpack.c.b16 %v1107, %v1106
      %1124 = vmatprep.subr.bf16.mxu0 0
      %1125 = vmatpush1.bf16.msra.mxu0 %v1115
      %1126 = vmatprep.subr.bf16.mxu0 0
      %1127 = vmatpush1.bf16.msra.mxu0 %v1114
      %1128 = vmatprep.subr.bf16.mxu0 0
      %1129 = vmatpush1.bf16.msra.mxu0 %v1113
      %1130 = vmatprep.subr.bf16.mxu0 0
      %1131 = vmatpush1.bf16.msra.mxu0 %v1112
      %1132 = vmatprep.subr.bf16.mxu0 0
      %1133 = vmatpush1.bf16.msra.mxu0 %v1111
      %1134 = vmatprep.subr.bf16.mxu0 0
      %1135 = vmatpush1.bf16.msra.mxu0 %v1110
      %1136 = vmatprep.subr.bf16.mxu0 0
      %1137 = vmatpush1.bf16.msra.mxu0 %v1109
      %1138 = vmatprep.subr.bf16.mxu0 0
      %1139 = vmatpush1.bf16.msra.mxu0 %v1108
      %1140 = vmatprep.subr.bf16.mxu0 0
      %1141 = vmatpush2.bf16.msra.mxu0 0
      %1142 = vmatprep.subr.bf16.mxu0 0
      %1143 = vmatpush2.bf16.msra.mxu0 0
      %1144 = vmatprep.subr.bf16.mxu0 0
      %1145 = vmatpush2.bf16.msra.mxu0 0
      %1146 = vmatprep.subr.bf16.mxu0 0
      %1147 = vmatpush2.bf16.msra.mxu0 0
      %1148 = vmatprep.subr.bf16.mxu0 0
      %1149 = vmatpush2.bf16.msra.mxu0 0
      %1150 = vmatprep.subr.bf16.mxu0 0
      %1151 = vmatpush2.bf16.msra.mxu0 0
      %1152 = vmatprep.subr.bf16.mxu0 0
      %1153 = vmatpush2.bf16.msra.mxu0 0
      %1154 = vmatprep.subr.bf16.mxu0 0
      %1155 = vmatpush2.bf16.msra.mxu0 0
      %1156 = vmatprep.mubr.bf16.mxu0 0
      %1157 = vmatmul.mubr.bf16.gmra.mxu0 %v1053
      %v1158 = vpop.f32.mrf.mxu0
      %v1159 = vadd.f32 %v1075, %v1158
      %v1160 = vpop.f32.mrf.mxu0
      %v1161 = vpop.f32.mrf.mxu0
      %v1162 = vadd.f32 %v1075, %v1161
      %v1163 = vpop.f32.mrf.mxu0
      %1164 = vdwg.mxu0
      %v1165 = vadd.f32 %v1159, %v265
      %v1166 = vadd.f32 %v1162, %v266
      %1167 = vst [vmem:[%s247] sm:$0xff] %v1165
      %1168 = vst [vmem:[%s247 + $0x8] sm:$0xff] %v1166
      %s1169 = smul.u32 2, %s22
      %p1170 = scmp.lt.s32.totalorder %s21, 1
      %s1171 = scalar_select %p1170, %s21, 1
      %p1172 = scmp.lt.s32.totalorder %s1169, 1
      %s1173 = scalar_select %p1172, %s1169, 1
      %s1174 = smul.addr %s1171, 2
      %s1175 = sadd.s32 %s1173, %s1174
      %s1176 = smul.addr %s1175, 8
      %s1177 = scalar_lea.vmem %s5, %s1176
      // Predicated region
      $region41: #{transformer_forward.7} parent=39 // pred_check
        %p1178 = pneg %p159
      $region42: #{transformer_forward.7} parent=39 // pred_check_branch
        %1180 = sbr.rel (%p1178) target = $region44
      $region43: #{transformer_forward.7} parent=39 // pred_region
        %s1181 = smul.u32 2, %s22
      $region44: #{transformer_forward.7} parent=39 // pred_fallthru
        _
    $region40: #{transformer_forward.7} parent=5 // pred_fallthru
      _
    %p1182 = scmp.le.s32.totalorder 2, %s12
    // Predicated region
    $region45: #{transformer_forward.7} parent=5 // pred_check
      %p1183 = pneg %p1182
    $region46: #{transformer_forward.7} parent=5 // pred_check_branch
      %1185 = sbr.rel (%p1183) target = $region48
    $region47: #{transformer_forward.7} parent=5 // pred_region
      %s1186 = ssub.s32 %s12, 2
      // Predicated region
      $region49: #{transformer_forward.7} parent=47 // pred_check
        %p1187 = pneg %p165
      $region50: #{transformer_forward.7} parent=47 // pred_check_branch
        %1189 = sbr.rel (%p1187) target = $region52
      $region51: #{transformer_forward.7} parent=47 // pred_region
        %s1190 = smul.u32 2, %s24
        %p1191 = scmp.lt.s32.totalorder %s23, 1
        %s1192 = scalar_select %p1191, %s23, 1
        %p1193 = scmp.lt.s32.totalorder %s1190, 1
        %s1194 = scalar_select %p1193, %s1190, 1
        %s1195 = smul.addr %s1192, 2
        %s1196 = sadd.s32 %s1194, %s1195
        %s1197 = smul.addr %s1196, 8
        %s1198 = scalar_lea.vmem %s5, %s1197
      $region52: #{transformer_forward.7} parent=47 // pred_fallthru
        _
    $region48: #{transformer_forward.7} parent=5 // pred_fallthru
      _
  $region6: #{transformer_forward.7} parent=0 // loop_footer
    %s16 = sadd.s32 1, %s12
  $region7: #{transformer_forward.7} parent=0 // loop_footer_branch
    %11 = sbr.rel target = $region3
  $region8: #{transformer_forward.7} parent=0 // loop_exit
    _

</llo_original>
